<compile_context>
chip_gen: v7x
topology: tpu7x:2x2x1
jax: 0.10.0
libtpu: 0.0.40
codegen_flags: <defaults>
</compile_context>

<pallas_src>
import jax
import jax.numpy as jnp
from jax.experimental import pallas as pl
from jax.experimental.pallas import tpu as pltpu

_LANE = 128      # lane-dense output width for the classifier
_SUBLANE = 8


def _round_up(x, m):
    return ((x + m - 1) // m) * m


def _head_kernel(
    hist_ref,     # (TB, V)    bf16  mask-normalized token histogram (rows sum to 1)
    gap_ref,      # (TB, C)    f32   global-average-pooled image
    emb_ref,      # (V, 768)   bf16  embedding table (constant across grid)
    w_pool_ref,   # (768, 768) bf16  stand-in BERT pooler weight
    b_pool_ref,   # (1, 768)   f32
    w_tfc_ref,    # (768, 256) bf16  text_fc weight
    b_tfc_ref,    # (1, 256)   f32
    w_cls_t_ref,  # (256, 128) bf16  classifier weight, text half (lane-padded)
    w_img_ref,    # (C, 128)   f32   fully folded image branch -> logits
    b_cls_ref,    # (1, 128)   f32   classifier bias (+ folded image bias)
    out_ref,      # (TB, 128)  f32   lane-padded logits
):
    # ---- text branch (stand-in for BERT pooler_output) ----
    # Masked mean-pool as a single well-shaped MXU matmul (K = vocab),
    # replacing TB tiny K=S matmuls + cross-sublane reductions.
    mean_emb = jnp.dot(hist_ref[...], emb_ref[...],
                       preferred_element_type=jnp.float32)          # (TB, 768)
    pooled = jnp.tanh(
        jnp.dot(mean_emb.astype(jnp.bfloat16), w_pool_ref[...],
                preferred_element_type=jnp.float32) + b_pool_ref[...])
    text_feat = (
        jnp.dot(pooled.astype(jnp.bfloat16), w_tfc_ref[...],
                preferred_element_type=jnp.float32) + b_tfc_ref[...]
    )                                                                # (TB, 256)

    # ---- classifier: text half explicit (bf16), image branch fully folded ----
    logits = (
        jnp.dot(text_feat.astype(jnp.bfloat16), w_cls_t_ref[...],
                preferred_element_type=jnp.float32)
        + jnp.dot(gap_ref[...], w_img_ref[...],
                  preferred_element_type=jnp.float32)
        + b_cls_ref[...]
    )                                                                # (TB, 128)
    out_ref[...] = logits


def prepare_params(params):
    """One-time weight folding / padding / casting (hoisted out of forward)."""
    d_text, d_proj = params["w_tfc"].shape
    num_classes = params["b_cls"].shape[-1]
    ncls_pad = _round_up(max(num_classes, 1), _LANE)
    C = params["w_imgproj"].shape[0]

    w_cls = params["w_cls"].astype(jnp.float32)                  # (2*d_proj, nc)
    w_cls_t = jnp.zeros((d_proj, ncls_pad), jnp.float32)
    w_cls_t = w_cls_t.at[:, :num_classes].set(w_cls[:d_proj])
    w_cls_i = w_cls[d_proj:]                                     # (d_proj, nc)

    # Fold the purely-linear image branch offline (exact):
    #   logits_img = gap @ (w_imgproj @ w_ifc @ w_cls_i) + b_ifc @ w_cls_i
    w_img2logit_core = params["w_imgproj"] @ params["w_ifc"] @ w_cls_i   # (C, nc)
    w_img2logit = jnp.zeros((C, ncls_pad), jnp.float32)
    w_img2logit = w_img2logit.at[:, :num_classes].set(w_img2logit_core)

    b_cls = jnp.zeros((1, ncls_pad), jnp.float32)
    b_cls = b_cls.at[:, :num_classes].set(
        params["b_cls"].reshape(1, -1)
        + params["b_ifc"].reshape(1, -1) @ w_cls_i)

    return {
        "emb_table": params["emb_table"].astype(jnp.bfloat16),   # (V, 768)
        "w_pool":    params["w_pool"].astype(jnp.bfloat16),
        "b_pool":    params["b_pool"].reshape(1, d_text).astype(jnp.float32),
        "w_tfc":     params["w_tfc"].astype(jnp.bfloat16),
        "b_tfc":     params["b_tfc"].reshape(1, d_proj).astype(jnp.float32),
        "w_cls_t":   w_cls_t.astype(jnp.bfloat16),
        "w_img2logit": w_img2logit,
        "b_cls":     b_cls,
        "num_classes": num_classes,
    }


def text_image_classifier(prepared, input_ids, attention_mask, images):
    """Forward pass. input_ids: (B, S) int32, images: NCHW float32."""
    B, S = input_ids.shape
    _, C, H, W = images.shape
    V, d_text = prepared["emb_table"].shape
    d_proj = prepared["w_tfc"].shape[1]
    ncls_pad = prepared["b_cls"].shape[-1]
    num_classes = prepared["num_classes"]

    # ---- glue kept in plain JAX (tiny XLA ops) ----
    # Text: pre-normalized, mask-weighted token histogram. The kernel's masked
    # mean-pool then becomes a single (tile_b, V) @ (V, 768) matmul.
    # TODO(synk): for a real 30k-token vocab the histogram does not scale;
    # switch back to a gathered (B, S, 768) stream with an S-tile grid axis.
    mask_f = attention_mask.astype(jnp.float32)
    denom = jnp.maximum(jnp.sum(mask_f, axis=1, keepdims=True), 1.0)
    onehot = jax.nn.one_hot(input_ids, V, dtype=jnp.float32)        # (B, S, V)
    hist = jnp.einsum("bs,bsv->bv", mask_f / denom, onehot)         # rows sum to 1
    hist = hist.astype(jnp.bfloat16)
    # Image: global-average pool (stand-in for the ResNet50 feature extractor).
    gap = jnp.mean(images.astype(jnp.float32), axis=(2, 3))         # (B, C)

    # ---- batch tiling: guarantee grid >= 2 so the "parallel" axis shards
    # across v7x's two TensorCores and the pipeline has something to overlap.
    # Per-step VMEM is tiny (< 4 MiB) and independent of S.
    tile_b = min(128, _round_up(max(pl.cdiv(B, 2), 1), _SUBLANE))
    b_pad = _round_up(B, tile_b)
    if b_pad // tile_b < 2:
        b_pad = 2 * tile_b
    grid = (b_pad // tile_b,)

    def pad_rows(x):
        return jnp.pad(x, ((0, b_pad - B), (0, 0)))

    hist_p, gap_p = pad_rows(hist), pad_rows(gap)

    row2 = lambda i: (i, 0)
    fix2 = lambda i: (0, 0)

    out = pl.pallas_call(
        _head_kernel,
        out_shape=jax.ShapeDtypeStruct((b_pad, ncls_pad), jnp.float32),
        grid_spec=pltpu.PrefetchScalarGridSpec(
            num_scalar_prefetch=0,
            grid=grid,
            in_specs=[
                pl.BlockSpec((tile_b, V), row2),            # hist
                pl.BlockSpec((tile_b, C), row2),            # gap
                # Constant-index weights: fetched once, reused every step.
                # (pl.Buffered(1) would halve their double-buffer footprint,
                # but total weights are ~2 MiB here, so defaults are kept.)
                pl.BlockSpec((V, d_text), fix2),            # emb_table
                pl.BlockSpec((d_text, d_text), fix2),       # w_pool
                pl.BlockSpec((1, d_text), fix2),            # b_pool
                pl.BlockSpec((d_text, d_proj), fix2),       # w_tfc
                pl.BlockSpec((1, d_proj), fix2),            # b_tfc
                pl.BlockSpec((d_proj, ncls_pad), fix2),     # w_cls_t
                pl.BlockSpec((C, ncls_pad), fix2),          # w_img2logit
                pl.BlockSpec((1, ncls_pad), fix2),          # b_cls
            ],
            out_specs=pl.BlockSpec((tile_b, ncls_pad), row2),
        ),
        compiler_params=pltpu.CompilerParams(
            # Batch tiles are independent: shard across TensorCores.
            dimension_semantics=("parallel",),
            # Generation-safe (well under v7x's 64 MiB/TC); only a real raise
            # on v5e (16 MiB default). Actual usage here is < 4 MiB.
            vmem_limit_bytes=32 * 1024 * 1024,
        ),
    )(
        hist_p, gap_p,
        prepared["emb_table"],
        prepared["w_pool"], prepared["b_pool"],
        prepared["w_tfc"], prepared["b_tfc"],
        prepared["w_cls_t"], prepared["w_img2logit"], prepared["b_cls"],
    )
    return out[:B, :num_classes]


def init_params(key, vocab=128, d_text=768, d_img_backbone=2048,
                img_channels=3, d_proj=256, num_classes=3):
    ks = jax.random.split(key, 6)
    s = 0.02
    return {
        "emb_table": s * jax.random.normal(ks[0], (vocab, d_text), jnp.float32),
        "w_pool":    s * jax.random.normal(ks[1], (d_text, d_text), jnp.float32),
        "b_pool":    jnp.zeros((1, d_text), jnp.float32),
        "w_imgproj": s * jax.random.normal(ks[2], (img_channels, d_img_backbone),
                                           jnp.float32),
        "w_tfc":     s * jax.random.normal(ks[3], (d_text, d_proj), jnp.float32),
        "b_tfc":     0.01 * jnp.ones((1, d_proj), jnp.float32),
        "w_ifc":     s * jax.random.normal(ks[4], (d_img_backbone, d_proj),
                                           jnp.float32),
        "b_ifc":     0.01 * jnp.ones((1, d_proj), jnp.float32),
        "w_cls":     s * jax.random.normal(ks[5], (2 * d_proj, num_classes),
                                           jnp.float32),
        "b_cls":     jnp.zeros((1, num_classes), jnp.float32),
    }


def _reference(params, input_ids, attention_mask, images):
    """Pure-JAX f32 reference of the exact semantics the kernel implements."""
    emb = params["emb_table"][input_ids]                            # (B, S, 768)
    m = attention_mask.astype(jnp.float32)
    denom = jnp.maximum(m.sum(axis=1, keepdims=True), 1.0)
    mean_emb = (emb * m[..., None]).sum(axis=1) / denom
    pooled = jnp.tanh(mean_emb @ params["w_pool"] + params["b_pool"])
    text_feat = pooled @ params["w_tfc"] + params["b_tfc"]
    gap = jnp.mean(images.astype(jnp.float32), axis=(2, 3))
    image_feat = gap @ params["w_imgproj"] @ params["w_ifc"] + params["b_ifc"]
    combined = jnp.concatenate([text_feat, image_feat], axis=1)
    return combined @ params["w_cls"] + params["b_cls"]


if __name__ == "__main__":
    key = jax.random.PRNGKey(0)
    k_param, k_ids, k_img = jax.random.split(key, 3)

    B, S = 2, 8
    C, H, W = 3, 16, 16

    params = init_params(k_param, img_channels=C)
    prepared = prepare_params(params)   # one-time weight fold / pad / cast

    input_ids = jax.random.randint(k_ids, (B, S), 0, 128, dtype=jnp.int32)
    attention_mask = jnp.ones((B, S), dtype=jnp.int32).at[1, 5:].set(0)
    images = jax.random.normal(k_img, (B, C, H, W), jnp.float32)    # NCHW

    logits = text_image_classifier(prepared, input_ids, attention_mask, images)
    jax.block_until_ready(logits)

    ref = _reference(params, input_ids, attention_mask, images)
    err = float(jnp.max(jnp.abs(logits - ref)))
    assert logits.shape == (B, 3) and logits.dtype == jnp.float32
    assert err < 2e-2, f"mismatch vs pure-JAX reference: max|diff|={err}"
    print("KERNEL_OK")
</pallas_src>

<mosaic_0001>
module attributes {stable_mosaic.version = 11 : i64} {
  func.func @_head_kernel(%arg0: i32, %arg1: memref<8x128xbf16, #tpu.memory_space<vmem>>, %arg2: memref<8x3xf32, #tpu.memory_space<vmem>>, %arg3: memref<128x768xbf16, #tpu.memory_space<vmem>>, %arg4: memref<768x768xbf16, #tpu.memory_space<vmem>>, %arg5: memref<1x768xf32, #tpu.memory_space<vmem>>, %arg6: memref<768x256xbf16, #tpu.memory_space<vmem>>, %arg7: memref<1x256xf32, #tpu.memory_space<vmem>>, %arg8: memref<256x128xbf16, #tpu.memory_space<vmem>>, %arg9: memref<3x128xf32, #tpu.memory_space<vmem>>, %arg10: memref<1x128xf32, #tpu.memory_space<vmem>>, %arg11: memref<8x128xf32, #tpu.memory_space<vmem>>) attributes {dimension_semantics = [#tpu.dimension_semantics<parallel>], iteration_bounds = array<i64: 2>, scalar_prefetch = 0 : i64, scratch_operands = 0 : i64, tpu.core_type = #tpu.core_type<tc>, window_params = [{transform_indices = @transform_0, window_bounds = array<i64: 8, 128>}, {transform_indices = @transform_1, window_bounds = array<i64: 8, 3>}, {pipeline_mode = #tpu.pipeline_mode<synchronous>, transform_indices = @transform_2, window_bounds = array<i64: 128, 768>}, {pipeline_mode = #tpu.pipeline_mode<synchronous>, transform_indices = @transform_3, window_bounds = array<i64: 768, 768>}, {pipeline_mode = #tpu.pipeline_mode<synchronous>, transform_indices = @transform_4, window_bounds = array<i64: 1, 768>}, {pipeline_mode = #tpu.pipeline_mode<synchronous>, transform_indices = @transform_5, window_bounds = array<i64: 768, 256>}, {pipeline_mode = #tpu.pipeline_mode<synchronous>, transform_indices = @transform_6, window_bounds = array<i64: 1, 256>}, {pipeline_mode = #tpu.pipeline_mode<synchronous>, transform_indices = @transform_7, window_bounds = array<i64: 256, 128>}, {pipeline_mode = #tpu.pipeline_mode<synchronous>, transform_indices = @transform_8, window_bounds = array<i64: 3, 128>}, {pipeline_mode = #tpu.pipeline_mode<synchronous>, transform_indices = @transform_9, window_bounds = array<i64: 1, 128>}, {transform_indices = @transform_10, window_bounds = array<i64: 8, 128>}]} {
    %c0 = arith.constant 0 : index
    %c0_0 = arith.constant 0 : index
    %0 = vector.load %arg1[%c0, %c0_0] : memref<8x128xbf16, #tpu.memory_space<vmem>>, vector<8x128xbf16>
    %c0_1 = arith.constant 0 : index
    %c0_2 = arith.constant 0 : index
    %1 = vector.load %arg3[%c0_1, %c0_2] : memref<128x768xbf16, #tpu.memory_space<vmem>>, vector<128x768xbf16>
    %cst = arith.constant dense<0.000000e+00> : vector<8x768xf32>
    %2 = tpu.matmul %0, %1, %cst {dimension_numbers = #tpu.dot_dimension_numbers<[1], [0], [0], [1], [0, 0, 1, 1], [], []>} : vector<8x128xbf16>, vector<128x768xbf16>, vector<8x768xf32> -> vector<8x768xf32>
    %3 = arith.truncf %2 : vector<8x768xf32> to vector<8x768xbf16>
    %c0_3 = arith.constant 0 : index
    %c0_4 = arith.constant 0 : index
    %4 = vector.load %arg4[%c0_3, %c0_4] : memref<768x768xbf16, #tpu.memory_space<vmem>>, vector<768x768xbf16>
    %cst_5 = arith.constant dense<0.000000e+00> : vector<8x768xf32>
    %5 = tpu.matmul %3, %4, %cst_5 {dimension_numbers = #tpu.dot_dimension_numbers<[1], [0], [0], [1], [0, 0, 1, 1], [], []>} : vector<8x768xbf16>, vector<768x768xbf16>, vector<8x768xf32> -> vector<8x768xf32>
    %c0_6 = arith.constant 0 : index
    %c0_7 = arith.constant 0 : index
    %6 = vector.load %arg5[%c0_6, %c0_7] : memref<1x768xf32, #tpu.memory_space<vmem>>, vector<1x768xf32>
    %7 = vector.broadcast %6 : vector<1x768xf32> to vector<8x768xf32>
    %8 = arith.addf %5, %7 : vector<8x768xf32>
    %9 = math.tanh %8 : vector<8x768xf32>
    %10 = arith.truncf %9 : vector<8x768xf32> to vector<8x768xbf16>
    %c0_8 = arith.constant 0 : index
    %c0_9 = arith.constant 0 : index
    %11 = vector.load %arg6[%c0_8, %c0_9] : memref<768x256xbf16, #tpu.memory_space<vmem>>, vector<768x256xbf16>
    %cst_10 = arith.constant dense<0.000000e+00> : vector<8x256xf32>
    %12 = tpu.matmul %10, %11, %cst_10 {dimension_numbers = #tpu.dot_dimension_numbers<[1], [0], [0], [1], [0, 0, 1, 1], [], []>} : vector<8x768xbf16>, vector<768x256xbf16>, vector<8x256xf32> -> vector<8x256xf32>
    %c0_11 = arith.constant 0 : index
    %c0_12 = arith.constant 0 : index
    %13 = vector.load %arg7[%c0_11, %c0_12] : memref<1x256xf32, #tpu.memory_space<vmem>>, vector<1x256xf32>
    %14 = vector.broadcast %13 : vector<1x256xf32> to vector<8x256xf32>
    %15 = arith.addf %12, %14 : vector<8x256xf32>
    %16 = arith.truncf %15 : vector<8x256xf32> to vector<8x256xbf16>
    %c0_13 = arith.constant 0 : index
    %c0_14 = arith.constant 0 : index
    %17 = vector.load %arg8[%c0_13, %c0_14] : memref<256x128xbf16, #tpu.memory_space<vmem>>, vector<256x128xbf16>
    %cst_15 = arith.constant dense<0.000000e+00> : vector<8x128xf32>
    %18 = tpu.matmul %16, %17, %cst_15 {dimension_numbers = #tpu.dot_dimension_numbers<[1], [0], [0], [1], [0, 0, 1, 1], [], []>} : vector<8x256xbf16>, vector<256x128xbf16>, vector<8x128xf32> -> vector<8x128xf32>
    %c0_16 = arith.constant 0 : index
    %c0_17 = arith.constant 0 : index
    %19 = vector.load %arg2[%c0_16, %c0_17] : memref<8x3xf32, #tpu.memory_space<vmem>>, vector<8x3xf32>
    %c0_18 = arith.constant 0 : index
    %c0_19 = arith.constant 0 : index
    %20 = vector.load %arg9[%c0_18, %c0_19] : memref<3x128xf32, #tpu.memory_space<vmem>>, vector<3x128xf32>
    %cst_20 = arith.constant dense<0.000000e+00> : vector<8x128xf32>
    %21 = tpu.matmul %19, %20, %cst_20 {dimension_numbers = #tpu.dot_dimension_numbers<[1], [0], [0], [1], [0, 0, 1, 1], [], []>} : vector<8x3xf32>, vector<3x128xf32>, vector<8x128xf32> -> vector<8x128xf32>
    %22 = arith.addf %18, %21 : vector<8x128xf32>
    %c0_21 = arith.constant 0 : index
    %c0_22 = arith.constant 0 : index
    %23 = vector.load %arg10[%c0_21, %c0_22] : memref<1x128xf32, #tpu.memory_space<vmem>>, vector<1x128xf32>
    %24 = vector.broadcast %23 : vector<1x128xf32> to vector<8x128xf32>
    %25 = arith.addf %22, %24 : vector<8x128xf32>
    %c0_23 = arith.constant 0 : index
    %c0_24 = arith.constant 0 : index
    %26 = vector.load %arg11[%c0_23, %c0_24] : memref<8x128xf32, #tpu.memory_space<vmem>>, vector<8x128xf32>
    tpu.vector_store %arg11[%c0_23, %c0_24], %25 {strides = array<i32>} : memref<8x128xf32, #tpu.memory_space<vmem>>, vector<8x128xf32>,
    return
  }
  func.func @transform_0(%arg0: i32) -> (i32, i32) {
    %c0_i32 = arith.constant 0 : i32
    %c0_i32_0 = arith.constant 0 : i32
    return %arg0, %c0_i32 : i32, i32
  }
  func.func @transform_1(%arg0: i32) -> (i32, i32) {
    %c0_i32 = arith.constant 0 : i32
    %c0_i32_0 = arith.constant 0 : i32
    return %arg0, %c0_i32 : i32, i32
  }
  func.func @transform_2(%arg0: i32) -> (i32, i32) {
    %c0_i32 = arith.constant 0 : i32
    %c0_i32_0 = arith.constant 0 : i32
    %c0_i32_1 = arith.constant 0 : i32
    return %c0_i32, %c0_i32_0 : i32, i32
  }
  func.func @transform_3(%arg0: i32) -> (i32, i32) {
    %c0_i32 = arith.constant 0 : i32
    %c0_i32_0 = arith.constant 0 : i32
    %c0_i32_1 = arith.constant 0 : i32
    return %c0_i32, %c0_i32_0 : i32, i32
  }
  func.func @transform_4(%arg0: i32) -> (i32, i32) {
    %c0_i32 = arith.constant 0 : i32
    %c0_i32_0 = arith.constant 0 : i32
    %c0_i32_1 = arith.constant 0 : i32
    return %c0_i32, %c0_i32_0 : i32, i32
  }
  func.func @transform_5(%arg0: i32) -> (i32, i32) {
    %c0_i32 = arith.constant 0 : i32
    %c0_i32_0 = arith.constant 0 : i32
    %c0_i32_1 = arith.constant 0 : i32
    return %c0_i32, %c0_i32_0 : i32, i32
  }
  func.func @transform_6(%arg0: i32) -> (i32, i32) {
    %c0_i32 = arith.constant 0 : i32
    %c0_i32_0 = arith.constant 0 : i32
    %c0_i32_1 = arith.constant 0 : i32
    return %c0_i32, %c0_i32_0 : i32, i32
  }
  func.func @transform_7(%arg0: i32) -> (i32, i32) {
    %c0_i32 = arith.constant 0 : i32
    %c0_i32_0 = arith.constant 0 : i32
    %c0_i32_1 = arith.constant 0 : i32
    return %c0_i32, %c0_i32_0 : i32, i32
  }
  func.func @transform_8(%arg0: i32) -> (i32, i32) {
    %c0_i32 = arith.constant 0 : i32
    %c0_i32_0 = arith.constant 0 : i32
    %c0_i32_1 = arith.constant 0 : i32
    return %c0_i32, %c0_i32_0 : i32, i32
  }
  func.func @transform_9(%arg0: i32) -> (i32, i32) {
    %c0_i32 = arith.constant 0 : i32
    %c0_i32_0 = arith.constant 0 : i32
    %c0_i32_1 = arith.constant 0 : i32
    return %c0_i32, %c0_i32_0 : i32, i32
  }
  func.func @transform_10(%arg0: i32) -> (i32, i32) {
    %c0_i32 = arith.constant 0 : i32
    %c0_i32_0 = arith.constant 0 : i32
    return %arg0, %c0_i32 : i32, i32
  }
}

</mosaic_0001>

<llo_original>
// kernel: tpu_custom_call.1
$region0: #{tpu_custom_call.1}
  #allocation0 [shape = 'u32[]', space=smem, size = 0x4, offset = 0x4, fixed_abs, tag = 'smem constant byte address 0x4 - core index']
  #allocation1 [shape = 'u32[144,128]{1,0:T(1,128)}', space=vmem, size = 0x12000, scoped, tag = 'internal scratch']
  %s0 = inlined_call_operand.hbm [shape: bf16[16,128], index: 0, kind: input, shape index: {}]
  %s1 = inlined_call_operand.vmem [shape: f32[16,3], index: 1, kind: input, shape index: {}]
  %s2 = inlined_call_operand.hbm [shape: bf16[128,768], index: 2, kind: input, shape index: {}]
  %s3 = inlined_call_operand.hbm [shape: bf16[768,768], index: 3, kind: input, shape index: {}]
  %s4 = inlined_call_operand.hbm [shape: f32[1,768], index: 4, kind: input, shape index: {}]
  %s5 = inlined_call_operand.hbm [shape: bf16[768,256], index: 5, kind: input, shape index: {}]
  %s6 = inlined_call_operand.hbm [shape: f32[1,256], index: 6, kind: input, shape index: {}]
  %s7 = inlined_call_operand.hbm [shape: bf16[256,128], index: 7, kind: input, shape index: {}]
  %s8 = inlined_call_operand.hbm [shape: f32[3,128], index: 8, kind: input, shape index: {}]
  %s9 = inlined_call_operand.hbm [shape: f32[1,128], index: 9, kind: input, shape index: {}]
  %s10 = inlined_call_operand.hbm [shape: f32[16,128], index: 10, kind: output, shape index: {}]
  %s11 = sld [smem:[#allocation0]]
  $region109: #{tpu_custom_call.1} parent=0
    _
  %s13 = ssub.s32 1, %s11
  %s14 = scalar_select 0, %s13, %s11
  $region1: #{tpu_custom_call.1} parent=0
    #allocation2 [shape = 'u8[4096]{0}', space=vmem, size = 0x1000, scoped, tag = 'input window, operand 0']
    #allocation3 [shape = 's32[2]{0}', space=sflag, size = 0x8, scoped, tag = 'scoped memory for tpu_custom_call.1']
    #allocation4 [shape = 's32[2]{0}', space=sflag, size = 0x8, scoped, tag = 'scoped memory for tpu_custom_call.1']
    #allocation5 [shape = 'u8[196608]{0}', space=vmem, size = 0x30000, scoped, tag = 'input window, operand 2, single buffered']
    #allocation6 [shape = 's32[1]{0}', space=sflag, size = 0x4, scoped, tag = 'scoped memory for tpu_custom_call.1']
    #allocation7 [shape = 'u8[1179648]{0}', space=vmem, size = 0x120000, scoped, tag = 'input window, operand 3, single buffered']
    #allocation8 [shape = 'u8[3072]{0}', space=vmem, size = 0xc00, scoped, tag = 'input window, operand 4, single buffered']
    #allocation9 [shape = 's32[1]{0}', space=sflag, size = 0x4, scoped, tag = 'scoped memory for tpu_custom_call.1']
    #allocation10 [shape = 'u8[393216]{0}', space=vmem, size = 0x60000, scoped, tag = 'input window, operand 5, single buffered']
    #allocation11 [shape = 'u8[1024]{0}', space=vmem, size = 0x400, scoped, tag = 'input window, operand 6, single buffered']
    #allocation12 [shape = 's32[1]{0}', space=sflag, size = 0x4, scoped, tag = 'scoped memory for tpu_custom_call.1']
    #allocation13 [shape = 'u8[65536]{0}', space=vmem, size = 0x10000, scoped, tag = 'input window, operand 7, single buffered']
    #allocation14 [shape = 'u8[2048]{0}', space=vmem, size = 0x800, scoped, tag = 'input window, operand 8, single buffered']
    #allocation15 [shape = 's32[1]{0}', space=sflag, size = 0x4, scoped, tag = 'scoped memory for tpu_custom_call.1']
    #allocation16 [shape = 'u8[512]{0}', space=vmem, size = 0x400, scoped, tag = 'input window, operand 9, single buffered']
    #allocation17 [shape = 'u8[8192]{0}', space=vmem, size = 0x2000, scoped, tag = 'output window, operand 0']
    %15 = vsyncpa [#allocation3], 0
    %s16 = scalar_lea.sflag [#allocation3], 1
    %17 = vsyncpa %s16, 0
    %18 = vsyncpa [#allocation6], 0
    %19 = vsyncpa [#allocation9], 0
    %20 = vsyncpa [#allocation12], 0
    %21 = vsyncpa [#allocation15], 0
    %22 = vsyncpa [#allocation4], 0
    %s23 = scalar_lea.sflag [#allocation4], 1
    %24 = vsyncpa %s23, 0
    loop: start=0, step=1, limit=4
    $region2: #{tpu_custom_call.1} parent=1 // loop_pre_header
      _
    $region3: #{tpu_custom_call.1} parent=1 // loop_header
      %s26 = sphi 0, %s30
      %p27 = scmp.ge.s32.totalorder %s26, 4
      %s36 = sphi 0, %s38
      %s39 = sphi 0, %s36
      %s40 = sphi 0, %s39
      %s56 = sphi 0, %s40
      %s62 = sphi 0, %s64
      %s65 = sphi 0, %s62
      %s66 = sphi 0, %s65
      %s82 = sphi 0, %s66
      %s86 = sphi 0, %s86
      %s88 = sphi 0, %s86
      %s89 = sphi 0, %s88
      %s103 = sphi 0, %s89
      %s107 = sphi 0, %s107
      %s109 = sphi 0, %s107
      %s110 = sphi 0, %s109
      %s124 = sphi 0, %s110
      %s128 = sphi 0, %s128
      %s130 = sphi 0, %s128
      %s131 = sphi 0, %s130
      %s145 = sphi 0, %s131
      %s149 = sphi 0, %s149
      %s151 = sphi 0, %s149
      %s152 = sphi 0, %s151
      %s166 = sphi 0, %s152
      %s170 = sphi 0, %s170
      %s172 = sphi 0, %s170
      %s173 = sphi 0, %s172
      %s187 = sphi 0, %s173
      %s191 = sphi 0, %s191
      %s193 = sphi 0, %s191
      %s194 = sphi 0, %s193
      %s208 = sphi 0, %s194
      %s212 = sphi 0, %s212
      %s214 = sphi 0, %s212
      %s215 = sphi 0, %s214
      %s229 = sphi 0, %s215
      %s233 = sphi 0, %s233
      %s235 = sphi 0, %s233
      %s236 = sphi 0, %s235
      %s250 = sphi 0, %s236
      %s256 = sphi 0, %s258
      %s259 = sphi 0, %s256
      %s260 = sphi 0, %s259
      %s276 = sphi 0, %s260
    $region4: #{tpu_custom_call.1} parent=1 // loop_header_branch
      %29 = sbr.rel (%p27) target = $region8
    $region5: #{tpu_custom_call.1} parent=1 // loop_body
      %s31 = ssub.s32 %s26, 1
      %s32 = ssub.s32 %s26, 2
      %s33 = sadd.s32 %s26, 1
      %s34 = ssub.s32 %s26, %s33
      %p35 = scmp.eq.s32.totalorder %s34, 0
      %s37 = sadd.s32 %s36, 1
      %s38 = scalar_select %p35, %s36, %s37
      %p41 = pneg %p35
      %p42 = scmp.eq.s32.totalorder %s26, 1
      %p43 = por %p41, %p42
      %p44 = scmp.ne.s32.totalorder %s36, %s39
      %p45 = scmp.eq.s32.totalorder %s26, 0
      %p46 = por %p44, %p45
      %p47 = scmp.ne.s32.totalorder %s36, %s39
      %p48 = scmp.eq.s32.totalorder %s31, 1
      %p49 = por %p47, %p48
      %p50 = scmp.ne.s32.totalorder %s39, %s40
      %p51 = scmp.eq.s32.totalorder %s31, 0
      %p52 = por %p50, %p51
      %p53 = scmp.ne.s32.totalorder %s39, %s40
      %p54 = scmp.eq.s32.totalorder %s32, 1
      %p55 = por %p53, %p54
      %p57 = scmp.ne.s32.totalorder %s40, %s56
      %p58 = scmp.eq.s32.totalorder %s32, 0
      %p59 = por %p57, %p58
      %s60 = ssub.s32 %s26, %s33
      %p61 = scmp.eq.s32.totalorder %s60, 0
      %s63 = sadd.s32 %s62, 1
      %s64 = scalar_select %p61, %s62, %s63
      %p67 = pneg %p61
      %p68 = scmp.eq.s32.totalorder %s26, 1
      %p69 = por %p67, %p68
      %p70 = scmp.ne.s32.totalorder %s62, %s65
      %p71 = scmp.eq.s32.totalorder %s26, 0
      %p72 = por %p70, %p71
      %p73 = scmp.ne.s32.totalorder %s62, %s65
      %p74 = scmp.eq.s32.totalorder %s31, 1
      %p75 = por %p73, %p74
      %p76 = scmp.ne.s32.totalorder %s65, %s66
      %p77 = scmp.eq.s32.totalorder %s31, 0
      %p78 = por %p76, %p77
      %p79 = scmp.ne.s32.totalorder %s65, %s66
      %p80 = scmp.eq.s32.totalorder %s32, 1
      %p81 = por %p79, %p80
      %p83 = scmp.ne.s32.totalorder %s66, %s82
      %p84 = scmp.eq.s32.totalorder %s32, 0
      %p85 = por %p83, %p84
      %s87 = sadd.s32 %s86, 1
      %p90 = scmp.eq.s32.totalorder %s26, 1
      %p91 = scmp.ne.s32.totalorder %s86, %s88
      %p92 = scmp.eq.s32.totalorder %s26, 0
      %p93 = por %p91, %p92
      %p94 = scmp.ne.s32.totalorder %s86, %s88
      %p95 = scmp.eq.s32.totalorder %s31, 1
      %p96 = por %p94, %p95
      %p97 = scmp.ne.s32.totalorder %s88, %s89
      %p98 = scmp.eq.s32.totalorder %s31, 0
      %p99 = por %p97, %p98
      %p100 = scmp.ne.s32.totalorder %s88, %s89
      %p101 = scmp.eq.s32.totalorder %s32, 1
      %p102 = por %p100, %p101
      %p104 = scmp.ne.s32.totalorder %s89, %s103
      %p105 = scmp.eq.s32.totalorder %s32, 0
      %p106 = por %p104, %p105
      %s108 = sadd.s32 %s107, 1
      %p111 = scmp.eq.s32.totalorder %s26, 1
      %p112 = scmp.ne.s32.totalorder %s107, %s109
      %p113 = scmp.eq.s32.totalorder %s26, 0
      %p114 = por %p112, %p113
      %p115 = scmp.ne.s32.totalorder %s107, %s109
      %p116 = scmp.eq.s32.totalorder %s31, 1
      %p117 = por %p115, %p116
      %p118 = scmp.ne.s32.totalorder %s109, %s110
      %p119 = scmp.eq.s32.totalorder %s31, 0
      %p120 = por %p118, %p119
      %p121 = scmp.ne.s32.totalorder %s109, %s110
      %p122 = scmp.eq.s32.totalorder %s32, 1
      %p123 = por %p121, %p122
      %p125 = scmp.ne.s32.totalorder %s110, %s124
      %p126 = scmp.eq.s32.totalorder %s32, 0
      %p127 = por %p125, %p126
      %s129 = sadd.s32 %s128, 1
      %p132 = scmp.eq.s32.totalorder %s26, 1
      %p133 = scmp.ne.s32.totalorder %s128, %s130
      %p134 = scmp.eq.s32.totalorder %s26, 0
      %p135 = por %p133, %p134
      %p136 = scmp.ne.s32.totalorder %s128, %s130
      %p137 = scmp.eq.s32.totalorder %s31, 1
      %p138 = por %p136, %p137
      %p139 = scmp.ne.s32.totalorder %s130, %s131
      %p140 = scmp.eq.s32.totalorder %s31, 0
      %p141 = por %p139, %p140
      %p142 = scmp.ne.s32.totalorder %s130, %s131
      %p143 = scmp.eq.s32.totalorder %s32, 1
      %p144 = por %p142, %p143
      %p146 = scmp.ne.s32.totalorder %s131, %s145
      %p147 = scmp.eq.s32.totalorder %s32, 0
      %p148 = por %p146, %p147
      %s150 = sadd.s32 %s149, 1
      %p153 = scmp.eq.s32.totalorder %s26, 1
      %p154 = scmp.ne.s32.totalorder %s149, %s151
      %p155 = scmp.eq.s32.totalorder %s26, 0
      %p156 = por %p154, %p155
      %p157 = scmp.ne.s32.totalorder %s149, %s151
      %p158 = scmp.eq.s32.totalorder %s31, 1
      %p159 = por %p157, %p158
      %p160 = scmp.ne.s32.totalorder %s151, %s152
      %p161 = scmp.eq.s32.totalorder %s31, 0
      %p162 = por %p160, %p161
      %p163 = scmp.ne.s32.totalorder %s151, %s152
      %p164 = scmp.eq.s32.totalorder %s32, 1
      %p165 = por %p163, %p164
      %p167 = scmp.ne.s32.totalorder %s152, %s166
      %p168 = scmp.eq.s32.totalorder %s32, 0
      %p169 = por %p167, %p168
      %s171 = sadd.s32 %s170, 1
      %p174 = scmp.eq.s32.totalorder %s26, 1
      %p175 = scmp.ne.s32.totalorder %s170, %s172
      %p176 = scmp.eq.s32.totalorder %s26, 0
      %p177 = por %p175, %p176
      %p178 = scmp.ne.s32.totalorder %s170, %s172
      %p179 = scmp.eq.s32.totalorder %s31, 1
      %p180 = por %p178, %p179
      %p181 = scmp.ne.s32.totalorder %s172, %s173
      %p182 = scmp.eq.s32.totalorder %s31, 0
      %p183 = por %p181, %p182
      %p184 = scmp.ne.s32.totalorder %s172, %s173
      %p185 = scmp.eq.s32.totalorder %s32, 1
      %p186 = por %p184, %p185
      %p188 = scmp.ne.s32.totalorder %s173, %s187
      %p189 = scmp.eq.s32.totalorder %s32, 0
      %p190 = por %p188, %p189
      %s192 = sadd.s32 %s191, 1
      %p195 = scmp.eq.s32.totalorder %s26, 1
      %p196 = scmp.ne.s32.totalorder %s191, %s193
      %p197 = scmp.eq.s32.totalorder %s26, 0
      %p198 = por %p196, %p197
      %p199 = scmp.ne.s32.totalorder %s191, %s193
      %p200 = scmp.eq.s32.totalorder %s31, 1
      %p201 = por %p199, %p200
      %p202 = scmp.ne.s32.totalorder %s193, %s194
      %p203 = scmp.eq.s32.totalorder %s31, 0
      %p204 = por %p202, %p203
      %p205 = scmp.ne.s32.totalorder %s193, %s194
      %p206 = scmp.eq.s32.totalorder %s32, 1
      %p207 = por %p205, %p206
      %p209 = scmp.ne.s32.totalorder %s194, %s208
      %p210 = scmp.eq.s32.totalorder %s32, 0
      %p211 = por %p209, %p210
      %s213 = sadd.s32 %s212, 1
      %p216 = scmp.eq.s32.totalorder %s26, 1
      %p217 = scmp.ne.s32.totalorder %s212, %s214
      %p218 = scmp.eq.s32.totalorder %s26, 0
      %p219 = por %p217, %p218
      %p220 = scmp.ne.s32.totalorder %s212, %s214
      %p221 = scmp.eq.s32.totalorder %s31, 1
      %p222 = por %p220, %p221
      %p223 = scmp.ne.s32.totalorder %s214, %s215
      %p224 = scmp.eq.s32.totalorder %s31, 0
      %p225 = por %p223, %p224
      %p226 = scmp.ne.s32.totalorder %s214, %s215
      %p227 = scmp.eq.s32.totalorder %s32, 1
      %p228 = por %p226, %p227
      %p230 = scmp.ne.s32.totalorder %s215, %s229
      %p231 = scmp.eq.s32.totalorder %s32, 0
      %p232 = por %p230, %p231
      %s234 = sadd.s32 %s233, 1
      %p237 = scmp.eq.s32.totalorder %s26, 1
      %p238 = scmp.ne.s32.totalorder %s233, %s235
      %p239 = scmp.eq.s32.totalorder %s26, 0
      %p240 = por %p238, %p239
      %p241 = scmp.ne.s32.totalorder %s233, %s235
      %p242 = scmp.eq.s32.totalorder %s31, 1
      %p243 = por %p241, %p242
      %p244 = scmp.ne.s32.totalorder %s235, %s236
      %p245 = scmp.eq.s32.totalorder %s31, 0
      %p246 = por %p244, %p245
      %p247 = scmp.ne.s32.totalorder %s235, %s236
      %p248 = scmp.eq.s32.totalorder %s32, 1
      %p249 = por %p247, %p248
      %p251 = scmp.ne.s32.totalorder %s236, %s250
      %p252 = scmp.eq.s32.totalorder %s32, 0
      %p253 = por %p251, %p252
      %s254 = ssub.s32 %s26, %s33
      %p255 = scmp.eq.s32.totalorder %s254, 0
      %s257 = sadd.s32 %s256, 1
      %s258 = scalar_select %p255, %s256, %s257
      %p261 = pneg %p255
      %p262 = scmp.eq.s32.totalorder %s26, 1
      %p263 = por %p261, %p262
      %p264 = scmp.ne.s32.totalorder %s256, %s259
      %p265 = scmp.eq.s32.totalorder %s26, 0
      %p266 = por %p264, %p265
      %p267 = scmp.ne.s32.totalorder %s256, %s259
      %p268 = scmp.eq.s32.totalorder %s31, 1
      %p269 = por %p267, %p268
      %p270 = scmp.ne.s32.totalorder %s259, %s260
      %p271 = scmp.eq.s32.totalorder %s31, 0
      %p272 = por %p270, %p271
      %p273 = scmp.ne.s32.totalorder %s259, %s260
      %p274 = scmp.eq.s32.totalorder %s32, 1
      %p275 = por %p273, %p274
      %p277 = scmp.ne.s32.totalorder %s260, %s276
      %p278 = scmp.eq.s32.totalorder %s32, 0
      %p279 = por %p277, %p278
      %p280 = scmp.le.s32.totalorder 1, %s26
      %p281 = scmp.lt.s32.totalorder %s26, 3
      %p282 = pnand %p280, %p281
      %p283 = pneg %p282
      // Predicated region
      $region9: #{tpu_custom_call.1} parent=5 // pred_check
        _
      $region10: #{tpu_custom_call.1} parent=5 // pred_check_branch
        %285 = sbr.rel (%p282) target = $region12
      $region11: #{tpu_custom_call.1} parent=5 // pred_region
        %s286 = ssub.s32 %s26, 1
        // Predicated region
        $region13: #{tpu_custom_call.1} parent=11 // pred_check
          %p287 = pneg %p99
        $region14: #{tpu_custom_call.1} parent=11 // pred_check_branch
          %289 = sbr.rel (%p287) target = $region16
        $region15: #{tpu_custom_call.1} parent=11 // pred_region
          %s291 = ssub.s32 6144, 6144
          %292 = vsyncadd [#allocation6], %s291
          %s293 = sshll.u32 [#allocation5], 4
          %s294 = int_to_ptr.vmem [resolvable:$true] %s293
          %299 = dma.hbm_to_vmem [thread:$0]  %s2, 6144, %s294, [#allocation6], 384, 384, 24
        $region16: #{tpu_custom_call.1} parent=11 // pred_fallthru
          _
        // Predicated region
        $region17: #{tpu_custom_call.1} parent=11 // pred_check
          %p300 = pneg %p120
        $region18: #{tpu_custom_call.1} parent=11 // pred_check_branch
          %302 = sbr.rel (%p300) target = $region20
        $region19: #{tpu_custom_call.1} parent=11 // pred_region
          %s304 = ssub.s32 36864, 36864
          %305 = vsyncadd [#allocation6], %s304
          %s306 = sshll.u32 [#allocation7], 4
          %s307 = int_to_ptr.vmem [resolvable:$true] %s306
          %312 = dma.hbm_to_vmem [thread:$0]  %s3, 36864, %s307, [#allocation6], 384, 384, 24
        $region20: #{tpu_custom_call.1} parent=11 // pred_fallthru
          _
        // Predicated region
        $region21: #{tpu_custom_call.1} parent=11 // pred_check
          %p313 = pneg %p141
        $region22: #{tpu_custom_call.1} parent=11 // pred_check_branch
          %315 = sbr.rel (%p313) target = $region24
        $region23: #{tpu_custom_call.1} parent=11 // pred_region
          %s317 = ssub.s32 96, 96
          %318 = vsyncadd [#allocation9], %s317
          %s320 = sshll.u32 [#allocation8], 4
          %s321 = int_to_ptr.vmem [resolvable:$true] %s320
          %323 = dma.hbm_to_vmem [thread:$0]  %s4, 96, %s321, [#allocation9]
        $region24: #{tpu_custom_call.1} parent=11 // pred_fallthru
          _
        // Predicated region
        $region25: #{tpu_custom_call.1} parent=11 // pred_check
          %p324 = pneg %p162
        $region26: #{tpu_custom_call.1} parent=11 // pred_check_branch
          %326 = sbr.rel (%p324) target = $region28
        $region27: #{tpu_custom_call.1} parent=11 // pred_region
          %s328 = ssub.s32 12288, 12288
          %329 = vsyncadd [#allocation9], %s328
          %s330 = sshll.u32 [#allocation10], 4
          %s331 = int_to_ptr.vmem [resolvable:$true] %s330
          %336 = dma.hbm_to_vmem [thread:$0]  %s5, 12288, %s331, [#allocation9], 128, 128, 8
        $region28: #{tpu_custom_call.1} parent=11 // pred_fallthru
          _
        // Predicated region
        $region29: #{tpu_custom_call.1} parent=11 // pred_check
          %p337 = pneg %p183
        $region30: #{tpu_custom_call.1} parent=11 // pred_check_branch
          %339 = sbr.rel (%p337) target = $region32
        $region31: #{tpu_custom_call.1} parent=11 // pred_region
          %s341 = ssub.s32 32, 32
          %342 = vsyncadd [#allocation12], %s341
          %s344 = sshll.u32 [#allocation11], 4
          %s345 = int_to_ptr.vmem [resolvable:$true] %s344
          %347 = dma.hbm_to_vmem [thread:$0]  %s6, 32, %s345, [#allocation12]
        $region32: #{tpu_custom_call.1} parent=11 // pred_fallthru
          _
        // Predicated region
        $region33: #{tpu_custom_call.1} parent=11 // pred_check
          %p348 = pneg %p204
        $region34: #{tpu_custom_call.1} parent=11 // pred_check_branch
          %350 = sbr.rel (%p348) target = $region36
        $region35: #{tpu_custom_call.1} parent=11 // pred_region
          %s352 = ssub.s32 2048, 2048
          %353 = vsyncadd [#allocation12], %s352
          %s354 = sshll.u32 [#allocation13], 4
          %s355 = int_to_ptr.vmem [resolvable:$true] %s354
          %360 = dma.hbm_to_vmem [thread:$0]  %s7, 2048, %s355, [#allocation12], 64, 64, 4
        $region36: #{tpu_custom_call.1} parent=11 // pred_fallthru
          _
        // Predicated region
        $region37: #{tpu_custom_call.1} parent=11 // pred_check
          %p361 = pneg %p225
        $region38: #{tpu_custom_call.1} parent=11 // pred_check_branch
          %363 = sbr.rel (%p361) target = $region40
        $region39: #{tpu_custom_call.1} parent=11 // pred_region
          %s365 = ssub.s32 64, 64
          %366 = vsyncadd [#allocation15], %s365
          %s368 = sshll.u32 [#allocation14], 4
          %s369 = int_to_ptr.vmem [resolvable:$true] %s368
          %371 = dma.hbm_to_vmem [thread:$0]  %s8, 64, %s369, [#allocation15]
        $region40: #{tpu_custom_call.1} parent=11 // pred_fallthru
          _
        // Predicated region
        $region41: #{tpu_custom_call.1} parent=11 // pred_check
          %p372 = pneg %p246
        $region42: #{tpu_custom_call.1} parent=11 // pred_check_branch
          %374 = sbr.rel (%p372) target = $region44
        $region43: #{tpu_custom_call.1} parent=11 // pred_region
          %s376 = ssub.s32 16, 16
          %377 = vsyncadd [#allocation15], %s376
          %s379 = sshll.u32 [#allocation16], 4
          %s380 = int_to_ptr.vmem [resolvable:$true] %s379
          %382 = dma.hbm_to_vmem [thread:$0]  %s9, 16, %s380, [#allocation15]
        $region44: #{tpu_custom_call.1} parent=11 // pred_fallthru
          _
      $region12: #{tpu_custom_call.1} parent=5 // pred_fallthru
        _
      %p383 = scmp.lt.s32.totalorder %s26, 2
      // Predicated region
      $region45: #{tpu_custom_call.1} parent=5 // pred_check
        %p384 = pneg %p383
      $region46: #{tpu_custom_call.1} parent=5 // pred_check_branch
        %386 = sbr.rel (%p384) target = $region48
      $region47: #{tpu_custom_call.1} parent=5 // pred_region
        // Predicated region
        $region49: #{tpu_custom_call.1} parent=47 // pred_check
          %p387 = pneg %p46
        $region50: #{tpu_custom_call.1} parent=47 // pred_check_branch
          %389 = sbr.rel (%p387) target = $region52
        $region51: #{tpu_custom_call.1} parent=47 // pred_region
          %s390 = sand.u32 %s36, 1
          %s391 = scalar_lea.sflag [#allocation3], %s390
          %s392 = sand.u32 %s36, 1
          %s393 = smul.addr %s392, 4
          %s394 = scalar_lea.vmem [#allocation2], %s393
          %s396 = ssub.s32 64, 64
          %397 = vsyncadd %s391, %s396
          %s398 = smul.addr %s26, 64
          %s399 = scalar_lea.hbm %s0, %s398
          %s401 = sshll.u32 %s394, 4
          %s402 = int_to_ptr.vmem [resolvable:$true] %s401
          %404 = dma.hbm_to_vmem [thread:$0]  %s399, 64, %s402, %s391
        $region52: #{tpu_custom_call.1} parent=47 // pred_fallthru
          _
        // Predicated region
        $region53: #{tpu_custom_call.1} parent=47 // pred_check
          %p405 = pneg %p72
        $region54: #{tpu_custom_call.1} parent=47 // pred_check_branch
          %407 = sbr.rel (%p405) target = $region56
        $region55: #{tpu_custom_call.1} parent=47 // pred_region
          %p408 = scmp.lt.s32.totalorder %s26, 1
          %s409 = scalar_select %p408, %s26, 1
          %s410 = smul.addr %s409, 8
          %s411 = scalar_lea.vmem %s1, %s410
        $region56: #{tpu_custom_call.1} parent=47 // pred_fallthru
          _
      $region48: #{tpu_custom_call.1} parent=5 // pred_fallthru
        _
      %p412 = scmp.le.s32.totalorder 1, %s26
      %p413 = scmp.lt.s32.totalorder %s26, 3
      %p414 = pnand %p412, %p413
      %p415 = pneg %p414
      // Predicated region
      $region57: #{tpu_custom_call.1} parent=5 // pred_check
        _
      $region58: #{tpu_custom_call.1} parent=5 // pred_check_branch
        %417 = sbr.rel (%p414) target = $region60
      $region59: #{tpu_custom_call.1} parent=5 // pred_region
        %s418 = ssub.s32 %s26, 1
        %s419 = sand.u32 %s39, 1
        %s420 = scalar_lea.sflag [#allocation3], %s419
        %s421 = sand.u32 %s39, 1
        %s422 = smul.addr %s421, 4
        %s423 = scalar_lea.vmem [#allocation2], %s422
        // Predicated region
        $region61: #{tpu_custom_call.1} parent=59 // pred_check
          %p424 = pneg %p52
        $region62: #{tpu_custom_call.1} parent=59 // pred_check_branch
          %426 = sbr.rel (%p424) target = $region64
        $region63: #{tpu_custom_call.1} parent=59 // pred_region
          %427 = dma.done %s420, 64
        $region64: #{tpu_custom_call.1} parent=59 // pred_fallthru
          _
        // Predicated region
        $region65: #{tpu_custom_call.1} parent=59 // pred_check
          %p428 = pneg %p99
        $region66: #{tpu_custom_call.1} parent=59 // pred_check_branch
          %430 = sbr.rel (%p428) target = $region68
        $region67: #{tpu_custom_call.1} parent=59 // pred_region
          %431 = dma.done [#allocation6], 6144
        $region68: #{tpu_custom_call.1} parent=59 // pred_fallthru
          _
        // Predicated region
        $region69: #{tpu_custom_call.1} parent=59 // pred_check
          %p432 = pneg %p120
        $region70: #{tpu_custom_call.1} parent=59 // pred_check_branch
          %434 = sbr.rel (%p432) target = $region72
        $region71: #{tpu_custom_call.1} parent=59 // pred_region
          %435 = dma.done [#allocation6], 36864
        $region72: #{tpu_custom_call.1} parent=59 // pred_fallthru
          _
        // Predicated region
        $region73: #{tpu_custom_call.1} parent=59 // pred_check
          %p436 = pneg %p141
        $region74: #{tpu_custom_call.1} parent=59 // pred_check_branch
          %438 = sbr.rel (%p436) target = $region76
        $region75: #{tpu_custom_call.1} parent=59 // pred_region
          %439 = dma.done [#allocation9], 96
        $region76: #{tpu_custom_call.1} parent=59 // pred_fallthru
          _
        // Predicated region
        $region77: #{tpu_custom_call.1} parent=59 // pred_check
          %p440 = pneg %p162
        $region78: #{tpu_custom_call.1} parent=59 // pred_check_branch
          %442 = sbr.rel (%p440) target = $region80
        $region79: #{tpu_custom_call.1} parent=59 // pred_region
          %443 = dma.done [#allocation9], 12288
        $region80: #{tpu_custom_call.1} parent=59 // pred_fallthru
          _
        // Predicated region
        $region81: #{tpu_custom_call.1} parent=59 // pred_check
          %p444 = pneg %p183
        $region82: #{tpu_custom_call.1} parent=59 // pred_check_branch
          %446 = sbr.rel (%p444) target = $region84
        $region83: #{tpu_custom_call.1} parent=59 // pred_region
          %447 = dma.done [#allocation12], 32
        $region84: #{tpu_custom_call.1} parent=59 // pred_fallthru
          _
        // Predicated region
        $region85: #{tpu_custom_call.1} parent=59 // pred_check
          %p448 = pneg %p204
        $region86: #{tpu_custom_call.1} parent=59 // pred_check_branch
          %450 = sbr.rel (%p448) target = $region88
        $region87: #{tpu_custom_call.1} parent=59 // pred_region
          %451 = dma.done [#allocation12], 2048
        $region88: #{tpu_custom_call.1} parent=59 // pred_fallthru
          _
        // Predicated region
        $region89: #{tpu_custom_call.1} parent=59 // pred_check
          %p452 = pneg %p225
        $region90: #{tpu_custom_call.1} parent=59 // pred_check_branch
          %454 = sbr.rel (%p452) target = $region92
        $region91: #{tpu_custom_call.1} parent=59 // pred_region
          %455 = dma.done [#allocation15], 64
        $region92: #{tpu_custom_call.1} parent=59 // pred_fallthru
          _
        // Predicated region
        $region93: #{tpu_custom_call.1} parent=59 // pred_check
          %p456 = pneg %p246
        $region94: #{tpu_custom_call.1} parent=59 // pred_check_branch
          %458 = sbr.rel (%p456) target = $region96
        $region95: #{tpu_custom_call.1} parent=59 // pred_region
          %459 = dma.done [#allocation15], 16
        $region96: #{tpu_custom_call.1} parent=59 // pred_fallthru
          _
        %s460 = sand.u32 %s39, 1
        %s461 = scalar_lea.sflag [#allocation3], %s460
        %s462 = sand.u32 %s39, 1
        %s463 = smul.addr %s462, 4
        %s464 = scalar_lea.vmem [#allocation2], %s463
        %p465 = pneg %p52
        %p466 = pneg %p49
        %p467 = scmp.lt.s32.totalorder %s31, 1
        %s468 = scalar_select %p467, %s31, 1
        %s469 = smul.addr %s468, 8
        %s470 = scalar_lea.vmem %s1, %s469
        %p471 = pneg %p78
        %p472 = pneg %p75
        %p473 = pneg %p99
        %p474 = pneg %p96
        %p475 = pneg %p120
        %p476 = pneg %p117
        %p477 = pneg %p141
        %p478 = pneg %p138
        %p479 = pneg %p162
        %p480 = pneg %p159
        %p481 = pneg %p183
        %p482 = pneg %p180
        %p483 = pneg %p204
        %p484 = pneg %p201
        %p485 = pneg %p225
        %p486 = pneg %p222
        %p487 = pneg %p246
        %p488 = pneg %p243
        %p489 = pneg %p272
        %p490 = pneg %p269
        %s491 = sand.u32 %s259, 1
        %s492 = scalar_lea.sflag [#allocation4], %s491
        %s493 = sand.u32 %s259, 1
        %s494 = smul.addr %s493, 8
        %s495 = scalar_lea.vmem [#allocation17], %s494
        %p496 = scmp.lt.s32.totalorder %s31, 1
        %s497 = scalar_select %p496, %s31, 1
        %s498 = smul.addr %s497, 8
        %s499 = scalar_lea.vmem %s1, %s498
        %v501 = vld [vmem:[%s423] sm:$0xf]
        %v502 = vld [vmem:[#allocation5] sm:$0xff]
        %v503 = vld [vmem:[#allocation5 + $0x8] sm:$0xff]
        %v504 = vld [vmem:[#allocation5 + $0x10] sm:$0xff]
        %v505 = vld [vmem:[#allocation5 + $0x18] sm:$0xff]
        %v506 = vld [vmem:[#allocation5 + $0x20] sm:$0xff]
        %v507 = vld [vmem:[#allocation5 + $0x28] sm:$0xff]
        %v508 = vld [vmem:[#allocation5 + $0x30] sm:$0xff]
        %v509 = vld [vmem:[#allocation5 + $0x38] sm:$0xff]
        %v510 = vld [vmem:[#allocation5 + $0x40] sm:$0xff]
        %v511 = vld [vmem:[#allocation5 + $0x48] sm:$0xff]
        %v512 = vld [vmem:[#allocation5 + $0x50] sm:$0xff]
        %v513 = vld [vmem:[#allocation5 + $0x58] sm:$0xff]
        %v514 = vld [vmem:[#allocation5 + $0x60] sm:$0xff]
        %v515 = vld [vmem:[#allocation5 + $0x68] sm:$0xff]
        %v516 = vld [vmem:[#allocation5 + $0x70] sm:$0xff]
        %v517 = vld [vmem:[#allocation5 + $0x78] sm:$0xff]
        %v518 = vld [vmem:[#allocation5 + $0x80] sm:$0xff]
        %v519 = vld [vmem:[#allocation5 + $0x88] sm:$0xff]
        %v520 = vld [vmem:[#allocation5 + $0x90] sm:$0xff]
        %v521 = vld [vmem:[#allocation5 + $0x98] sm:$0xff]
        %v522 = vld [vmem:[#allocation5 + $0xa0] sm:$0xff]
        %v523 = vld [vmem:[#allocation5 + $0xa8] sm:$0xff]
        %v524 = vld [vmem:[#allocation5 + $0xb0] sm:$0xff]
        %v525 = vld [vmem:[#allocation5 + $0xb8] sm:$0xff]
        %v526 = vld [vmem:[#allocation5 + $0xc0] sm:$0xff]
        %v527 = vld [vmem:[#allocation5 + $0xc8] sm:$0xff]
        %v528 = vld [vmem:[#allocation5 + $0xd0] sm:$0xff]
        %v529 = vld [vmem:[#allocation5 + $0xd8] sm:$0xff]
        %v530 = vld [vmem:[#allocation5 + $0xe0] sm:$0xff]
        %v531 = vld [vmem:[#allocation5 + $0xe8] sm:$0xff]
        %v532 = vld [vmem:[#allocation5 + $0xf0] sm:$0xff]
        %v533 = vld [vmem:[#allocation5 + $0xf8] sm:$0xff]
        %v534 = vld [vmem:[#allocation5 + $0x100] sm:$0xff]
        %v535 = vld [vmem:[#allocation5 + $0x108] sm:$0xff]
        %v536 = vld [vmem:[#allocation5 + $0x110] sm:$0xff]
        %v537 = vld [vmem:[#allocation5 + $0x118] sm:$0xff]
        %v538 = vld [vmem:[#allocation5 + $0x120] sm:$0xff]
        %v539 = vld [vmem:[#allocation5 + $0x128] sm:$0xff]
        %v540 = vld [vmem:[#allocation5 + $0x130] sm:$0xff]
        %v541 = vld [vmem:[#allocation5 + $0x138] sm:$0xff]
        %v542 = vld [vmem:[#allocation5 + $0x140] sm:$0xff]
        %v543 = vld [vmem:[#allocation5 + $0x148] sm:$0xff]
        %v544 = vld [vmem:[#allocation5 + $0x150] sm:$0xff]
        %v545 = vld [vmem:[#allocation5 + $0x158] sm:$0xff]
        %v546 = vld [vmem:[#allocation5 + $0x160] sm:$0xff]
        %v547 = vld [vmem:[#allocation5 + $0x168] sm:$0xff]
        %v548 = vld [vmem:[#allocation5 + $0x170] sm:$0xff]
        %v549 = vld [vmem:[#allocation5 + $0x178] sm:$0xff]
        %v598 = vunpack.c.l.b16 %v502
        %v599 = vunpack.c.h.b16 %v502
        %v600 = vunpack.c.l.b16 %v503
        %v601 = vunpack.c.h.b16 %v503
        %v602 = vunpack.c.l.b16 %v504
        %v603 = vunpack.c.h.b16 %v504
        %v604 = vunpack.c.l.b16 %v505
        %v605 = vunpack.c.h.b16 %v505
        %v606 = vunpack.c.l.b16 %v506
        %v607 = vunpack.c.h.b16 %v506
        %v608 = vunpack.c.l.b16 %v507
        %v609 = vunpack.c.h.b16 %v507
        %v610 = vunpack.c.l.b16 %v508
        %v611 = vunpack.c.h.b16 %v508
        %v612 = vunpack.c.l.b16 %v509
        %v613 = vunpack.c.h.b16 %v509
        %v614 = vunpack.c.l.b16 %v510
        %v615 = vunpack.c.h.b16 %v510
        %v616 = vunpack.c.l.b16 %v511
        %v617 = vunpack.c.h.b16 %v511
        %v618 = vunpack.c.l.b16 %v512
        %v619 = vunpack.c.h.b16 %v512
        %v620 = vunpack.c.l.b16 %v513
        %v621 = vunpack.c.h.b16 %v513
        %v622 = vunpack.c.l.b16 %v514
        %v623 = vunpack.c.h.b16 %v514
        %v624 = vunpack.c.l.b16 %v515
        %v625 = vunpack.c.h.b16 %v515
        %v626 = vunpack.c.l.b16 %v516
        %v627 = vunpack.c.h.b16 %v516
        %v628 = vunpack.c.l.b16 %v517
        %v629 = vunpack.c.h.b16 %v517
        %v630 = vunpack.c.l.b16 %v518
        %v631 = vunpack.c.h.b16 %v518
        %v632 = vunpack.c.l.b16 %v519
        %v633 = vunpack.c.h.b16 %v519
        %v634 = vunpack.c.l.b16 %v520
        %v635 = vunpack.c.h.b16 %v520
        %v636 = vunpack.c.l.b16 %v521
        %v637 = vunpack.c.h.b16 %v521
        %v638 = vunpack.c.l.b16 %v522
        %v639 = vunpack.c.h.b16 %v522
        %v640 = vunpack.c.l.b16 %v523
        %v641 = vunpack.c.h.b16 %v523
        %v642 = vunpack.c.l.b16 %v524
        %v643 = vunpack.c.h.b16 %v524
        %v644 = vunpack.c.l.b16 %v525
        %v645 = vunpack.c.h.b16 %v525
        %v646 = vunpack.c.l.b16 %v526
        %v647 = vunpack.c.h.b16 %v526
        %v648 = vunpack.c.l.b16 %v527
        %v649 = vunpack.c.h.b16 %v527
        %v650 = vunpack.c.l.b16 %v528
        %v651 = vunpack.c.h.b16 %v528
        %v652 = vunpack.c.l.b16 %v529
        %v653 = vunpack.c.h.b16 %v529
        %v654 = vunpack.c.l.b16 %v530
        %v655 = vunpack.c.h.b16 %v530
        %v656 = vunpack.c.l.b16 %v531
        %v657 = vunpack.c.h.b16 %v531
        %v658 = vunpack.c.l.b16 %v532
        %v659 = vunpack.c.h.b16 %v532
        %v660 = vunpack.c.l.b16 %v533
        %v661 = vunpack.c.h.b16 %v533
        %v662 = vunpack.c.l.b16 %v534
        %v663 = vunpack.c.h.b16 %v534
        %v664 = vunpack.c.l.b16 %v535
        %v665 = vunpack.c.h.b16 %v535
        %v666 = vunpack.c.l.b16 %v536
        %v667 = vunpack.c.h.b16 %v536
        %v668 = vunpack.c.l.b16 %v537
        %v669 = vunpack.c.h.b16 %v537
        %v670 = vunpack.c.l.b16 %v538
        %v671 = vunpack.c.h.b16 %v538
        %v672 = vunpack.c.l.b16 %v539
        %v673 = vunpack.c.h.b16 %v539
        %v674 = vunpack.c.l.b16 %v540
        %v675 = vunpack.c.h.b16 %v540
        %v676 = vunpack.c.l.b16 %v541
        %v677 = vunpack.c.h.b16 %v541
        %v678 = vunpack.c.l.b16 %v542
        %v679 = vunpack.c.h.b16 %v542
        %v680 = vunpack.c.l.b16 %v543
        %v681 = vunpack.c.h.b16 %v543
        %v682 = vunpack.c.l.b16 %v544
        %v683 = vunpack.c.h.b16 %v544
        %v684 = vunpack.c.l.b16 %v545
        %v685 = vunpack.c.h.b16 %v545
        %v686 = vunpack.c.l.b16 %v546
        %v687 = vunpack.c.h.b16 %v546
        %v688 = vunpack.c.l.b16 %v547
        %v689 = vunpack.c.h.b16 %v547
        %v690 = vunpack.c.l.b16 %v548
        %v691 = vunpack.c.h.b16 %v548
        %v692 = vunpack.c.l.b16 %v549
        %v693 = vunpack.c.h.b16 %v549
        %v694 = vpack.c.b16 %v604, %v598
        %v695 = vpack.c.b16 %v605, %v599
        %v696 = vpack.c.b16 %v606, %v600
        %v697 = vpack.c.b16 %v607, %v601
        %v698 = vpack.c.b16 %v608, %v602
        %v699 = vpack.c.b16 %v609, %v603
        %v700 = vpack.c.b16 %v616, %v610
        %v701 = vpack.c.b16 %v617, %v611
        %v702 = vpack.c.b16 %v618, %v612
        %v703 = vpack.c.b16 %v619, %v613
        %v704 = vpack.c.b16 %v620, %v614
        %v705 = vpack.c.b16 %v621, %v615
        %v706 = vpack.c.b16 %v628, %v622
        %v707 = vpack.c.b16 %v629, %v623
        %v708 = vpack.c.b16 %v630, %v624
        %v709 = vpack.c.b16 %v631, %v625
        %v710 = vpack.c.b16 %v632, %v626
        %v711 = vpack.c.b16 %v633, %v627
        %v712 = vpack.c.b16 %v640, %v634
        %v713 = vpack.c.b16 %v641, %v635
        %v714 = vpack.c.b16 %v642, %v636
        %v715 = vpack.c.b16 %v643, %v637
        %v716 = vpack.c.b16 %v644, %v638
        %v717 = vpack.c.b16 %v645, %v639
        %v718 = vpack.c.b16 %v652, %v646
        %v719 = vpack.c.b16 %v653, %v647
        %v720 = vpack.c.b16 %v654, %v648
        %v721 = vpack.c.b16 %v655, %v649
        %v722 = vpack.c.b16 %v656, %v650
        %v723 = vpack.c.b16 %v657, %v651
        %v724 = vpack.c.b16 %v664, %v658
        %v725 = vpack.c.b16 %v665, %v659
        %v726 = vpack.c.b16 %v666, %v660
        %v727 = vpack.c.b16 %v667, %v661
        %v728 = vpack.c.b16 %v668, %v662
        %v729 = vpack.c.b16 %v669, %v663
        %v730 = vpack.c.b16 %v676, %v670
        %v731 = vpack.c.b16 %v677, %v671
        %v732 = vpack.c.b16 %v678, %v672
        %v733 = vpack.c.b16 %v679, %v673
        %v734 = vpack.c.b16 %v680, %v674
        %v735 = vpack.c.b16 %v681, %v675
        %v736 = vpack.c.b16 %v688, %v682
        %v737 = vpack.c.b16 %v689, %v683
        %v738 = vpack.c.b16 %v690, %v684
        %v739 = vpack.c.b16 %v691, %v685
        %v740 = vpack.c.b16 %v692, %v686
        %v741 = vpack.c.b16 %v693, %v687
        %790 = vmatprep.subr.bf16.mxu0 %v695
        %791 = vmatpush1.bf16.msra.mxu0 %v694
        %792 = vmatprep.subr.bf16.mxu0 %v701
        %793 = vmatpush1.bf16.msra.mxu0 %v700
        %794 = vmatprep.subr.bf16.mxu0 %v707
        %795 = vmatpush1.bf16.msra.mxu0 %v706
        %796 = vmatprep.subr.bf16.mxu0 %v713
        %797 = vmatpush1.bf16.msra.mxu0 %v712
        %798 = vmatprep.subr.bf16.mxu0 %v719
        %799 = vmatpush1.bf16.msra.mxu0 %v718
        %800 = vmatprep.subr.bf16.mxu0 %v725
        %801 = vmatpush1.bf16.msra.mxu0 %v724
        %802 = vmatprep.subr.bf16.mxu0 %v731
        %803 = vmatpush1.bf16.msra.mxu0 %v730
        %804 = vmatprep.subr.bf16.mxu0 %v737
        %805 = vmatpush1.bf16.msra.mxu0 %v736
        %806 = vmatprep.subr.bf16.mxu0 0
        %807 = vmatpush1.bf16.msra.mxu0 0
        %808 = vmatprep.subr.bf16.mxu0 0
        %809 = vmatpush1.bf16.msra.mxu0 0
        %810 = vmatprep.subr.bf16.mxu0 0
        %811 = vmatpush1.bf16.msra.mxu0 0
        %812 = vmatprep.subr.bf16.mxu0 0
        %813 = vmatpush1.bf16.msra.mxu0 0
        %814 = vmatprep.subr.bf16.mxu0 0
        %815 = vmatpush1.bf16.msra.mxu0 0
        %816 = vmatprep.subr.bf16.mxu0 0
        %817 = vmatpush1.bf16.msra.mxu0 0
        %818 = vmatprep.subr.bf16.mxu0 0
        %819 = vmatpush1.bf16.msra.mxu0 0
        %820 = vmatprep.subr.bf16.mxu0 0
        %821 = vmatpush1.bf16.msra.mxu0 0
        %822 = vmatprep.mubr.bf16.mxu0 0
        %823 = vmatmul.mubr.bf16.gmra.mrb[0].mxu0 %v501
        %v824 = vpop.f32.mrb[0].mxu0
        %v825 = vadd.f32 0.0, %v824
        %v826 = vpop.f32.mrb[0].mxu0
        %v827 = vadd.f32 0.0, %v826
        %v828 = vpop.f32.mrb[0].mxu0
        %v829 = vpop.f32.mrb[0].mxu0
        %830 = vdwg.mxu0
        %831 = vmatprep.subr.bf16.mxu0 %v697
        %832 = vmatpush1.bf16.msra.mxu0 %v696
        %833 = vmatprep.subr.bf16.mxu0 %v703
        %834 = vmatpush1.bf16.msra.mxu0 %v702
        %835 = vmatprep.subr.bf16.mxu0 %v709
        %836 = vmatpush1.bf16.msra.mxu0 %v708
        %837 = vmatprep.subr.bf16.mxu0 %v715
        %838 = vmatpush1.bf16.msra.mxu0 %v714
        %839 = vmatprep.subr.bf16.mxu0 %v721
        %840 = vmatpush1.bf16.msra.mxu0 %v720
        %841 = vmatprep.subr.bf16.mxu0 %v727
        %842 = vmatpush1.bf16.msra.mxu0 %v726
        %843 = vmatprep.subr.bf16.mxu0 %v733
        %844 = vmatpush1.bf16.msra.mxu0 %v732
        %845 = vmatprep.subr.bf16.mxu0 %v739
        %846 = vmatpush1.bf16.msra.mxu0 %v738
        %847 = vmatprep.subr.bf16.mxu0 0
        %848 = vmatpush1.bf16.msra.mxu0 0
        %849 = vmatprep.subr.bf16.mxu0 0
        %850 = vmatpush1.bf16.msra.mxu0 0
        %851 = vmatprep.subr.bf16.mxu0 0
        %852 = vmatpush1.bf16.msra.mxu0 0
        %853 = vmatprep.subr.bf16.mxu0 0
        %854 = vmatpush1.bf16.msra.mxu0 0
        %855 = vmatprep.subr.bf16.mxu0 0
        %856 = vmatpush1.bf16.msra.mxu0 0
        %857 = vmatprep.subr.bf16.mxu0 0
        %858 = vmatpush1.bf16.msra.mxu0 0
        %859 = vmatprep.subr.bf16.mxu0 0
        %860 = vmatpush1.bf16.msra.mxu0 0
        %861 = vmatprep.subr.bf16.mxu0 0
        %862 = vmatpush1.bf16.msra.mxu0 0
        %863 = vmatprep.mubr.bf16.mxu0 0
        %864 = vmatmul.mubr.bf16.gmra.mrb[0].mxu0 %v501
        %v865 = vpop.f32.mrb[0].mxu0
        %v866 = vadd.f32 0.0, %v865
        %v867 = vpop.f32.mrb[0].mxu0
        %v868 = vadd.f32 0.0, %v867
        %v869 = vpop.f32.mrb[0].mxu0
        %v870 = vpop.f32.mrb[0].mxu0
        %871 = vdwg.mxu0
        %872 = vmatprep.subr.bf16.mxu0 %v699
        %873 = vmatpush1.bf16.msra.mxu0 %v698
        %874 = vmatprep.subr.bf16.mxu0 %v705
        %875 = vmatpush1.bf16.msra.mxu0 %v704
        %876 = vmatprep.subr.bf16.mxu0 %v711
        %877 = vmatpush1.bf16.msra.mxu0 %v710
        %878 = vmatprep.subr.bf16.mxu0 %v717
        %879 = vmatpush1.bf16.msra.mxu0 %v716
        %880 = vmatprep.subr.bf16.mxu0 %v723
        %881 = vmatpush1.bf16.msra.mxu0 %v722
        %882 = vmatprep.subr.bf16.mxu0 %v729
        %883 = vmatpush1.bf16.msra.mxu0 %v728
        %884 = vmatprep.subr.bf16.mxu0 %v735
        %885 = vmatpush1.bf16.msra.mxu0 %v734
        %886 = vmatprep.subr.bf16.mxu0 %v741
        %887 = vmatpush1.bf16.msra.mxu0 %v740
        %888 = vmatprep.subr.bf16.mxu0 0
        %889 = vmatpush1.bf16.msra.mxu0 0
        %890 = vmatprep.subr.bf16.mxu0 0
        %891 = vmatpush1.bf16.msra.mxu0 0
        %892 = vmatprep.subr.bf16.mxu0 0
        %893 = vmatpush1.bf16.msra.mxu0 0
        %894 = vmatprep.subr.bf16.mxu0 0
        %895 = vmatpush1.bf16.msra.mxu0 0
        %896 = vmatprep.subr.bf16.mxu0 0
        %897 = vmatpush1.bf16.msra.mxu0 0
        %898 = vmatprep.subr.bf16.mxu0 0
        %899 = vmatpush1.bf16.msra.mxu0 0
        %900 = vmatprep.subr.bf16.mxu0 0
        %901 = vmatpush1.bf16.msra.mxu0 0
        %902 = vmatprep.subr.bf16.mxu0 0
        %903 = vmatpush1.bf16.msra.mxu0 0
        %904 = vmatprep.mubr.bf16.mxu0 0
        %905 = vmatmul.mubr.bf16.gmra.mrb[0].mxu0 %v501
        %v906 = vpop.f32.mrb[0].mxu0
        %v907 = vadd.f32 0.0, %v906
        %v908 = vpop.f32.mrb[0].mxu0
        %v909 = vadd.f32 0.0, %v908
        %v910 = vpop.f32.mrb[0].mxu0
        %v911 = vpop.f32.mrb[0].mxu0
        %912 = vdwg.mxu0
        %v913 = vpack.c.bf16 %v825, %v825
        %v914 = vpack.c.bf16 %v827, %v827
        %v915 = vpack.c.bf16 %v866, %v866
        %v916 = vpack.c.bf16 %v868, %v868
        %v917 = vpack.c.bf16 %v907, %v907
        %v918 = vpack.c.bf16 %v909, %v909
        %v919 = vld [vmem:[#allocation7] sm:$0xff]
        %v920 = vld [vmem:[#allocation7 + $0x8] sm:$0xff]
        %v921 = vld [vmem:[#allocation7 + $0x10] sm:$0xff]
        %v922 = vld [vmem:[#allocation7 + $0x18] sm:$0xff]
        %v923 = vld [vmem:[#allocation7 + $0x20] sm:$0xff]
        %v924 = vld [vmem:[#allocation7 + $0x28] sm:$0xff]
        %v925 = vld [vmem:[#allocation7 + $0x30] sm:$0xff]
        %v926 = vld [vmem:[#allocation7 + $0x38] sm:$0xff]
        %v927 = vld [vmem:[#allocation7 + $0x40] sm:$0xff]
        %v928 = vld [vmem:[#allocation7 + $0x48] sm:$0xff]
        %v929 = vld [vmem:[#allocation7 + $0x50] sm:$0xff]
        %v930 = vld [vmem:[#allocation7 + $0x58] sm:$0xff]
        %v931 = vld [vmem:[#allocation7 + $0x60] sm:$0xff]
        %v932 = vld [vmem:[#allocation7 + $0x68] sm:$0xff]
        %v933 = vld [vmem:[#allocation7 + $0x70] sm:$0xff]
        %v934 = vld [vmem:[#allocation7 + $0x78] sm:$0xff]
        %v935 = vld [vmem:[#allocation7 + $0x80] sm:$0xff]
        %v936 = vld [vmem:[#allocation7 + $0x88] sm:$0xff]
        %v937 = vld [vmem:[#allocation7 + $0x90] sm:$0xff]
        %v938 = vld [vmem:[#allocation7 + $0x98] sm:$0xff]
        %v939 = vld [vmem:[#allocation7 + $0xa0] sm:$0xff]
        %v940 = vld [vmem:[#allocation7 + $0xa8] sm:$0xff]
        %v941 = vld [vmem:[#allocation7 + $0xb0] sm:$0xff]
        %v942 = vld [vmem:[#allocation7 + $0xb8] sm:$0xff]
        %v943 = vld [vmem:[#allocation7 + $0xc0] sm:$0xff]
        %v944 = vld [vmem:[#allocation7 + $0xc8] sm:$0xff]
        %v945 = vld [vmem:[#allocation7 + $0xd0] sm:$0xff]
        %v946 = vld [vmem:[#allocation7 + $0xd8] sm:$0xff]
        %v947 = vld [vmem:[#allocation7 + $0xe0] sm:$0xff]
        %v948 = vld [vmem:[#allocation7 + $0xe8] sm:$0xff]
        %v949 = vld [vmem:[#allocation7 + $0xf0] sm:$0xff]
        %v950 = vld [vmem:[#allocation7 + $0xf8] sm:$0xff]
        %v951 = vld [vmem:[#allocation7 + $0x100] sm:$0xff]
        %v952 = vld [vmem:[#allocation7 + $0x108] sm:$0xff]
        %v953 = vld [vmem:[#allocation7 + $0x110] sm:$0xff]
        %v954 = vld [vmem:[#allocation7 + $0x118] sm:$0xff]
        %v955 = vld [vmem:[#allocation7 + $0x120] sm:$0xff]
        %v956 = vld [vmem:[#allocation7 + $0x128] sm:$0xff]
        %v957 = vld [vmem:[#allocation7 + $0x130] sm:$0xff]
        %v958 = vld [vmem:[#allocation7 + $0x138] sm:$0xff]
        %v959 = vld [vmem:[#allocation7 + $0x140] sm:$0xff]
        %v960 = vld [vmem:[#allocation7 + $0x148] sm:$0xff]
        %v961 = vld [vmem:[#allocation7 + $0x150] sm:$0xff]
        %v962 = vld [vmem:[#allocation7 + $0x158] sm:$0xff]
        %v963 = vld [vmem:[#allocation7 + $0x160] sm:$0xff]
        %v964 = vld [vmem:[#allocation7 + $0x168] sm:$0xff]
        %v965 = vld [vmem:[#allocation7 + $0x170] sm:$0xff]
        %v966 = vld [vmem:[#allocation7 + $0x178] sm:$0xff]
        %v967 = vld [vmem:[#allocation7 + $0x180] sm:$0xff]
        %v968 = vld [vmem:[#allocation7 + $0x188] sm:$0xff]
        %v969 = vld [vmem:[#allocation7 + $0x190] sm:$0xff]
        %v970 = vld [vmem:[#allocation7 + $0x198] sm:$0xff]
        %v971 = vld [vmem:[#allocation7 + $0x1a0] sm:$0xff]
        %v972 = vld [vmem:[#allocation7 + $0x1a8] sm:$0xff]
        %v973 = vld [vmem:[#allocation7 + $0x1b0] sm:$0xff]
        %v974 = vld [vmem:[#allocation7 + $0x1b8] sm:$0xff]
        %v975 = vld [vmem:[#allocation7 + $0x1c0] sm:$0xff]
        %v976 = vld [vmem:[#allocation7 + $0x1c8] sm:$0xff]
        %v977 = vld [vmem:[#allocation7 + $0x1d0] sm:$0xff]
        %v978 = vld [vmem:[#allocation7 + $0x1d8] sm:$0xff]
        %v979 = vld [vmem:[#allocation7 + $0x1e0] sm:$0xff]
        %v980 = vld [vmem:[#allocation7 + $0x1e8] sm:$0xff]
        %v981 = vld [vmem:[#allocation7 + $0x1f0] sm:$0xff]
        %v982 = vld [vmem:[#allocation7 + $0x1f8] sm:$0xff]
        %v983 = vld [vmem:[#allocation7 + $0x200] sm:$0xff]
        %v984 = vld [vmem:[#allocation7 + $0x208] sm:$0xff]
        %v985 = vld [vmem:[#allocation7 + $0x210] sm:$0xff]
        %v986 = vld [vmem:[#allocation7 + $0x218] sm:$0xff]
        %v987 = vld [vmem:[#allocation7 + $0x220] sm:$0xff]
        %v988 = vld [vmem:[#allocation7 + $0x228] sm:$0xff]
        %v989 = vld [vmem:[#allocation7 + $0x230] sm:$0xff]
        %v990 = vld [vmem:[#allocation7 + $0x238] sm:$0xff]
        %v991 = vld [vmem:[#allocation7 + $0x240] sm:$0xff]
        %v992 = vld [vmem:[#allocation7 + $0x248] sm:$0xff]
        %v993 = vld [vmem:[#allocation7 + $0x250] sm:$0xff]
        %v994 = vld [vmem:[#allocation7 + $0x258] sm:$0xff]
        %v995 = vld [vmem:[#allocation7 + $0x260] sm:$0xff]
        %v996 = vld [vmem:[#allocation7 + $0x268] sm:$0xff]
        %v997 = vld [vmem:[#allocation7 + $0x270] sm:$0xff]
        %v998 = vld [vmem:[#allocation7 + $0x278] sm:$0xff]
        %v999 = vld [vmem:[#allocation7 + $0x280] sm:$0xff]
        %v1000 = vld [vmem:[#allocation7 + $0x288] sm:$0xff]
        %v1001 = vld [vmem:[#allocation7 + $0x290] sm:$0xff]
        %v1002 = vld [vmem:[#allocation7 + $0x298] sm:$0xff]
        %v1003 = vld [vmem:[#allocation7 + $0x2a0] sm:$0xff]
        %v1004 = vld [vmem:[#allocation7 + $0x2a8] sm:$0xff]
        %v1005 = vld [vmem:[#allocation7 + $0x2b0] sm:$0xff]
        %v1006 = vld [vmem:[#allocation7 + $0x2b8] sm:$0xff]
        %v1007 = vld [vmem:[#allocation7 + $0x2c0] sm:$0xff]
        %v1008 = vld [vmem:[#allocation7 + $0x2c8] sm:$0xff]
        %v1009 = vld [vmem:[#allocation7 + $0x2d0] sm:$0xff]
        %v1010 = vld [vmem:[#allocation7 + $0x2d8] sm:$0xff]
        %v1011 = vld [vmem:[#allocation7 + $0x2e0] sm:$0xff]
        %v1012 = vld [vmem:[#allocation7 + $0x2e8] sm:$0xff]
        %v1013 = vld [vmem:[#allocation7 + $0x2f0] sm:$0xff]
        %v1014 = vld [vmem:[#allocation7 + $0x2f8] sm:$0xff]
        %v1015 = vld [vmem:[#allocation7 + $0x300] sm:$0xff]
        %v1016 = vld [vmem:[#allocation7 + $0x308] sm:$0xff]
        %v1017 = vld [vmem:[#allocation7 + $0x310] sm:$0xff]
        %v1018 = vld [vmem:[#allocation7 + $0x318] sm:$0xff]
        %v1019 = vld [vmem:[#allocation7 + $0x320] sm:$0xff]
        %v1020 = vld [vmem:[#allocation7 + $0x328] sm:$0xff]
        %v1021 = vld [vmem:[#allocation7 + $0x330] sm:$0xff]
        %v1022 = vld [vmem:[#allocation7 + $0x338] sm:$0xff]
        %v1023 = vld [vmem:[#allocation7 + $0x340] sm:$0xff]
        %v1024 = vld [vmem:[#allocation7 + $0x348] sm:$0xff]
        %v1025 = vld [vmem:[#allocation7 + $0x350] sm:$0xff]
        %v1026 = vld [vmem:[#allocation7 + $0x358] sm:$0xff]
        %v1027 = vld [vmem:[#allocation7 + $0x360] sm:$0xff]
        %v1028 = vld [vmem:[#allocation7 + $0x368] sm:$0xff]
        %v1029 = vld [vmem:[#allocation7 + $0x370] sm:$0xff]
        %v1030 = vld [vmem:[#allocation7 + $0x378] sm:$0xff]
        %v1031 = vld [vmem:[#allocation7 + $0x380] sm:$0xff]
        %v1032 = vld [vmem:[#allocation7 + $0x388] sm:$0xff]
        %v1033 = vld [vmem:[#allocation7 + $0x390] sm:$0xff]
        %v1034 = vld [vmem:[#allocation7 + $0x398] sm:$0xff]
        %v1035 = vld [vmem:[#allocation7 + $0x3a0] sm:$0xff]
        %v1036 = vld [vmem:[#allocation7 + $0x3a8] sm:$0xff]
        %v1037 = vld [vmem:[#allocation7 + $0x3b0] sm:$0xff]
        %v1038 = vld [vmem:[#allocation7 + $0x3b8] sm:$0xff]
        %v1039 = vld [vmem:[#allocation7 + $0x3c0] sm:$0xff]
        %v1040 = vld [vmem:[#allocation7 + $0x3c8] sm:$0xff]
        %v1041 = vld [vmem:[#allocation7 + $0x3d0] sm:$0xff]
        %v1042 = vld [vmem:[#allocation7 + $0x3d8] sm:$0xff]
        %v1043 = vld [vmem:[#allocation7 + $0x3e0] sm:$0xff]
        %v1044 = vld [vmem:[#allocation7 + $0x3e8] sm:$0xff]
        %v1045 = vld [vmem:[#allocation7 + $0x3f0] sm:$0xff]
        %v1046 = vld [vmem:[#allocation7 + $0x3f8] sm:$0xff]
        %v1047 = vld [vmem:[#allocation7 + $0x400] sm:$0xff]
        %v1048 = vld [vmem:[#allocation7 + $0x408] sm:$0xff]
        %v1049 = vld [vmem:[#allocation7 + $0x410] sm:$0xff]
        %v1050 = vld [vmem:[#allocation7 + $0x418] sm:$0xff]
        %v1051 = vld [vmem:[#allocation7 + $0x420] sm:$0xff]
        %v1052 = vld [vmem:[#allocation7 + $0x428] sm:$0xff]
        %v1053 = vld [vmem:[#allocation7 + $0x430] sm:$0xff]
        %v1054 = vld [vmem:[#allocation7 + $0x438] sm:$0xff]
        %v1055 = vld [vmem:[#allocation7 + $0x440] sm:$0xff]
        %v1056 = vld [vmem:[#allocation7 + $0x448] sm:$0xff]
        %v1057 = vld [vmem:[#allocation7 + $0x450] sm:$0xff]
        %v1058 = vld [vmem:[#allocation7 + $0x458] sm:$0xff]
        %v1059 = vld [vmem:[#allocation7 + $0x460] sm:$0xff]
        %v1060 = vld [vmem:[#allocation7 + $0x468] sm:$0xff]
        %v1061 = vld [vmem:[#allocation7 + $0x470] sm:$0xff]
        %v1062 = vld [vmem:[#allocation7 + $0x478] sm:$0xff]
        %v1063 = vld [vmem:[#allocation7 + $0x480] sm:$0xff]
        %v1064 = vld [vmem:[#allocation7 + $0x488] sm:$0xff]
        %v1065 = vld [vmem:[#allocation7 + $0x490] sm:$0xff]
        %v1066 = vld [vmem:[#allocation7 + $0x498] sm:$0xff]
        %v1067 = vld [vmem:[#allocation7 + $0x4a0] sm:$0xff]
        %v1068 = vld [vmem:[#allocation7 + $0x4a8] sm:$0xff]
        %v1069 = vld [vmem:[#allocation7 + $0x4b0] sm:$0xff]
        %v1070 = vld [vmem:[#allocation7 + $0x4b8] sm:$0xff]
        %v1071 = vld [vmem:[#allocation7 + $0x4c0] sm:$0xff]
        %v1072 = vld [vmem:[#allocation7 + $0x4c8] sm:$0xff]
        %v1073 = vld [vmem:[#allocation7 + $0x4d0] sm:$0xff]
        %v1074 = vld [vmem:[#allocation7 + $0x4d8] sm:$0xff]
        %v1075 = vld [vmem:[#allocation7 + $0x4e0] sm:$0xff]
        %v1076 = vld [vmem:[#allocation7 + $0x4e8] sm:$0xff]
        %v1077 = vld [vmem:[#allocation7 + $0x4f0] sm:$0xff]
        %v1078 = vld [vmem:[#allocation7 + $0x4f8] sm:$0xff]
        %v1079 = vld [vmem:[#allocation7 + $0x500] sm:$0xff]
        %v1080 = vld [vmem:[#allocation7 + $0x508] sm:$0xff]
        %v1081 = vld [vmem:[#allocation7 + $0x510] sm:$0xff]
        %v1082 = vld [vmem:[#allocation7 + $0x518] sm:$0xff]
        %v1083 = vld [vmem:[#allocation7 + $0x520] sm:$0xff]
        %v1084 = vld [vmem:[#allocation7 + $0x528] sm:$0xff]
        %v1085 = vld [vmem:[#allocation7 + $0x530] sm:$0xff]
        %v1086 = vld [vmem:[#allocation7 + $0x538] sm:$0xff]
        %v1087 = vld [vmem:[#allocation7 + $0x540] sm:$0xff]
        %v1088 = vld [vmem:[#allocation7 + $0x548] sm:$0xff]
        %v1089 = vld [vmem:[#allocation7 + $0x550] sm:$0xff]
        %v1090 = vld [vmem:[#allocation7 + $0x558] sm:$0xff]
        %v1091 = vld [vmem:[#allocation7 + $0x560] sm:$0xff]
        %v1092 = vld [vmem:[#allocation7 + $0x568] sm:$0xff]
        %v1093 = vld [vmem:[#allocation7 + $0x570] sm:$0xff]
        %v1094 = vld [vmem:[#allocation7 + $0x578] sm:$0xff]
        %v1095 = vld [vmem:[#allocation7 + $0x580] sm:$0xff]
        %v1096 = vld [vmem:[#allocation7 + $0x588] sm:$0xff]
        %v1097 = vld [vmem:[#allocation7 + $0x590] sm:$0xff]
        %v1098 = vld [vmem:[#allocation7 + $0x598] sm:$0xff]
        %v1099 = vld [vmem:[#allocation7 + $0x5a0] sm:$0xff]
        %v1100 = vld [vmem:[#allocation7 + $0x5a8] sm:$0xff]
        %v1101 = vld [vmem:[#allocation7 + $0x5b0] sm:$0xff]
        %v1102 = vld [vmem:[#allocation7 + $0x5b8] sm:$0xff]
        %v1103 = vld [vmem:[#allocation7 + $0x5c0] sm:$0xff]
        %v1104 = vld [vmem:[#allocation7 + $0x5c8] sm:$0xff]
        %v1105 = vld [vmem:[#allocation7 + $0x5d0] sm:$0xff]
        %v1106 = vld [vmem:[#allocation7 + $0x5d8] sm:$0xff]
        %v1107 = vld [vmem:[#allocation7 + $0x5e0] sm:$0xff]
        %v1108 = vld [vmem:[#allocation7 + $0x5e8] sm:$0xff]
        %v1109 = vld [vmem:[#allocation7 + $0x5f0] sm:$0xff]
        %v1110 = vld [vmem:[#allocation7 + $0x5f8] sm:$0xff]
        %v1111 = vld [vmem:[#allocation7 + $0x600] sm:$0xff]
        %v1112 = vld [vmem:[#allocation7 + $0x608] sm:$0xff]
        %v1113 = vld [vmem:[#allocation7 + $0x610] sm:$0xff]
        %v1114 = vld [vmem:[#allocation7 + $0x618] sm:$0xff]
        %v1115 = vld [vmem:[#allocation7 + $0x620] sm:$0xff]
        %v1116 = vld [vmem:[#allocation7 + $0x628] sm:$0xff]
        %v1117 = vld [vmem:[#allocation7 + $0x630] sm:$0xff]
        %v1118 = vld [vmem:[#allocation7 + $0x638] sm:$0xff]
        %v1119 = vld [vmem:[#allocation7 + $0x640] sm:$0xff]
        %v1120 = vld [vmem:[#allocation7 + $0x648] sm:$0xff]
        %v1121 = vld [vmem:[#allocation7 + $0x650] sm:$0xff]
        %v1122 = vld [vmem:[#allocation7 + $0x658] sm:$0xff]
        %v1123 = vld [vmem:[#allocation7 + $0x660] sm:$0xff]
        %v1124 = vld [vmem:[#allocation7 + $0x668] sm:$0xff]
        %v1125 = vld [vmem:[#allocation7 + $0x670] sm:$0xff]
        %v1126 = vld [vmem:[#allocation7 + $0x678] sm:$0xff]
        %v1127 = vld [vmem:[#allocation7 + $0x680] sm:$0xff]
        %v1128 = vld [vmem:[#allocation7 + $0x688] sm:$0xff]
        %v1129 = vld [vmem:[#allocation7 + $0x690] sm:$0xff]
        %v1130 = vld [vmem:[#allocation7 + $0x698] sm:$0xff]
        %v1131 = vld [vmem:[#allocation7 + $0x6a0] sm:$0xff]
        %v1132 = vld [vmem:[#allocation7 + $0x6a8] sm:$0xff]
        %v1133 = vld [vmem:[#allocation7 + $0x6b0] sm:$0xff]
        %v1134 = vld [vmem:[#allocation7 + $0x6b8] sm:$0xff]
        %v1135 = vld [vmem:[#allocation7 + $0x6c0] sm:$0xff]
        %v1136 = vld [vmem:[#allocation7 + $0x6c8] sm:$0xff]
        %v1137 = vld [vmem:[#allocation7 + $0x6d0] sm:$0xff]
        %v1138 = vld [vmem:[#allocation7 + $0x6d8] sm:$0xff]
        %v1139 = vld [vmem:[#allocation7 + $0x6e0] sm:$0xff]
        %v1140 = vld [vmem:[#allocation7 + $0x6e8] sm:$0xff]
        %v1141 = vld [vmem:[#allocation7 + $0x6f0] sm:$0xff]
        %v1142 = vld [vmem:[#allocation7 + $0x6f8] sm:$0xff]
        %v1143 = vld [vmem:[#allocation7 + $0x700] sm:$0xff]
        %v1144 = vld [vmem:[#allocation7 + $0x708] sm:$0xff]
        %v1145 = vld [vmem:[#allocation7 + $0x710] sm:$0xff]
        %v1146 = vld [vmem:[#allocation7 + $0x718] sm:$0xff]
        %v1147 = vld [vmem:[#allocation7 + $0x720] sm:$0xff]
        %v1148 = vld [vmem:[#allocation7 + $0x728] sm:$0xff]
        %v1149 = vld [vmem:[#allocation7 + $0x730] sm:$0xff]
        %v1150 = vld [vmem:[#allocation7 + $0x738] sm:$0xff]
        %v1151 = vld [vmem:[#allocation7 + $0x740] sm:$0xff]
        %v1152 = vld [vmem:[#allocation7 + $0x748] sm:$0xff]
        %v1153 = vld [vmem:[#allocation7 + $0x750] sm:$0xff]
        %v1154 = vld [vmem:[#allocation7 + $0x758] sm:$0xff]
        %v1155 = vld [vmem:[#allocation7 + $0x760] sm:$0xff]
        %v1156 = vld [vmem:[#allocation7 + $0x768] sm:$0xff]
        %v1157 = vld [vmem:[#allocation7 + $0x770] sm:$0xff]
        %v1158 = vld [vmem:[#allocation7 + $0x778] sm:$0xff]
        %v1159 = vld [vmem:[#allocation7 + $0x780] sm:$0xff]
        %v1160 = vld [vmem:[#allocation7 + $0x788] sm:$0xff]
        %v1161 = vld [vmem:[#allocation7 + $0x790] sm:$0xff]
        %v1162 = vld [vmem:[#allocation7 + $0x798] sm:$0xff]
        %v1163 = vld [vmem:[#allocation7 + $0x7a0] sm:$0xff]
        %v1164 = vld [vmem:[#allocation7 + $0x7a8] sm:$0xff]
        %v1165 = vld [vmem:[#allocation7 + $0x7b0] sm:$0xff]
        %v1166 = vld [vmem:[#allocation7 + $0x7b8] sm:$0xff]
        %v1167 = vld [vmem:[#allocation7 + $0x7c0] sm:$0xff]
        %v1168 = vld [vmem:[#allocation7 + $0x7c8] sm:$0xff]
        %v1169 = vld [vmem:[#allocation7 + $0x7d0] sm:$0xff]
        %v1170 = vld [vmem:[#allocation7 + $0x7d8] sm:$0xff]
        %v1171 = vld [vmem:[#allocation7 + $0x7e0] sm:$0xff]
        %v1172 = vld [vmem:[#allocation7 + $0x7e8] sm:$0xff]
        %v1173 = vld [vmem:[#allocation7 + $0x7f0] sm:$0xff]
        %v1174 = vld [vmem:[#allocation7 + $0x7f8] sm:$0xff]
        %v1175 = vld [vmem:[#allocation7 + $0x800] sm:$0xff]
        %v1176 = vld [vmem:[#allocation7 + $0x808] sm:$0xff]
        %v1177 = vld [vmem:[#allocation7 + $0x810] sm:$0xff]
        %v1178 = vld [vmem:[#allocation7 + $0x818] sm:$0xff]
        %v1179 = vld [vmem:[#allocation7 + $0x820] sm:$0xff]
        %v1180 = vld [vmem:[#allocation7 + $0x828] sm:$0xff]
        %v1181 = vld [vmem:[#allocation7 + $0x830] sm:$0xff]
        %v1182 = vld [vmem:[#allocation7 + $0x838] sm:$0xff]
        %v1183 = vld [vmem:[#allocation7 + $0x840] sm:$0xff]
        %v1184 = vld [vmem:[#allocation7 + $0x848] sm:$0xff]
        %v1185 = vld [vmem:[#allocation7 + $0x850] sm:$0xff]
        %v1186 = vld [vmem:[#allocation7 + $0x858] sm:$0xff]
        %v1187 = vld [vmem:[#allocation7 + $0x860] sm:$0xff]
        %v1188 = vld [vmem:[#allocation7 + $0x868] sm:$0xff]
        %v1189 = vld [vmem:[#allocation7 + $0x870] sm:$0xff]
        %v1190 = vld [vmem:[#allocation7 + $0x878] sm:$0xff]
        %v1191 = vld [vmem:[#allocation7 + $0x880] sm:$0xff]
        %v1192 = vld [vmem:[#allocation7 + $0x888] sm:$0xff]
        %v1193 = vld [vmem:[#allocation7 + $0x890] sm:$0xff]
        %v1194 = vld [vmem:[#allocation7 + $0x898] sm:$0xff]
        %v1195 = vld [vmem:[#allocation7 + $0x8a0] sm:$0xff]
        %v1196 = vld [vmem:[#allocation7 + $0x8a8] sm:$0xff]
        %v1197 = vld [vmem:[#allocation7 + $0x8b0] sm:$0xff]
        %v1198 = vld [vmem:[#allocation7 + $0x8b8] sm:$0xff]
        %v1199 = vld [vmem:[#allocation7 + $0x8c0] sm:$0xff]
        %v1200 = vld [vmem:[#allocation7 + $0x8c8] sm:$0xff]
        %v1201 = vld [vmem:[#allocation7 + $0x8d0] sm:$0xff]
        %v1202 = vld [vmem:[#allocation7 + $0x8d8] sm:$0xff]
        %v1203 = vld [vmem:[#allocation7 + $0x8e0] sm:$0xff]
        %v1204 = vld [vmem:[#allocation7 + $0x8e8] sm:$0xff]
        %v1205 = vld [vmem:[#allocation7 + $0x8f0] sm:$0xff]
        %v1206 = vld [vmem:[#allocation7 + $0x8f8] sm:$0xff]
        %v1207 = vld [vmem:[#allocation8] sm:$0x3f]
        %v1209 = vlaneseq
        %v1210 = vshrl.u32 %v1209, 7
        %v1211 = vsub.s32 0, %v1210
        %v1212 = vrot.slane %v1207, %v1211
        %v1213 = vlaneseq
        %v1214 = vshrl.u32 %v1213, 7
        %v1215 = vsub.s32 1, %v1214
        %v1216 = vrot.slane %v1207, %v1215
        %v1217 = vlaneseq
        %v1218 = vshrl.u32 %v1217, 7
        %v1219 = vsub.s32 2, %v1218
        %v1220 = vrot.slane %v1207, %v1219
        %v1221 = vlaneseq
        %v1222 = vshrl.u32 %v1221, 7
        %v1223 = vsub.s32 3, %v1222
        %v1224 = vrot.slane %v1207, %v1223
        %v1225 = vlaneseq
        %v1226 = vshrl.u32 %v1225, 7
        %v1227 = vsub.s32 4, %v1226
        %v1228 = vrot.slane %v1207, %v1227
        %v1229 = vlaneseq
        %v1230 = vshrl.u32 %v1229, 7
        %v1231 = vsub.s32 5, %v1230
        %v1232 = vrot.slane %v1207, %v1231
        %v1527 = vunpack.c.l.b16 %v919
        %v1528 = vunpack.c.h.b16 %v919
        %v1529 = vunpack.c.l.b16 %v920
        %v1530 = vunpack.c.h.b16 %v920
        %v1531 = vunpack.c.l.b16 %v921
        %v1532 = vunpack.c.h.b16 %v921
        %v1533 = vunpack.c.l.b16 %v922
        %v1534 = vunpack.c.h.b16 %v922
        %v1535 = vunpack.c.l.b16 %v923
        %v1536 = vunpack.c.h.b16 %v923
        %v1537 = vunpack.c.l.b16 %v924
        %v1538 = vunpack.c.h.b16 %v924
        %v1539 = vunpack.c.l.b16 %v925
        %v1540 = vunpack.c.h.b16 %v925
        %v1541 = vunpack.c.l.b16 %v926
        %v1542 = vunpack.c.h.b16 %v926
        %v1543 = vunpack.c.l.b16 %v927
        %v1544 = vunpack.c.h.b16 %v927
        %v1545 = vunpack.c.l.b16 %v928
        %v1546 = vunpack.c.h.b16 %v928
        %v1547 = vunpack.c.l.b16 %v929
        %v1548 = vunpack.c.h.b16 %v929
        %v1549 = vunpack.c.l.b16 %v930
        %v1550 = vunpack.c.h.b16 %v930
        %v1551 = vunpack.c.l.b16 %v931
        %v1552 = vunpack.c.h.b16 %v931
        %v1553 = vunpack.c.l.b16 %v932
        %v1554 = vunpack.c.h.b16 %v932
        %v1555 = vunpack.c.l.b16 %v933
        %v1556 = vunpack.c.h.b16 %v933
        %v1557 = vunpack.c.l.b16 %v934
        %v1558 = vunpack.c.h.b16 %v934
        %v1559 = vunpack.c.l.b16 %v935
        %v1560 = vunpack.c.h.b16 %v935
        %v1561 = vunpack.c.l.b16 %v936
        %v1562 = vunpack.c.h.b16 %v936
        %v1563 = vunpack.c.l.b16 %v937
        %v1564 = vunpack.c.h.b16 %v937
        %v1565 = vunpack.c.l.b16 %v938
        %v1566 = vunpack.c.h.b16 %v938
        %v1567 = vunpack.c.l.b16 %v939
        %v1568 = vunpack.c.h.b16 %v939
        %v1569 = vunpack.c.l.b16 %v940
        %v1570 = vunpack.c.h.b16 %v940
        %v1571 = vunpack.c.l.b16 %v941
        %v1572 = vunpack.c.h.b16 %v941
        %v1573 = vunpack.c.l.b16 %v942
        %v1574 = vunpack.c.h.b16 %v942
        %v1575 = vunpack.c.l.b16 %v943
        %v1576 = vunpack.c.h.b16 %v943
        %v1577 = vunpack.c.l.b16 %v944
        %v1578 = vunpack.c.h.b16 %v944
        %v1579 = vunpack.c.l.b16 %v945
        %v1580 = vunpack.c.h.b16 %v945
        %v1581 = vunpack.c.l.b16 %v946
        %v1582 = vunpack.c.h.b16 %v946
        %v1583 = vunpack.c.l.b16 %v947
        %v1584 = vunpack.c.h.b16 %v947
        %v1585 = vunpack.c.l.b16 %v948
        %v1586 = vunpack.c.h.b16 %v948
        %v1587 = vunpack.c.l.b16 %v949
        %v1588 = vunpack.c.h.b16 %v949
        %v1589 = vunpack.c.l.b16 %v950
        %v1590 = vunpack.c.h.b16 %v950
        %v1591 = vunpack.c.l.b16 %v951
        %v1592 = vunpack.c.h.b16 %v951
        %v1593 = vunpack.c.l.b16 %v952
        %v1594 = vunpack.c.h.b16 %v952
        %v1595 = vunpack.c.l.b16 %v953
        %v1596 = vunpack.c.h.b16 %v953
        %v1597 = vunpack.c.l.b16 %v954
        %v1598 = vunpack.c.h.b16 %v954
        %v1599 = vunpack.c.l.b16 %v955
        %v1600 = vunpack.c.h.b16 %v955
        %v1601 = vunpack.c.l.b16 %v956
        %v1602 = vunpack.c.h.b16 %v956
        %v1603 = vunpack.c.l.b16 %v957
        %v1604 = vunpack.c.h.b16 %v957
        %v1605 = vunpack.c.l.b16 %v958
        %v1606 = vunpack.c.h.b16 %v958
        %v1607 = vunpack.c.l.b16 %v959
        %v1608 = vunpack.c.h.b16 %v959
        %v1609 = vunpack.c.l.b16 %v960
        %v1610 = vunpack.c.h.b16 %v960
        %v1611 = vunpack.c.l.b16 %v961
        %v1612 = vunpack.c.h.b16 %v961
        %v1613 = vunpack.c.l.b16 %v962
        %v1614 = vunpack.c.h.b16 %v962
        %v1615 = vunpack.c.l.b16 %v963
        %v1616 = vunpack.c.h.b16 %v963
        %v1617 = vunpack.c.l.b16 %v964
        %v1618 = vunpack.c.h.b16 %v964
        %v1619 = vunpack.c.l.b16 %v965
        %v1620 = vunpack.c.h.b16 %v965
        %v1621 = vunpack.c.l.b16 %v966
        %v1622 = vunpack.c.h.b16 %v966
        %v1623 = vunpack.c.l.b16 %v967
        %v1624 = vunpack.c.h.b16 %v967
        %v1625 = vunpack.c.l.b16 %v968
        %v1626 = vunpack.c.h.b16 %v968
        %v1627 = vunpack.c.l.b16 %v969
        %v1628 = vunpack.c.h.b16 %v969
        %v1629 = vunpack.c.l.b16 %v970
        %v1630 = vunpack.c.h.b16 %v970
        %v1631 = vunpack.c.l.b16 %v971
        %v1632 = vunpack.c.h.b16 %v971
        %v1633 = vunpack.c.l.b16 %v972
        %v1634 = vunpack.c.h.b16 %v972
        %v1635 = vunpack.c.l.b16 %v973
        %v1636 = vunpack.c.h.b16 %v973
        %v1637 = vunpack.c.l.b16 %v974
        %v1638 = vunpack.c.h.b16 %v974
        %v1639 = vunpack.c.l.b16 %v975
        %v1640 = vunpack.c.h.b16 %v975
        %v1641 = vunpack.c.l.b16 %v976
        %v1642 = vunpack.c.h.b16 %v976
        %v1643 = vunpack.c.l.b16 %v977
        %v1644 = vunpack.c.h.b16 %v977
        %v1645 = vunpack.c.l.b16 %v978
        %v1646 = vunpack.c.h.b16 %v978
        %v1647 = vunpack.c.l.b16 %v979
        %v1648 = vunpack.c.h.b16 %v979
        %v1649 = vunpack.c.l.b16 %v980
        %v1650 = vunpack.c.h.b16 %v980
        %v1651 = vunpack.c.l.b16 %v981
        %v1652 = vunpack.c.h.b16 %v981
        %v1653 = vunpack.c.l.b16 %v982
        %v1654 = vunpack.c.h.b16 %v982
        %v1655 = vunpack.c.l.b16 %v983
        %v1656 = vunpack.c.h.b16 %v983
        %v1657 = vunpack.c.l.b16 %v984
        %v1658 = vunpack.c.h.b16 %v984
        %v1659 = vunpack.c.l.b16 %v985
        %v1660 = vunpack.c.h.b16 %v985
        %v1661 = vunpack.c.l.b16 %v986
        %v1662 = vunpack.c.h.b16 %v986
        %v1663 = vunpack.c.l.b16 %v987
        %v1664 = vunpack.c.h.b16 %v987
        %v1665 = vunpack.c.l.b16 %v988
        %v1666 = vunpack.c.h.b16 %v988
        %v1667 = vunpack.c.l.b16 %v989
        %v1668 = vunpack.c.h.b16 %v989
        %v1669 = vunpack.c.l.b16 %v990
        %v1670 = vunpack.c.h.b16 %v990
        %v1671 = vunpack.c.l.b16 %v991
        %v1672 = vunpack.c.h.b16 %v991
        %v1673 = vunpack.c.l.b16 %v992
        %v1674 = vunpack.c.h.b16 %v992
        %v1675 = vunpack.c.l.b16 %v993
        %v1676 = vunpack.c.h.b16 %v993
        %v1677 = vunpack.c.l.b16 %v994
        %v1678 = vunpack.c.h.b16 %v994
        %v1679 = vunpack.c.l.b16 %v995
        %v1680 = vunpack.c.h.b16 %v995
        %v1681 = vunpack.c.l.b16 %v996
        %v1682 = vunpack.c.h.b16 %v996
        %v1683 = vunpack.c.l.b16 %v997
        %v1684 = vunpack.c.h.b16 %v997
        %v1685 = vunpack.c.l.b16 %v998
        %v1686 = vunpack.c.h.b16 %v998
        %v1687 = vunpack.c.l.b16 %v999
        %v1688 = vunpack.c.h.b16 %v999
        %v1689 = vunpack.c.l.b16 %v1000
        %v1690 = vunpack.c.h.b16 %v1000
        %v1691 = vunpack.c.l.b16 %v1001
        %v1692 = vunpack.c.h.b16 %v1001
        %v1693 = vunpack.c.l.b16 %v1002
        %v1694 = vunpack.c.h.b16 %v1002
        %v1695 = vunpack.c.l.b16 %v1003
        %v1696 = vunpack.c.h.b16 %v1003
        %v1697 = vunpack.c.l.b16 %v1004
        %v1698 = vunpack.c.h.b16 %v1004
        %v1699 = vunpack.c.l.b16 %v1005
        %v1700 = vunpack.c.h.b16 %v1005
        %v1701 = vunpack.c.l.b16 %v1006
        %v1702 = vunpack.c.h.b16 %v1006
        %v1703 = vunpack.c.l.b16 %v1007
        %v1704 = vunpack.c.h.b16 %v1007
        %v1705 = vunpack.c.l.b16 %v1008
        %v1706 = vunpack.c.h.b16 %v1008
        %v1707 = vunpack.c.l.b16 %v1009
        %v1708 = vunpack.c.h.b16 %v1009
        %v1709 = vunpack.c.l.b16 %v1010
        %v1710 = vunpack.c.h.b16 %v1010
        %v1711 = vunpack.c.l.b16 %v1011
        %v1712 = vunpack.c.h.b16 %v1011
        %v1713 = vunpack.c.l.b16 %v1012
        %v1714 = vunpack.c.h.b16 %v1012
        %v1715 = vunpack.c.l.b16 %v1013
        %v1716 = vunpack.c.h.b16 %v1013
        %v1717 = vunpack.c.l.b16 %v1014
        %v1718 = vunpack.c.h.b16 %v1014
        %v1719 = vunpack.c.l.b16 %v1015
        %v1720 = vunpack.c.h.b16 %v1015
        %v1721 = vunpack.c.l.b16 %v1016
        %v1722 = vunpack.c.h.b16 %v1016
        %v1723 = vunpack.c.l.b16 %v1017
        %v1724 = vunpack.c.h.b16 %v1017
        %v1725 = vunpack.c.l.b16 %v1018
        %v1726 = vunpack.c.h.b16 %v1018
        %v1727 = vunpack.c.l.b16 %v1019
        %v1728 = vunpack.c.h.b16 %v1019
        %v1729 = vunpack.c.l.b16 %v1020
        %v1730 = vunpack.c.h.b16 %v1020
        %v1731 = vunpack.c.l.b16 %v1021
        %v1732 = vunpack.c.h.b16 %v1021
        %v1733 = vunpack.c.l.b16 %v1022
        %v1734 = vunpack.c.h.b16 %v1022
        %v1735 = vunpack.c.l.b16 %v1023
        %v1736 = vunpack.c.h.b16 %v1023
        %v1737 = vunpack.c.l.b16 %v1024
        %v1738 = vunpack.c.h.b16 %v1024
        %v1739 = vunpack.c.l.b16 %v1025
        %v1740 = vunpack.c.h.b16 %v1025
        %v1741 = vunpack.c.l.b16 %v1026
        %v1742 = vunpack.c.h.b16 %v1026
        %v1743 = vunpack.c.l.b16 %v1027
        %v1744 = vunpack.c.h.b16 %v1027
        %v1745 = vunpack.c.l.b16 %v1028
        %v1746 = vunpack.c.h.b16 %v1028
        %v1747 = vunpack.c.l.b16 %v1029
        %v1748 = vunpack.c.h.b16 %v1029
        %v1749 = vunpack.c.l.b16 %v1030
        %v1750 = vunpack.c.h.b16 %v1030
        %v1751 = vunpack.c.l.b16 %v1031
        %v1752 = vunpack.c.h.b16 %v1031
        %v1753 = vunpack.c.l.b16 %v1032
        %v1754 = vunpack.c.h.b16 %v1032
        %v1755 = vunpack.c.l.b16 %v1033
        %v1756 = vunpack.c.h.b16 %v1033
        %v1757 = vunpack.c.l.b16 %v1034
        %v1758 = vunpack.c.h.b16 %v1034
        %v1759 = vunpack.c.l.b16 %v1035
        %v1760 = vunpack.c.h.b16 %v1035
        %v1761 = vunpack.c.l.b16 %v1036
        %v1762 = vunpack.c.h.b16 %v1036
        %v1763 = vunpack.c.l.b16 %v1037
        %v1764 = vunpack.c.h.b16 %v1037
        %v1765 = vunpack.c.l.b16 %v1038
        %v1766 = vunpack.c.h.b16 %v1038
        %v1767 = vunpack.c.l.b16 %v1039
        %v1768 = vunpack.c.h.b16 %v1039
        %v1769 = vunpack.c.l.b16 %v1040
        %v1770 = vunpack.c.h.b16 %v1040
        %v1771 = vunpack.c.l.b16 %v1041
        %v1772 = vunpack.c.h.b16 %v1041
        %v1773 = vunpack.c.l.b16 %v1042
        %v1774 = vunpack.c.h.b16 %v1042
        %v1775 = vunpack.c.l.b16 %v1043
        %v1776 = vunpack.c.h.b16 %v1043
        %v1777 = vunpack.c.l.b16 %v1044
        %v1778 = vunpack.c.h.b16 %v1044
        %v1779 = vunpack.c.l.b16 %v1045
        %v1780 = vunpack.c.h.b16 %v1045
        %v1781 = vunpack.c.l.b16 %v1046
        %v1782 = vunpack.c.h.b16 %v1046
        %v1783 = vunpack.c.l.b16 %v1047
        %v1784 = vunpack.c.h.b16 %v1047
        %v1785 = vunpack.c.l.b16 %v1048
        %v1786 = vunpack.c.h.b16 %v1048
        %v1787 = vunpack.c.l.b16 %v1049
        %v1788 = vunpack.c.h.b16 %v1049
        %v1789 = vunpack.c.l.b16 %v1050
        %v1790 = vunpack.c.h.b16 %v1050
        %v1791 = vunpack.c.l.b16 %v1051
        %v1792 = vunpack.c.h.b16 %v1051
        %v1793 = vunpack.c.l.b16 %v1052
        %v1794 = vunpack.c.h.b16 %v1052
        %v1795 = vunpack.c.l.b16 %v1053
        %v1796 = vunpack.c.h.b16 %v1053
        %v1797 = vunpack.c.l.b16 %v1054
        %v1798 = vunpack.c.h.b16 %v1054
        %v1799 = vunpack.c.l.b16 %v1055
        %v1800 = vunpack.c.h.b16 %v1055
        %v1801 = vunpack.c.l.b16 %v1056
        %v1802 = vunpack.c.h.b16 %v1056
        %v1803 = vunpack.c.l.b16 %v1057
        %v1804 = vunpack.c.h.b16 %v1057
        %v1805 = vunpack.c.l.b16 %v1058
        %v1806 = vunpack.c.h.b16 %v1058
        %v1807 = vunpack.c.l.b16 %v1059
        %v1808 = vunpack.c.h.b16 %v1059
        %v1809 = vunpack.c.l.b16 %v1060
        %v1810 = vunpack.c.h.b16 %v1060
        %v1811 = vunpack.c.l.b16 %v1061
        %v1812 = vunpack.c.h.b16 %v1061
        %v1813 = vunpack.c.l.b16 %v1062
        %v1814 = vunpack.c.h.b16 %v1062
        %v1815 = vunpack.c.l.b16 %v1063
        %v1816 = vunpack.c.h.b16 %v1063
        %v1817 = vunpack.c.l.b16 %v1064
        %v1818 = vunpack.c.h.b16 %v1064
        %v1819 = vunpack.c.l.b16 %v1065
        %v1820 = vunpack.c.h.b16 %v1065
        %v1821 = vunpack.c.l.b16 %v1066
        %v1822 = vunpack.c.h.b16 %v1066
        %v1823 = vunpack.c.l.b16 %v1067
        %v1824 = vunpack.c.h.b16 %v1067
        %v1825 = vunpack.c.l.b16 %v1068
        %v1826 = vunpack.c.h.b16 %v1068
        %v1827 = vunpack.c.l.b16 %v1069
        %v1828 = vunpack.c.h.b16 %v1069
        %v1829 = vunpack.c.l.b16 %v1070
        %v1830 = vunpack.c.h.b16 %v1070
        %v1831 = vunpack.c.l.b16 %v1071
        %v1832 = vunpack.c.h.b16 %v1071
        %v1833 = vunpack.c.l.b16 %v1072
        %v1834 = vunpack.c.h.b16 %v1072
        %v1835 = vunpack.c.l.b16 %v1073
        %v1836 = vunpack.c.h.b16 %v1073
        %v1837 = vunpack.c.l.b16 %v1074
        %v1838 = vunpack.c.h.b16 %v1074
        %v1839 = vunpack.c.l.b16 %v1075
        %v1840 = vunpack.c.h.b16 %v1075
        %v1841 = vunpack.c.l.b16 %v1076
        %v1842 = vunpack.c.h.b16 %v1076
        %v1843 = vunpack.c.l.b16 %v1077
        %v1844 = vunpack.c.h.b16 %v1077
        %v1845 = vunpack.c.l.b16 %v1078
        %v1846 = vunpack.c.h.b16 %v1078
        %v1847 = vunpack.c.l.b16 %v1079
        %v1848 = vunpack.c.h.b16 %v1079
        %v1849 = vunpack.c.l.b16 %v1080
        %v1850 = vunpack.c.h.b16 %v1080
        %v1851 = vunpack.c.l.b16 %v1081
        %v1852 = vunpack.c.h.b16 %v1081
        %v1853 = vunpack.c.l.b16 %v1082
        %v1854 = vunpack.c.h.b16 %v1082
        %v1855 = vunpack.c.l.b16 %v1083
        %v1856 = vunpack.c.h.b16 %v1083
        %v1857 = vunpack.c.l.b16 %v1084
        %v1858 = vunpack.c.h.b16 %v1084
        %v1859 = vunpack.c.l.b16 %v1085
        %v1860 = vunpack.c.h.b16 %v1085
        %v1861 = vunpack.c.l.b16 %v1086
        %v1862 = vunpack.c.h.b16 %v1086
        %v1863 = vunpack.c.l.b16 %v1087
        %v1864 = vunpack.c.h.b16 %v1087
        %v1865 = vunpack.c.l.b16 %v1088
        %v1866 = vunpack.c.h.b16 %v1088
        %v1867 = vunpack.c.l.b16 %v1089
        %v1868 = vunpack.c.h.b16 %v1089
        %v1869 = vunpack.c.l.b16 %v1090
        %v1870 = vunpack.c.h.b16 %v1090
        %v1871 = vunpack.c.l.b16 %v1091
        %v1872 = vunpack.c.h.b16 %v1091
        %v1873 = vunpack.c.l.b16 %v1092
        %v1874 = vunpack.c.h.b16 %v1092
        %v1875 = vunpack.c.l.b16 %v1093
        %v1876 = vunpack.c.h.b16 %v1093
        %v1877 = vunpack.c.l.b16 %v1094
        %v1878 = vunpack.c.h.b16 %v1094
        %v1879 = vunpack.c.l.b16 %v1095
        %v1880 = vunpack.c.h.b16 %v1095
        %v1881 = vunpack.c.l.b16 %v1096
        %v1882 = vunpack.c.h.b16 %v1096
        %v1883 = vunpack.c.l.b16 %v1097
        %v1884 = vunpack.c.h.b16 %v1097
        %v1885 = vunpack.c.l.b16 %v1098
        %v1886 = vunpack.c.h.b16 %v1098
        %v1887 = vunpack.c.l.b16 %v1099
        %v1888 = vunpack.c.h.b16 %v1099
        %v1889 = vunpack.c.l.b16 %v1100
        %v1890 = vunpack.c.h.b16 %v1100
        %v1891 = vunpack.c.l.b16 %v1101
        %v1892 = vunpack.c.h.b16 %v1101
        %v1893 = vunpack.c.l.b16 %v1102
        %v1894 = vunpack.c.h.b16 %v1102
        %v1895 = vunpack.c.l.b16 %v1103
        %v1896 = vunpack.c.h.b16 %v1103
        %v1897 = vunpack.c.l.b16 %v1104
        %v1898 = vunpack.c.h.b16 %v1104
        %v1899 = vunpack.c.l.b16 %v1105
        %v1900 = vunpack.c.h.b16 %v1105
        %v1901 = vunpack.c.l.b16 %v1106
        %v1902 = vunpack.c.h.b16 %v1106
        %v1903 = vunpack.c.l.b16 %v1107
        %v1904 = vunpack.c.h.b16 %v1107
        %v1905 = vunpack.c.l.b16 %v1108
        %v1906 = vunpack.c.h.b16 %v1108
        %v1907 = vunpack.c.l.b16 %v1109
        %v1908 = vunpack.c.h.b16 %v1109
        %v1909 = vunpack.c.l.b16 %v1110
        %v1910 = vunpack.c.h.b16 %v1110
        %v1911 = vunpack.c.l.b16 %v1111
        %v1912 = vunpack.c.h.b16 %v1111
        %v1913 = vunpack.c.l.b16 %v1112
        %v1914 = vunpack.c.h.b16 %v1112
        %v1915 = vunpack.c.l.b16 %v1113
        %v1916 = vunpack.c.h.b16 %v1113
        %v1917 = vunpack.c.l.b16 %v1114
        %v1918 = vunpack.c.h.b16 %v1114
        %v1919 = vunpack.c.l.b16 %v1115
        %v1920 = vunpack.c.h.b16 %v1115
        %v1921 = vunpack.c.l.b16 %v1116
        %v1922 = vunpack.c.h.b16 %v1116
        %v1923 = vunpack.c.l.b16 %v1117
        %v1924 = vunpack.c.h.b16 %v1117
        %v1925 = vunpack.c.l.b16 %v1118
        %v1926 = vunpack.c.h.b16 %v1118
        %v1927 = vunpack.c.l.b16 %v1119
        %v1928 = vunpack.c.h.b16 %v1119
        %v1929 = vunpack.c.l.b16 %v1120
        %v1930 = vunpack.c.h.b16 %v1120
        %v1931 = vunpack.c.l.b16 %v1121
        %v1932 = vunpack.c.h.b16 %v1121
        %v1933 = vunpack.c.l.b16 %v1122
        %v1934 = vunpack.c.h.b16 %v1122
        %v1935 = vunpack.c.l.b16 %v1123
        %v1936 = vunpack.c.h.b16 %v1123
        %v1937 = vunpack.c.l.b16 %v1124
        %v1938 = vunpack.c.h.b16 %v1124
        %v1939 = vunpack.c.l.b16 %v1125
        %v1940 = vunpack.c.h.b16 %v1125
        %v1941 = vunpack.c.l.b16 %v1126
        %v1942 = vunpack.c.h.b16 %v1126
        %v1943 = vunpack.c.l.b16 %v1127
        %v1944 = vunpack.c.h.b16 %v1127
        %v1945 = vunpack.c.l.b16 %v1128
        %v1946 = vunpack.c.h.b16 %v1128
        %v1947 = vunpack.c.l.b16 %v1129
        %v1948 = vunpack.c.h.b16 %v1129
        %v1949 = vunpack.c.l.b16 %v1130
        %v1950 = vunpack.c.h.b16 %v1130
        %v1951 = vunpack.c.l.b16 %v1131
        %v1952 = vunpack.c.h.b16 %v1131
        %v1953 = vunpack.c.l.b16 %v1132
        %v1954 = vunpack.c.h.b16 %v1132
        %v1955 = vunpack.c.l.b16 %v1133
        %v1956 = vunpack.c.h.b16 %v1133
        %v1957 = vunpack.c.l.b16 %v1134
        %v1958 = vunpack.c.h.b16 %v1134
        %v1959 = vunpack.c.l.b16 %v1135
        %v1960 = vunpack.c.h.b16 %v1135
        %v1961 = vunpack.c.l.b16 %v1136
        %v1962 = vunpack.c.h.b16 %v1136
        %v1963 = vunpack.c.l.b16 %v1137
        %v1964 = vunpack.c.h.b16 %v1137
        %v1965 = vunpack.c.l.b16 %v1138
        %v1966 = vunpack.c.h.b16 %v1138
        %v1967 = vunpack.c.l.b16 %v1139
        %v1968 = vunpack.c.h.b16 %v1139
        %v1969 = vunpack.c.l.b16 %v1140
        %v1970 = vunpack.c.h.b16 %v1140
        %v1971 = vunpack.c.l.b16 %v1141
        %v1972 = vunpack.c.h.b16 %v1141
        %v1973 = vunpack.c.l.b16 %v1142
        %v1974 = vunpack.c.h.b16 %v1142
        %v1975 = vunpack.c.l.b16 %v1143
        %v1976 = vunpack.c.h.b16 %v1143
        %v1977 = vunpack.c.l.b16 %v1144
        %v1978 = vunpack.c.h.b16 %v1144
        %v1979 = vunpack.c.l.b16 %v1145
        %v1980 = vunpack.c.h.b16 %v1145
        %v1981 = vunpack.c.l.b16 %v1146
        %v1982 = vunpack.c.h.b16 %v1146
        %v1983 = vunpack.c.l.b16 %v1147
        %v1984 = vunpack.c.h.b16 %v1147
        %v1985 = vunpack.c.l.b16 %v1148
        %v1986 = vunpack.c.h.b16 %v1148
        %v1987 = vunpack.c.l.b16 %v1149
        %v1988 = vunpack.c.h.b16 %v1149
        %v1989 = vunpack.c.l.b16 %v1150
        %v1990 = vunpack.c.h.b16 %v1150
        %v1991 = vunpack.c.l.b16 %v1151
        %v1992 = vunpack.c.h.b16 %v1151
        %v1993 = vunpack.c.l.b16 %v1152
        %v1994 = vunpack.c.h.b16 %v1152
        %v1995 = vunpack.c.l.b16 %v1153
        %v1996 = vunpack.c.h.b16 %v1153
        %v1997 = vunpack.c.l.b16 %v1154
        %v1998 = vunpack.c.h.b16 %v1154
        %v1999 = vunpack.c.l.b16 %v1155
        %v2000 = vunpack.c.h.b16 %v1155
        %v2001 = vunpack.c.l.b16 %v1156
        %v2002 = vunpack.c.h.b16 %v1156
        %v2003 = vunpack.c.l.b16 %v1157
        %v2004 = vunpack.c.h.b16 %v1157
        %v2005 = vunpack.c.l.b16 %v1158
        %v2006 = vunpack.c.h.b16 %v1158
        %v2007 = vunpack.c.l.b16 %v1159
        %v2008 = vunpack.c.h.b16 %v1159
        %v2009 = vunpack.c.l.b16 %v1160
        %v2010 = vunpack.c.h.b16 %v1160
        %v2011 = vunpack.c.l.b16 %v1161
        %v2012 = vunpack.c.h.b16 %v1161
        %v2013 = vunpack.c.l.b16 %v1162
        %v2014 = vunpack.c.h.b16 %v1162
        %v2015 = vunpack.c.l.b16 %v1163
        %v2016 = vunpack.c.h.b16 %v1163
        %v2017 = vunpack.c.l.b16 %v1164
        %v2018 = vunpack.c.h.b16 %v1164
        %v2019 = vunpack.c.l.b16 %v1165
        %v2020 = vunpack.c.h.b16 %v1165
        %v2021 = vunpack.c.l.b16 %v1166
        %v2022 = vunpack.c.h.b16 %v1166
        %v2023 = vunpack.c.l.b16 %v1167
        %v2024 = vunpack.c.h.b16 %v1167
        %v2025 = vunpack.c.l.b16 %v1168
        %v2026 = vunpack.c.h.b16 %v1168
        %v2027 = vunpack.c.l.b16 %v1169
        %v2028 = vunpack.c.h.b16 %v1169
        %v2029 = vunpack.c.l.b16 %v1170
        %v2030 = vunpack.c.h.b16 %v1170
        %v2031 = vunpack.c.l.b16 %v1171
        %v2032 = vunpack.c.h.b16 %v1171
        %v2033 = vunpack.c.l.b16 %v1172
        %v2034 = vunpack.c.h.b16 %v1172
        %v2035 = vunpack.c.l.b16 %v1173
        %v2036 = vunpack.c.h.b16 %v1173
        %v2037 = vunpack.c.l.b16 %v1174
        %v2038 = vunpack.c.h.b16 %v1174
        %v2039 = vunpack.c.l.b16 %v1175
        %v2040 = vunpack.c.h.b16 %v1175
        %v2041 = vunpack.c.l.b16 %v1176
        %v2042 = vunpack.c.h.b16 %v1176
        %v2043 = vunpack.c.l.b16 %v1177
        %v2044 = vunpack.c.h.b16 %v1177
        %v2045 = vunpack.c.l.b16 %v1178
        %v2046 = vunpack.c.h.b16 %v1178
        %v2047 = vunpack.c.l.b16 %v1179
        %v2048 = vunpack.c.h.b16 %v1179
        %v2049 = vunpack.c.l.b16 %v1180
        %v2050 = vunpack.c.h.b16 %v1180
        %v2051 = vunpack.c.l.b16 %v1181
        %v2052 = vunpack.c.h.b16 %v1181
        %v2053 = vunpack.c.l.b16 %v1182
        %v2054 = vunpack.c.h.b16 %v1182
        %v2055 = vunpack.c.l.b16 %v1183
        %v2056 = vunpack.c.h.b16 %v1183
        %v2057 = vunpack.c.l.b16 %v1184
        %v2058 = vunpack.c.h.b16 %v1184
        %v2059 = vunpack.c.l.b16 %v1185
        %v2060 = vunpack.c.h.b16 %v1185
        %v2061 = vunpack.c.l.b16 %v1186
        %v2062 = vunpack.c.h.b16 %v1186
        %v2063 = vunpack.c.l.b16 %v1187
        %v2064 = vunpack.c.h.b16 %v1187
        %v2065 = vunpack.c.l.b16 %v1188
        %v2066 = vunpack.c.h.b16 %v1188
        %v2067 = vunpack.c.l.b16 %v1189
        %v2068 = vunpack.c.h.b16 %v1189
        %v2069 = vunpack.c.l.b16 %v1190
        %v2070 = vunpack.c.h.b16 %v1190
        %v2071 = vunpack.c.l.b16 %v1191
        %v2072 = vunpack.c.h.b16 %v1191
        %v2073 = vunpack.c.l.b16 %v1192
        %v2074 = vunpack.c.h.b16 %v1192
        %v2075 = vunpack.c.l.b16 %v1193
        %v2076 = vunpack.c.h.b16 %v1193
        %v2077 = vunpack.c.l.b16 %v1194
        %v2078 = vunpack.c.h.b16 %v1194
        %v2079 = vunpack.c.l.b16 %v1195
        %v2080 = vunpack.c.h.b16 %v1195
        %v2081 = vunpack.c.l.b16 %v1196
        %v2082 = vunpack.c.h.b16 %v1196
        %v2083 = vunpack.c.l.b16 %v1197
        %v2084 = vunpack.c.h.b16 %v1197
        %v2085 = vunpack.c.l.b16 %v1198
        %v2086 = vunpack.c.h.b16 %v1198
        %v2087 = vunpack.c.l.b16 %v1199
        %v2088 = vunpack.c.h.b16 %v1199
        %v2089 = vunpack.c.l.b16 %v1200
        %v2090 = vunpack.c.h.b16 %v1200
        %v2091 = vunpack.c.l.b16 %v1201
        %v2092 = vunpack.c.h.b16 %v1201
        %v2093 = vunpack.c.l.b16 %v1202
        %v2094 = vunpack.c.h.b16 %v1202
        %v2095 = vunpack.c.l.b16 %v1203
        %v2096 = vunpack.c.h.b16 %v1203
        %v2097 = vunpack.c.l.b16 %v1204
        %v2098 = vunpack.c.h.b16 %v1204
        %v2099 = vunpack.c.l.b16 %v1205
        %v2100 = vunpack.c.h.b16 %v1205
        %v2101 = vunpack.c.l.b16 %v1206
        %v2102 = vunpack.c.h.b16 %v1206
        %v2103 = vpack.c.b16 %v1533, %v1527
        %v2104 = vpack.c.b16 %v1534, %v1528
        %v2105 = vpack.c.b16 %v1535, %v1529
        %v2106 = vpack.c.b16 %v1536, %v1530
        %v2107 = vpack.c.b16 %v1537, %v1531
        %v2108 = vpack.c.b16 %v1538, %v1532
        %v2109 = vpack.c.b16 %v1545, %v1539
        %v2110 = vpack.c.b16 %v1546, %v1540
        %v2111 = vpack.c.b16 %v1547, %v1541
        %v2112 = vpack.c.b16 %v1548, %v1542
        %v2113 = vpack.c.b16 %v1549, %v1543
        %v2114 = vpack.c.b16 %v1550, %v1544
        %v2115 = vpack.c.b16 %v1557, %v1551
        %v2116 = vpack.c.b16 %v1558, %v1552
        %v2117 = vpack.c.b16 %v1559, %v1553
        %v2118 = vpack.c.b16 %v1560, %v1554
        %v2119 = vpack.c.b16 %v1561, %v1555
        %v2120 = vpack.c.b16 %v1562, %v1556
        %v2121 = vpack.c.b16 %v1569, %v1563
        %v2122 = vpack.c.b16 %v1570, %v1564
        %v2123 = vpack.c.b16 %v1571, %v1565
        %v2124 = vpack.c.b16 %v1572, %v1566
        %v2125 = vpack.c.b16 %v1573, %v1567
        %v2126 = vpack.c.b16 %v1574, %v1568
        %v2127 = vpack.c.b16 %v1581, %v1575
        %v2128 = vpack.c.b16 %v1582, %v1576
        %v2129 = vpack.c.b16 %v1583, %v1577
        %v2130 = vpack.c.b16 %v1584, %v1578
        %v2131 = vpack.c.b16 %v1585, %v1579
        %v2132 = vpack.c.b16 %v1586, %v1580
        %v2133 = vpack.c.b16 %v1593, %v1587
        %v2134 = vpack.c.b16 %v1594, %v1588
        %v2135 = vpack.c.b16 %v1595, %v1589
        %v2136 = vpack.c.b16 %v1596, %v1590
        %v2137 = vpack.c.b16 %v1597, %v1591
        %v2138 = vpack.c.b16 %v1598, %v1592
        %v2139 = vpack.c.b16 %v1605, %v1599
        %v2140 = vpack.c.b16 %v1606, %v1600
        %v2141 = vpack.c.b16 %v1607, %v1601
        %v2142 = vpack.c.b16 %v1608, %v1602
        %v2143 = vpack.c.b16 %v1609, %v1603
        %v2144 = vpack.c.b16 %v1610, %v1604
        %v2145 = vpack.c.b16 %v1617, %v1611
        %v2146 = vpack.c.b16 %v1618, %v1612
        %v2147 = vpack.c.b16 %v1619, %v1613
        %v2148 = vpack.c.b16 %v1620, %v1614
        %v2149 = vpack.c.b16 %v1621, %v1615
        %v2150 = vpack.c.b16 %v1622, %v1616
        %v2151 = vpack.c.b16 %v1629, %v1623
        %v2152 = vpack.c.b16 %v1630, %v1624
        %v2153 = vpack.c.b16 %v1631, %v1625
        %v2154 = vpack.c.b16 %v1632, %v1626
        %v2155 = vpack.c.b16 %v1633, %v1627
        %v2156 = vpack.c.b16 %v1634, %v1628
        %v2157 = vpack.c.b16 %v1641, %v1635
        %v2158 = vpack.c.b16 %v1642, %v1636
        %v2159 = vpack.c.b16 %v1643, %v1637
        %v2160 = vpack.c.b16 %v1644, %v1638
        %v2161 = vpack.c.b16 %v1645, %v1639
        %v2162 = vpack.c.b16 %v1646, %v1640
        %v2163 = vpack.c.b16 %v1653, %v1647
        %v2164 = vpack.c.b16 %v1654, %v1648
        %v2165 = vpack.c.b16 %v1655, %v1649
        %v2166 = vpack.c.b16 %v1656, %v1650
        %v2167 = vpack.c.b16 %v1657, %v1651
        %v2168 = vpack.c.b16 %v1658, %v1652
        %v2169 = vpack.c.b16 %v1665, %v1659
        %v2170 = vpack.c.b16 %v1666, %v1660
        %v2171 = vpack.c.b16 %v1667, %v1661
        %v2172 = vpack.c.b16 %v1668, %v1662
        %v2173 = vpack.c.b16 %v1669, %v1663
        %v2174 = vpack.c.b16 %v1670, %v1664
        %v2175 = vpack.c.b16 %v1677, %v1671
        %v2176 = vpack.c.b16 %v1678, %v1672
        %v2177 = vpack.c.b16 %v1679, %v1673
        %v2178 = vpack.c.b16 %v1680, %v1674
        %v2179 = vpack.c.b16 %v1681, %v1675
        %v2180 = vpack.c.b16 %v1682, %v1676
        %v2181 = vpack.c.b16 %v1689, %v1683
        %v2182 = vpack.c.b16 %v1690, %v1684
        %v2183 = vpack.c.b16 %v1691, %v1685
        %v2184 = vpack.c.b16 %v1692, %v1686
        %v2185 = vpack.c.b16 %v1693, %v1687
        %v2186 = vpack.c.b16 %v1694, %v1688
        %v2187 = vpack.c.b16 %v1701, %v1695
        %v2188 = vpack.c.b16 %v1702, %v1696
        %v2189 = vpack.c.b16 %v1703, %v1697
        %v2190 = vpack.c.b16 %v1704, %v1698
        %v2191 = vpack.c.b16 %v1705, %v1699
        %v2192 = vpack.c.b16 %v1706, %v1700
        %v2193 = vpack.c.b16 %v1713, %v1707
        %v2194 = vpack.c.b16 %v1714, %v1708
        %v2195 = vpack.c.b16 %v1715, %v1709
        %v2196 = vpack.c.b16 %v1716, %v1710
        %v2197 = vpack.c.b16 %v1717, %v1711
        %v2198 = vpack.c.b16 %v1718, %v1712
        %v2199 = vpack.c.b16 %v1725, %v1719
        %v2200 = vpack.c.b16 %v1726, %v1720
        %v2201 = vpack.c.b16 %v1727, %v1721
        %v2202 = vpack.c.b16 %v1728, %v1722
        %v2203 = vpack.c.b16 %v1729, %v1723
        %v2204 = vpack.c.b16 %v1730, %v1724
        %v2205 = vpack.c.b16 %v1737, %v1731
        %v2206 = vpack.c.b16 %v1738, %v1732
        %v2207 = vpack.c.b16 %v1739, %v1733
        %v2208 = vpack.c.b16 %v1740, %v1734
        %v2209 = vpack.c.b16 %v1741, %v1735
        %v2210 = vpack.c.b16 %v1742, %v1736
        %v2211 = vpack.c.b16 %v1749, %v1743
        %v2212 = vpack.c.b16 %v1750, %v1744
        %v2213 = vpack.c.b16 %v1751, %v1745
        %v2214 = vpack.c.b16 %v1752, %v1746
        %v2215 = vpack.c.b16 %v1753, %v1747
        %v2216 = vpack.c.b16 %v1754, %v1748
        %v2217 = vpack.c.b16 %v1761, %v1755
        %v2218 = vpack.c.b16 %v1762, %v1756
        %v2219 = vpack.c.b16 %v1763, %v1757
        %v2220 = vpack.c.b16 %v1764, %v1758
        %v2221 = vpack.c.b16 %v1765, %v1759
        %v2222 = vpack.c.b16 %v1766, %v1760
        %v2223 = vpack.c.b16 %v1773, %v1767
        %v2224 = vpack.c.b16 %v1774, %v1768
        %v2225 = vpack.c.b16 %v1775, %v1769
        %v2226 = vpack.c.b16 %v1776, %v1770
        %v2227 = vpack.c.b16 %v1777, %v1771
        %v2228 = vpack.c.b16 %v1778, %v1772
        %v2229 = vpack.c.b16 %v1785, %v1779
        %v2230 = vpack.c.b16 %v1786, %v1780
        %v2231 = vpack.c.b16 %v1787, %v1781
        %v2232 = vpack.c.b16 %v1788, %v1782
        %v2233 = vpack.c.b16 %v1789, %v1783
        %v2234 = vpack.c.b16 %v1790, %v1784
        %v2235 = vpack.c.b16 %v1797, %v1791
        %v2236 = vpack.c.b16 %v1798, %v1792
        %v2237 = vpack.c.b16 %v1799, %v1793
        %v2238 = vpack.c.b16 %v1800, %v1794
        %v2239 = vpack.c.b16 %v1801, %v1795
        %v2240 = vpack.c.b16 %v1802, %v1796
        %v2241 = vpack.c.b16 %v1809, %v1803
        %v2242 = vpack.c.b16 %v1810, %v1804
        %v2243 = vpack.c.b16 %v1811, %v1805
        %v2244 = vpack.c.b16 %v1812, %v1806
        %v2245 = vpack.c.b16 %v1813, %v1807
        %v2246 = vpack.c.b16 %v1814, %v1808
        %v2247 = vpack.c.b16 %v1821, %v1815
        %v2248 = vpack.c.b16 %v1822, %v1816
        %v2249 = vpack.c.b16 %v1823, %v1817
        %v2250 = vpack.c.b16 %v1824, %v1818
        %v2251 = vpack.c.b16 %v1825, %v1819
        %v2252 = vpack.c.b16 %v1826, %v1820
        %v2253 = vpack.c.b16 %v1833, %v1827
        %v2254 = vpack.c.b16 %v1834, %v1828
        %v2255 = vpack.c.b16 %v1835, %v1829
        %v2256 = vpack.c.b16 %v1836, %v1830
        %v2257 = vpack.c.b16 %v1837, %v1831
        %v2258 = vpack.c.b16 %v1838, %v1832
        %v2259 = vpack.c.b16 %v1845, %v1839
        %v2260 = vpack.c.b16 %v1846, %v1840
        %v2261 = vpack.c.b16 %v1847, %v1841
        %v2262 = vpack.c.b16 %v1848, %v1842
        %v2263 = vpack.c.b16 %v1849, %v1843
        %v2264 = vpack.c.b16 %v1850, %v1844
        %v2265 = vpack.c.b16 %v1857, %v1851
        %v2266 = vpack.c.b16 %v1858, %v1852
        %v2267 = vpack.c.b16 %v1859, %v1853
        %v2268 = vpack.c.b16 %v1860, %v1854
        %v2269 = vpack.c.b16 %v1861, %v1855
        %v2270 = vpack.c.b16 %v1862, %v1856
        %v2271 = vpack.c.b16 %v1869, %v1863
        %v2272 = vpack.c.b16 %v1870, %v1864
        %v2273 = vpack.c.b16 %v1871, %v1865
        %v2274 = vpack.c.b16 %v1872, %v1866
        %v2275 = vpack.c.b16 %v1873, %v1867
        %v2276 = vpack.c.b16 %v1874, %v1868
        %v2277 = vpack.c.b16 %v1881, %v1875
        %v2278 = vpack.c.b16 %v1882, %v1876
        %v2279 = vpack.c.b16 %v1883, %v1877
        %v2280 = vpack.c.b16 %v1884, %v1878
        %v2281 = vpack.c.b16 %v1885, %v1879
        %v2282 = vpack.c.b16 %v1886, %v1880
        %v2283 = vpack.c.b16 %v1893, %v1887
        %v2284 = vpack.c.b16 %v1894, %v1888
        %v2285 = vpack.c.b16 %v1895, %v1889
        %v2286 = vpack.c.b16 %v1896, %v1890
        %v2287 = vpack.c.b16 %v1897, %v1891
        %v2288 = vpack.c.b16 %v1898, %v1892
        %v2289 = vpack.c.b16 %v1905, %v1899
        %v2290 = vpack.c.b16 %v1906, %v1900
        %v2291 = vpack.c.b16 %v1907, %v1901
        %v2292 = vpack.c.b16 %v1908, %v1902
        %v2293 = vpack.c.b16 %v1909, %v1903
        %v2294 = vpack.c.b16 %v1910, %v1904
        %v2295 = vpack.c.b16 %v1917, %v1911
        %v2296 = vpack.c.b16 %v1918, %v1912
        %v2297 = vpack.c.b16 %v1919, %v1913
        %v2298 = vpack.c.b16 %v1920, %v1914
        %v2299 = vpack.c.b16 %v1921, %v1915
        %v2300 = vpack.c.b16 %v1922, %v1916
        %v2301 = vpack.c.b16 %v1929, %v1923
        %v2302 = vpack.c.b16 %v1930, %v1924
        %v2303 = vpack.c.b16 %v1931, %v1925
        %v2304 = vpack.c.b16 %v1932, %v1926
        %v2305 = vpack.c.b16 %v1933, %v1927
        %v2306 = vpack.c.b16 %v1934, %v1928
        %v2307 = vpack.c.b16 %v1941, %v1935
        %v2308 = vpack.c.b16 %v1942, %v1936
        %v2309 = vpack.c.b16 %v1943, %v1937
        %v2310 = vpack.c.b16 %v1944, %v1938
        %v2311 = vpack.c.b16 %v1945, %v1939
        %v2312 = vpack.c.b16 %v1946, %v1940
        %v2313 = vpack.c.b16 %v1953, %v1947
        %v2314 = vpack.c.b16 %v1954, %v1948
        %v2315 = vpack.c.b16 %v1955, %v1949
        %v2316 = vpack.c.b16 %v1956, %v1950
        %v2317 = vpack.c.b16 %v1957, %v1951
        %v2318 = vpack.c.b16 %v1958, %v1952
        %v2319 = vpack.c.b16 %v1965, %v1959
        %v2320 = vpack.c.b16 %v1966, %v1960
        %v2321 = vpack.c.b16 %v1967, %v1961
        %v2322 = vpack.c.b16 %v1968, %v1962
        %v2323 = vpack.c.b16 %v1969, %v1963
        %v2324 = vpack.c.b16 %v1970, %v1964
        %v2325 = vpack.c.b16 %v1977, %v1971
        %v2326 = vpack.c.b16 %v1978, %v1972
        %v2327 = vpack.c.b16 %v1979, %v1973
        %v2328 = vpack.c.b16 %v1980, %v1974
        %v2329 = vpack.c.b16 %v1981, %v1975
        %v2330 = vpack.c.b16 %v1982, %v1976
        %v2331 = vpack.c.b16 %v1989, %v1983
        %v2332 = vpack.c.b16 %v1990, %v1984
        %v2333 = vpack.c.b16 %v1991, %v1985
        %v2334 = vpack.c.b16 %v1992, %v1986
        %v2335 = vpack.c.b16 %v1993, %v1987
        %v2336 = vpack.c.b16 %v1994, %v1988
        %v2337 = vpack.c.b16 %v2001, %v1995
        %v2338 = vpack.c.b16 %v2002, %v1996
        %v2339 = vpack.c.b16 %v2003, %v1997
        %v2340 = vpack.c.b16 %v2004, %v1998
        %v2341 = vpack.c.b16 %v2005, %v1999
        %v2342 = vpack.c.b16 %v2006, %v2000
        %v2343 = vpack.c.b16 %v2013, %v2007
        %v2344 = vpack.c.b16 %v2014, %v2008
        %v2345 = vpack.c.b16 %v2015, %v2009
        %v2346 = vpack.c.b16 %v2016, %v2010
        %v2347 = vpack.c.b16 %v2017, %v2011
        %v2348 = vpack.c.b16 %v2018, %v2012
        %v2349 = vpack.c.b16 %v2025, %v2019
        %v2350 = vpack.c.b16 %v2026, %v2020
        %v2351 = vpack.c.b16 %v2027, %v2021
        %v2352 = vpack.c.b16 %v2028, %v2022
        %v2353 = vpack.c.b16 %v2029, %v2023
        %v2354 = vpack.c.b16 %v2030, %v2024
        %v2355 = vpack.c.b16 %v2037, %v2031
        %v2356 = vpack.c.b16 %v2038, %v2032
        %v2357 = vpack.c.b16 %v2039, %v2033
        %v2358 = vpack.c.b16 %v2040, %v2034
        %v2359 = vpack.c.b16 %v2041, %v2035
        %v2360 = vpack.c.b16 %v2042, %v2036
        %v2361 = vpack.c.b16 %v2049, %v2043
        %v2362 = vpack.c.b16 %v2050, %v2044
        %v2363 = vpack.c.b16 %v2051, %v2045
        %v2364 = vpack.c.b16 %v2052, %v2046
        %v2365 = vpack.c.b16 %v2053, %v2047
        %v2366 = vpack.c.b16 %v2054, %v2048
        %v2367 = vpack.c.b16 %v2061, %v2055
        %v2368 = vpack.c.b16 %v2062, %v2056
        %v2369 = vpack.c.b16 %v2063, %v2057
        %v2370 = vpack.c.b16 %v2064, %v2058
        %v2371 = vpack.c.b16 %v2065, %v2059
        %v2372 = vpack.c.b16 %v2066, %v2060
        %v2373 = vpack.c.b16 %v2073, %v2067
        %v2374 = vpack.c.b16 %v2074, %v2068
        %v2375 = vpack.c.b16 %v2075, %v2069
        %v2376 = vpack.c.b16 %v2076, %v2070
        %v2377 = vpack.c.b16 %v2077, %v2071
        %v2378 = vpack.c.b16 %v2078, %v2072
        %v2379 = vpack.c.b16 %v2085, %v2079
        %v2380 = vpack.c.b16 %v2086, %v2080
        %v2381 = vpack.c.b16 %v2087, %v2081
        %v2382 = vpack.c.b16 %v2088, %v2082
        %v2383 = vpack.c.b16 %v2089, %v2083
        %v2384 = vpack.c.b16 %v2090, %v2084
        %v2385 = vpack.c.b16 %v2097, %v2091
        %v2386 = vpack.c.b16 %v2098, %v2092
        %v2387 = vpack.c.b16 %v2099, %v2093
        %v2388 = vpack.c.b16 %v2100, %v2094
        %v2389 = vpack.c.b16 %v2101, %v2095
        %v2390 = vpack.c.b16 %v2102, %v2096
        %2679 = vmatprep.subr.bf16.mxu0 %v2104
        %2680 = vmatpush1.bf16.msra.mxu0 %v2103
        %2681 = vmatprep.subr.bf16.mxu0 %v2110
        %2682 = vmatpush1.bf16.msra.mxu0 %v2109
        %2683 = vmatprep.subr.bf16.mxu0 %v2116
        %2684 = vmatpush1.bf16.msra.mxu0 %v2115
        %2685 = vmatprep.subr.bf16.mxu0 %v2122
        %2686 = vmatpush1.bf16.msra.mxu0 %v2121
        %2687 = vmatprep.subr.bf16.mxu0 %v2128
        %2688 = vmatpush1.bf16.msra.mxu0 %v2127
        %2689 = vmatprep.subr.bf16.mxu0 %v2134
        %2690 = vmatpush1.bf16.msra.mxu0 %v2133
        %2691 = vmatprep.subr.bf16.mxu0 %v2140
        %2692 = vmatpush1.bf16.msra.mxu0 %v2139
        %2693 = vmatprep.subr.bf16.mxu0 %v2146
        %2694 = vmatpush1.bf16.msra.mxu0 %v2145
        %2695 = vmatprep.subr.bf16.mxu0 %v2152
        %2696 = vmatpush1.bf16.msra.mxu0 %v2151
        %2697 = vmatprep.subr.bf16.mxu0 %v2158
        %2698 = vmatpush1.bf16.msra.mxu0 %v2157
        %2699 = vmatprep.subr.bf16.mxu0 %v2164
        %2700 = vmatpush1.bf16.msra.mxu0 %v2163
        %2701 = vmatprep.subr.bf16.mxu0 %v2170
        %2702 = vmatpush1.bf16.msra.mxu0 %v2169
        %2703 = vmatprep.subr.bf16.mxu0 %v2176
        %2704 = vmatpush1.bf16.msra.mxu0 %v2175
        %2705 = vmatprep.subr.bf16.mxu0 %v2182
        %2706 = vmatpush1.bf16.msra.mxu0 %v2181
        %2707 = vmatprep.subr.bf16.mxu0 %v2188
        %2708 = vmatpush1.bf16.msra.mxu0 %v2187
        %2709 = vmatprep.subr.bf16.mxu0 %v2194
        %2710 = vmatpush1.bf16.msra.mxu0 %v2193
        %2711 = vmatprep.mubr.bf16.mxu0 %v914
        %2712 = vmatmul.mubr.bf16.gmra.mrb[0].mxu0 %v913
        %v2713 = vpop.f32.mrb[0].mxu0
        %v2714 = vadd.f32 %v1212, %v2713
        %v2715 = vpop.f32.mrb[0].mxu0
        %v2716 = vadd.f32 %v1216, %v2715
        %v2717 = vpop.f32.mrb[0].mxu0
        %v2718 = vpop.f32.mrb[0].mxu0
        %2719 = vdwg.mxu0
        %2720 = vmatprep.subr.bf16.mxu0 %v2200
        %2721 = vmatpush1.bf16.msra.mxu0 %v2199
        %2722 = vmatprep.subr.bf16.mxu0 %v2206
        %2723 = vmatpush1.bf16.msra.mxu0 %v2205
        %2724 = vmatprep.subr.bf16.mxu0 %v2212
        %2725 = vmatpush1.bf16.msra.mxu0 %v2211
        %2726 = vmatprep.subr.bf16.mxu0 %v2218
        %2727 = vmatpush1.bf16.msra.mxu0 %v2217
        %2728 = vmatprep.subr.bf16.mxu0 %v2224
        %2729 = vmatpush1.bf16.msra.mxu0 %v2223
        %2730 = vmatprep.subr.bf16.mxu0 %v2230
        %2731 = vmatpush1.bf16.msra.mxu0 %v2229
        %2732 = vmatprep.subr.bf16.mxu0 %v2236
        %2733 = vmatpush1.bf16.msra.mxu0 %v2235
        %2734 = vmatprep.subr.bf16.mxu0 %v2242
        %2735 = vmatpush1.bf16.msra.mxu0 %v2241
        %2736 = vmatprep.subr.bf16.mxu0 %v2248
        %2737 = vmatpush1.bf16.msra.mxu0 %v2247
        %2738 = vmatprep.subr.bf16.mxu0 %v2254
        %2739 = vmatpush1.bf16.msra.mxu0 %v2253
        %2740 = vmatprep.subr.bf16.mxu0 %v2260
        %2741 = vmatpush1.bf16.msra.mxu0 %v2259
        %2742 = vmatprep.subr.bf16.mxu0 %v2266
        %2743 = vmatpush1.bf16.msra.mxu0 %v2265
        %2744 = vmatprep.subr.bf16.mxu0 %v2272
        %2745 = vmatpush1.bf16.msra.mxu0 %v2271
        %2746 = vmatprep.subr.bf16.mxu0 %v2278
        %2747 = vmatpush1.bf16.msra.mxu0 %v2277
        %2748 = vmatprep.subr.bf16.mxu0 %v2284
        %2749 = vmatpush1.bf16.msra.mxu0 %v2283
        %2750 = vmatprep.subr.bf16.mxu0 %v2290
        %2751 = vmatpush1.bf16.msra.mxu0 %v2289
        %2752 = vmatprep.mubr.bf16.mxu0 %v916
        %2753 = vmatmul.mubr.bf16.gmra.mrb[0].mxu0 %v915
        %v2754 = vpop.f32.mrb[0].mxu0
        %v2755 = vadd.f32 %v2714, %v2754
        %v2756 = vpop.f32.mrb[0].mxu0
        %v2757 = vadd.f32 %v2716, %v2756
        %v2758 = vpop.f32.mrb[0].mxu0
        %v2759 = vpop.f32.mrb[0].mxu0
        %2760 = vdwg.mxu0
        %2761 = vmatprep.subr.bf16.mxu0 %v2296
        %2762 = vmatpush1.bf16.msra.mxu0 %v2295
        %2763 = vmatprep.subr.bf16.mxu0 %v2302
        %2764 = vmatpush1.bf16.msra.mxu0 %v2301
        %2765 = vmatprep.subr.bf16.mxu0 %v2308
        %2766 = vmatpush1.bf16.msra.mxu0 %v2307
        %2767 = vmatprep.subr.bf16.mxu0 %v2314
        %2768 = vmatpush1.bf16.msra.mxu0 %v2313
        %2769 = vmatprep.subr.bf16.mxu0 %v2320
        %2770 = vmatpush1.bf16.msra.mxu0 %v2319
        %2771 = vmatprep.subr.bf16.mxu0 %v2326
        %2772 = vmatpush1.bf16.msra.mxu0 %v2325
        %2773 = vmatprep.subr.bf16.mxu0 %v2332
        %2774 = vmatpush1.bf16.msra.mxu0 %v2331
        %2775 = vmatprep.subr.bf16.mxu0 %v2338
        %2776 = vmatpush1.bf16.msra.mxu0 %v2337
        %2777 = vmatprep.subr.bf16.mxu0 %v2344
        %2778 = vmatpush1.bf16.msra.mxu0 %v2343
        %2779 = vmatprep.subr.bf16.mxu0 %v2350
        %2780 = vmatpush1.bf16.msra.mxu0 %v2349
        %2781 = vmatprep.subr.bf16.mxu0 %v2356
        %2782 = vmatpush1.bf16.msra.mxu0 %v2355
        %2783 = vmatprep.subr.bf16.mxu0 %v2362
        %2784 = vmatpush1.bf16.msra.mxu0 %v2361
        %2785 = vmatprep.subr.bf16.mxu0 %v2368
        %2786 = vmatpush1.bf16.msra.mxu0 %v2367
        %2787 = vmatprep.subr.bf16.mxu0 %v2374
        %2788 = vmatpush1.bf16.msra.mxu0 %v2373
        %2789 = vmatprep.subr.bf16.mxu0 %v2380
        %2790 = vmatpush1.bf16.msra.mxu0 %v2379
        %2791 = vmatprep.subr.bf16.mxu0 %v2386
        %2792 = vmatpush1.bf16.msra.mxu0 %v2385
        %2793 = vmatprep.mubr.bf16.mxu0 %v918
        %2794 = vmatmul.mubr.bf16.gmra.mrb[0].mxu0 %v917
        %v2795 = vpop.f32.mrb[0].mxu0
        %v2796 = vadd.f32 %v2755, %v2795
        %v2797 = vpop.f32.mrb[0].mxu0
        %v2798 = vadd.f32 %v2757, %v2797
        %v2799 = vpop.f32.mrb[0].mxu0
        %v2800 = vpop.f32.mrb[0].mxu0
        %2801 = vdwg.mxu0
        %2802 = vmatprep.subr.bf16.mxu0 %v2106
        %2803 = vmatpush1.bf16.msra.mxu0 %v2105
        %2804 = vmatprep.subr.bf16.mxu0 %v2112
        %2805 = vmatpush1.bf16.msra.mxu0 %v2111
        %2806 = vmatprep.subr.bf16.mxu0 %v2118
        %2807 = vmatpush1.bf16.msra.mxu0 %v2117
        %2808 = vmatprep.subr.bf16.mxu0 %v2124
        %2809 = vmatpush1.bf16.msra.mxu0 %v2123
        %2810 = vmatprep.subr.bf16.mxu0 %v2130
        %2811 = vmatpush1.bf16.msra.mxu0 %v2129
        %2812 = vmatprep.subr.bf16.mxu0 %v2136
        %2813 = vmatpush1.bf16.msra.mxu0 %v2135
        %2814 = vmatprep.subr.bf16.mxu0 %v2142
        %2815 = vmatpush1.bf16.msra.mxu0 %v2141
        %2816 = vmatprep.subr.bf16.mxu0 %v2148
        %2817 = vmatpush1.bf16.msra.mxu0 %v2147
        %2818 = vmatprep.subr.bf16.mxu0 %v2154
        %2819 = vmatpush1.bf16.msra.mxu0 %v2153
        %2820 = vmatprep.subr.bf16.mxu0 %v2160
        %2821 = vmatpush1.bf16.msra.mxu0 %v2159
        %2822 = vmatprep.subr.bf16.mxu0 %v2166
        %2823 = vmatpush1.bf16.msra.mxu0 %v2165
        %2824 = vmatprep.subr.bf16.mxu0 %v2172
        %2825 = vmatpush1.bf16.msra.mxu0 %v2171
        %2826 = vmatprep.subr.bf16.mxu0 %v2178
        %2827 = vmatpush1.bf16.msra.mxu0 %v2177
        %2828 = vmatprep.subr.bf16.mxu0 %v2184
        %2829 = vmatpush1.bf16.msra.mxu0 %v2183
        %2830 = vmatprep.subr.bf16.mxu0 %v2190
        %2831 = vmatpush1.bf16.msra.mxu0 %v2189
        %2832 = vmatprep.subr.bf16.mxu0 %v2196
        %2833 = vmatpush1.bf16.msra.mxu0 %v2195
        %2834 = vmatprep.mubr.bf16.mxu0 %v914
        %2835 = vmatmul.mubr.bf16.gmra.mrb[0].mxu0 %v913
        %v2836 = vpop.f32.mrb[0].mxu0
        %v2837 = vadd.f32 %v1220, %v2836
        %v2838 = vpop.f32.mrb[0].mxu0
        %v2839 = vadd.f32 %v1224, %v2838
        %v2840 = vpop.f32.mrb[0].mxu0
        %v2841 = vpop.f32.mrb[0].mxu0
        %2842 = vdwg.mxu0
        %2843 = vmatprep.subr.bf16.mxu0 %v2202
        %2844 = vmatpush1.bf16.msra.mxu0 %v2201
        %2845 = vmatprep.subr.bf16.mxu0 %v2208
        %2846 = vmatpush1.bf16.msra.mxu0 %v2207
        %2847 = vmatprep.subr.bf16.mxu0 %v2214
        %2848 = vmatpush1.bf16.msra.mxu0 %v2213
        %2849 = vmatprep.subr.bf16.mxu0 %v2220
        %2850 = vmatpush1.bf16.msra.mxu0 %v2219
        %2851 = vmatprep.subr.bf16.mxu0 %v2226
        %2852 = vmatpush1.bf16.msra.mxu0 %v2225
        %2853 = vmatprep.subr.bf16.mxu0 %v2232
        %2854 = vmatpush1.bf16.msra.mxu0 %v2231
        %2855 = vmatprep.subr.bf16.mxu0 %v2238
        %2856 = vmatpush1.bf16.msra.mxu0 %v2237
        %2857 = vmatprep.subr.bf16.mxu0 %v2244
        %2858 = vmatpush1.bf16.msra.mxu0 %v2243
        %2859 = vmatprep.subr.bf16.mxu0 %v2250
        %2860 = vmatpush1.bf16.msra.mxu0 %v2249
        %2861 = vmatprep.subr.bf16.mxu0 %v2256
        %2862 = vmatpush1.bf16.msra.mxu0 %v2255
        %2863 = vmatprep.subr.bf16.mxu0 %v2262
        %2864 = vmatpush1.bf16.msra.mxu0 %v2261
        %2865 = vmatprep.subr.bf16.mxu0 %v2268
        %2866 = vmatpush1.bf16.msra.mxu0 %v2267
        %2867 = vmatprep.subr.bf16.mxu0 %v2274
        %2868 = vmatpush1.bf16.msra.mxu0 %v2273
        %2869 = vmatprep.subr.bf16.mxu0 %v2280
        %2870 = vmatpush1.bf16.msra.mxu0 %v2279
        %2871 = vmatprep.subr.bf16.mxu0 %v2286
        %2872 = vmatpush1.bf16.msra.mxu0 %v2285
        %2873 = vmatprep.subr.bf16.mxu0 %v2292
        %2874 = vmatpush1.bf16.msra.mxu0 %v2291
        %2875 = vmatprep.mubr.bf16.mxu0 %v916
        %2876 = vmatmul.mubr.bf16.gmra.mrb[0].mxu0 %v915
        %v2877 = vpop.f32.mrb[0].mxu0
        %v2878 = vadd.f32 %v2837, %v2877
        %v2879 = vpop.f32.mrb[0].mxu0
        %v2880 = vadd.f32 %v2839, %v2879
        %v2881 = vpop.f32.mrb[0].mxu0
        %v2882 = vpop.f32.mrb[0].mxu0
        %2883 = vdwg.mxu0
        %2884 = vmatprep.subr.bf16.mxu0 %v2298
        %2885 = vmatpush1.bf16.msra.mxu0 %v2297
        %2886 = vmatprep.subr.bf16.mxu0 %v2304
        %2887 = vmatpush1.bf16.msra.mxu0 %v2303
        %2888 = vmatprep.subr.bf16.mxu0 %v2310
        %2889 = vmatpush1.bf16.msra.mxu0 %v2309
        %2890 = vmatprep.subr.bf16.mxu0 %v2316
        %2891 = vmatpush1.bf16.msra.mxu0 %v2315
        %2892 = vmatprep.subr.bf16.mxu0 %v2322
        %2893 = vmatpush1.bf16.msra.mxu0 %v2321
        %2894 = vmatprep.subr.bf16.mxu0 %v2328
        %2895 = vmatpush1.bf16.msra.mxu0 %v2327
        %2896 = vmatprep.subr.bf16.mxu0 %v2334
        %2897 = vmatpush1.bf16.msra.mxu0 %v2333
        %2898 = vmatprep.subr.bf16.mxu0 %v2340
        %2899 = vmatpush1.bf16.msra.mxu0 %v2339
        %2900 = vmatprep.subr.bf16.mxu0 %v2346
        %2901 = vmatpush1.bf16.msra.mxu0 %v2345
        %2902 = vmatprep.subr.bf16.mxu0 %v2352
        %2903 = vmatpush1.bf16.msra.mxu0 %v2351
        %2904 = vmatprep.subr.bf16.mxu0 %v2358
        %2905 = vmatpush1.bf16.msra.mxu0 %v2357
        %2906 = vmatprep.subr.bf16.mxu0 %v2364
        %2907 = vmatpush1.bf16.msra.mxu0 %v2363
        %2908 = vmatprep.subr.bf16.mxu0 %v2370
        %2909 = vmatpush1.bf16.msra.mxu0 %v2369
        %2910 = vmatprep.subr.bf16.mxu0 %v2376
        %2911 = vmatpush1.bf16.msra.mxu0 %v2375
        %2912 = vmatprep.subr.bf16.mxu0 %v2382
        %2913 = vmatpush1.bf16.msra.mxu0 %v2381
        %2914 = vmatprep.subr.bf16.mxu0 %v2388
        %2915 = vmatpush1.bf16.msra.mxu0 %v2387
        %2916 = vmatprep.mubr.bf16.mxu0 %v918
        %2917 = vmatmul.mubr.bf16.gmra.mrb[0].mxu0 %v917
        %v2918 = vpop.f32.mrb[0].mxu0
        %v2919 = vadd.f32 %v2878, %v2918
        %v2920 = vpop.f32.mrb[0].mxu0
        %v2921 = vadd.f32 %v2880, %v2920
        %v2922 = vpop.f32.mrb[0].mxu0
        %v2923 = vpop.f32.mrb[0].mxu0
        %2924 = vdwg.mxu0
        %2925 = vmatprep.subr.bf16.mxu0 %v2108
        %2926 = vmatpush1.bf16.msra.mxu0 %v2107
        %2927 = vmatprep.subr.bf16.mxu0 %v2114
        %2928 = vmatpush1.bf16.msra.mxu0 %v2113
        %2929 = vmatprep.subr.bf16.mxu0 %v2120
        %2930 = vmatpush1.bf16.msra.mxu0 %v2119
        %2931 = vmatprep.subr.bf16.mxu0 %v2126
        %2932 = vmatpush1.bf16.msra.mxu0 %v2125
        %2933 = vmatprep.subr.bf16.mxu0 %v2132
        %2934 = vmatpush1.bf16.msra.mxu0 %v2131
        %2935 = vmatprep.subr.bf16.mxu0 %v2138
        %2936 = vmatpush1.bf16.msra.mxu0 %v2137
        %2937 = vmatprep.subr.bf16.mxu0 %v2144
        %2938 = vmatpush1.bf16.msra.mxu0 %v2143
        %2939 = vmatprep.subr.bf16.mxu0 %v2150
        %2940 = vmatpush1.bf16.msra.mxu0 %v2149
        %2941 = vmatprep.subr.bf16.mxu0 %v2156
        %2942 = vmatpush1.bf16.msra.mxu0 %v2155
        %2943 = vmatprep.subr.bf16.mxu0 %v2162
        %2944 = vmatpush1.bf16.msra.mxu0 %v2161
        %2945 = vmatprep.subr.bf16.mxu0 %v2168
        %2946 = vmatpush1.bf16.msra.mxu0 %v2167
        %2947 = vmatprep.subr.bf16.mxu0 %v2174
        %2948 = vmatpush1.bf16.msra.mxu0 %v2173
        %2949 = vmatprep.subr.bf16.mxu0 %v2180
        %2950 = vmatpush1.bf16.msra.mxu0 %v2179
        %2951 = vmatprep.subr.bf16.mxu0 %v2186
        %2952 = vmatpush1.bf16.msra.mxu0 %v2185
        %2953 = vmatprep.subr.bf16.mxu0 %v2192
        %2954 = vmatpush1.bf16.msra.mxu0 %v2191
        %2955 = vmatprep.subr.bf16.mxu0 %v2198
        %2956 = vmatpush1.bf16.msra.mxu0 %v2197
        %2957 = vmatprep.mubr.bf16.mxu0 %v914
        %2958 = vmatmul.mubr.bf16.gmra.mrb[0].mxu0 %v913
        %v2959 = vpop.f32.mrb[0].mxu0
        %v2960 = vadd.f32 %v1228, %v2959
        %v2961 = vpop.f32.mrb[0].mxu0
        %v2962 = vadd.f32 %v1232, %v2961
        %v2963 = vpop.f32.mrb[0].mxu0
        %v2964 = vpop.f32.mrb[0].mxu0
        %2965 = vdwg.mxu0
        %2966 = vmatprep.subr.bf16.mxu0 %v2204
        %2967 = vmatpush1.bf16.msra.mxu0 %v2203
        %2968 = vmatprep.subr.bf16.mxu0 %v2210
        %2969 = vmatpush1.bf16.msra.mxu0 %v2209
        %2970 = vmatprep.subr.bf16.mxu0 %v2216
        %2971 = vmatpush1.bf16.msra.mxu0 %v2215
        %2972 = vmatprep.subr.bf16.mxu0 %v2222
        %2973 = vmatpush1.bf16.msra.mxu0 %v2221
        %2974 = vmatprep.subr.bf16.mxu0 %v2228
        %2975 = vmatpush1.bf16.msra.mxu0 %v2227
        %2976 = vmatprep.subr.bf16.mxu0 %v2234
        %2977 = vmatpush1.bf16.msra.mxu0 %v2233
        %2978 = vmatprep.subr.bf16.mxu0 %v2240
        %2979 = vmatpush1.bf16.msra.mxu0 %v2239
        %2980 = vmatprep.subr.bf16.mxu0 %v2246
        %2981 = vmatpush1.bf16.msra.mxu0 %v2245
        %2982 = vmatprep.subr.bf16.mxu0 %v2252
        %2983 = vmatpush1.bf16.msra.mxu0 %v2251
        %2984 = vmatprep.subr.bf16.mxu0 %v2258
        %2985 = vmatpush1.bf16.msra.mxu0 %v2257
        %2986 = vmatprep.subr.bf16.mxu0 %v2264
        %2987 = vmatpush1.bf16.msra.mxu0 %v2263
        %2988 = vmatprep.subr.bf16.mxu0 %v2270
        %2989 = vmatpush1.bf16.msra.mxu0 %v2269
        %2990 = vmatprep.subr.bf16.mxu0 %v2276
        %2991 = vmatpush1.bf16.msra.mxu0 %v2275
        %2992 = vmatprep.subr.bf16.mxu0 %v2282
        %2993 = vmatpush1.bf16.msra.mxu0 %v2281
        %2994 = vmatprep.subr.bf16.mxu0 %v2288
        %2995 = vmatpush1.bf16.msra.mxu0 %v2287
        %2996 = vmatprep.subr.bf16.mxu0 %v2294
        %2997 = vmatpush1.bf16.msra.mxu0 %v2293
        %2998 = vmatprep.mubr.bf16.mxu0 %v916
        %2999 = vmatmul.mubr.bf16.gmra.mrb[0].mxu0 %v915
        %v3000 = vpop.f32.mrb[0].mxu0
        %v3001 = vadd.f32 %v2960, %v3000
        %v3002 = vpop.f32.mrb[0].mxu0
        %v3003 = vadd.f32 %v2962, %v3002
        %v3004 = vpop.f32.mrb[0].mxu0
        %v3005 = vpop.f32.mrb[0].mxu0
        %3006 = vdwg.mxu0
        %3007 = vmatprep.subr.bf16.mxu0 %v2300
        %3008 = vmatpush1.bf16.msra.mxu0 %v2299
        %3009 = vmatprep.subr.bf16.mxu0 %v2306
        %3010 = vmatpush1.bf16.msra.mxu0 %v2305
        %3011 = vmatprep.subr.bf16.mxu0 %v2312
        %3012 = vmatpush1.bf16.msra.mxu0 %v2311
        %3013 = vmatprep.subr.bf16.mxu0 %v2318
        %3014 = vmatpush1.bf16.msra.mxu0 %v2317
        %3015 = vmatprep.subr.bf16.mxu0 %v2324
        %3016 = vmatpush1.bf16.msra.mxu0 %v2323
        %3017 = vmatprep.subr.bf16.mxu0 %v2330
        %3018 = vmatpush1.bf16.msra.mxu0 %v2329
        %3019 = vmatprep.subr.bf16.mxu0 %v2336
        %3020 = vmatpush1.bf16.msra.mxu0 %v2335
        %3021 = vmatprep.subr.bf16.mxu0 %v2342
        %3022 = vmatpush1.bf16.msra.mxu0 %v2341
        %3023 = vmatprep.subr.bf16.mxu0 %v2348
        %3024 = vmatpush1.bf16.msra.mxu0 %v2347
        %3025 = vmatprep.subr.bf16.mxu0 %v2354
        %3026 = vmatpush1.bf16.msra.mxu0 %v2353
        %3027 = vmatprep.subr.bf16.mxu0 %v2360
        %3028 = vmatpush1.bf16.msra.mxu0 %v2359
        %3029 = vmatprep.subr.bf16.mxu0 %v2366
        %3030 = vmatpush1.bf16.msra.mxu0 %v2365
        %3031 = vmatprep.subr.bf16.mxu0 %v2372
        %3032 = vmatpush1.bf16.msra.mxu0 %v2371
        %3033 = vmatprep.subr.bf16.mxu0 %v2378
        %3034 = vmatpush1.bf16.msra.mxu0 %v2377
        %3035 = vmatprep.subr.bf16.mxu0 %v2384
        %3036 = vmatpush1.bf16.msra.mxu0 %v2383
        %3037 = vmatprep.subr.bf16.mxu0 %v2390
        %3038 = vmatpush1.bf16.msra.mxu0 %v2389
        %3039 = vmatprep.mubr.bf16.mxu0 %v918
        %3040 = vmatmul.mubr.bf16.gmra.mrb[0].mxu0 %v917
        %v3041 = vpop.f32.mrb[0].mxu0
        %v3042 = vadd.f32 %v3001, %v3041
        %v3043 = vpop.f32.mrb[0].mxu0
        %v3044 = vadd.f32 %v3003, %v3043
        %v3045 = vpop.f32.mrb[0].mxu0
        %v3046 = vpop.f32.mrb[0].mxu0
        %3047 = vdwg.mxu0
        %v3048 = vtanh.pop %v2796
        %v3049 = vtanh.pop %v2798
        %v3050 = vtanh.pop %v2919
        %v3051 = vtanh.pop %v2921
        %v3052 = vtanh.pop %v3042
        %v3053 = vtanh.pop %v3044
        %v3054 = vpack.c.bf16 %v3048, %v3048
        %v3055 = vpack.c.bf16 %v3049, %v3049
        %v3056 = vpack.c.bf16 %v3050, %v3050
        %v3057 = vpack.c.bf16 %v3051, %v3051
        %v3058 = vpack.c.bf16 %v3052, %v3052
        %v3059 = vpack.c.bf16 %v3053, %v3053
        %v3060 = vld [vmem:[#allocation10] sm:$0xff]
        %v3061 = vld [vmem:[#allocation10 + $0x8] sm:$0xff]
        %v3062 = vld [vmem:[#allocation10 + $0x10] sm:$0xff]
        %v3063 = vld [vmem:[#allocation10 + $0x18] sm:$0xff]
        %v3064 = vld [vmem:[#allocation10 + $0x20] sm:$0xff]
        %v3065 = vld [vmem:[#allocation10 + $0x28] sm:$0xff]
        %v3066 = vld [vmem:[#allocation10 + $0x30] sm:$0xff]
        %v3067 = vld [vmem:[#allocation10 + $0x38] sm:$0xff]
        %v3068 = vld [vmem:[#allocation10 + $0x40] sm:$0xff]
        %v3069 = vld [vmem:[#allocation10 + $0x48] sm:$0xff]
        %v3070 = vld [vmem:[#allocation10 + $0x50] sm:$0xff]
        %v3071 = vld [vmem:[#allocation10 + $0x58] sm:$0xff]
        %v3072 = vld [vmem:[#allocation10 + $0x60] sm:$0xff]
        %v3073 = vld [vmem:[#allocation10 + $0x68] sm:$0xff]
        %v3074 = vld [vmem:[#allocation10 + $0x70] sm:$0xff]
        %v3075 = vld [vmem:[#allocation10 + $0x78] sm:$0xff]
        %v3076 = vld [vmem:[#allocation10 + $0x80] sm:$0xff]
        %v3077 = vld [vmem:[#allocation10 + $0x88] sm:$0xff]
        %v3078 = vld [vmem:[#allocation10 + $0x90] sm:$0xff]
        %v3079 = vld [vmem:[#allocation10 + $0x98] sm:$0xff]
        %v3080 = vld [vmem:[#allocation10 + $0xa0] sm:$0xff]
        %v3081 = vld [vmem:[#allocation10 + $0xa8] sm:$0xff]
        %v3082 = vld [vmem:[#allocation10 + $0xb0] sm:$0xff]
        %v3083 = vld [vmem:[#allocation10 + $0xb8] sm:$0xff]
        %v3084 = vld [vmem:[#allocation10 + $0xc0] sm:$0xff]
        %v3085 = vld [vmem:[#allocation10 + $0xc8] sm:$0xff]
        %v3086 = vld [vmem:[#allocation10 + $0xd0] sm:$0xff]
        %v3087 = vld [vmem:[#allocation10 + $0xd8] sm:$0xff]
        %v3088 = vld [vmem:[#allocation10 + $0xe0] sm:$0xff]
        %v3089 = vld [vmem:[#allocation10 + $0xe8] sm:$0xff]
        %v3090 = vld [vmem:[#allocation10 + $0xf0] sm:$0xff]
        %v3091 = vld [vmem:[#allocation10 + $0xf8] sm:$0xff]
        %v3092 = vld [vmem:[#allocation10 + $0x100] sm:$0xff]
        %v3093 = vld [vmem:[#allocation10 + $0x108] sm:$0xff]
        %v3094 = vld [vmem:[#allocation10 + $0x110] sm:$0xff]
        %v3095 = vld [vmem:[#allocation10 + $0x118] sm:$0xff]
        %v3096 = vld [vmem:[#allocation10 + $0x120] sm:$0xff]
        %v3097 = vld [vmem:[#allocation10 + $0x128] sm:$0xff]
        %v3098 = vld [vmem:[#allocation10 + $0x130] sm:$0xff]
        %v3099 = vld [vmem:[#allocation10 + $0x138] sm:$0xff]
        %v3100 = vld [vmem:[#allocation10 + $0x140] sm:$0xff]
        %v3101 = vld [vmem:[#allocation10 + $0x148] sm:$0xff]
        %v3102 = vld [vmem:[#allocation10 + $0x150] sm:$0xff]
        %v3103 = vld [vmem:[#allocation10 + $0x158] sm:$0xff]
        %v3104 = vld [vmem:[#allocation10 + $0x160] sm:$0xff]
        %v3105 = vld [vmem:[#allocation10 + $0x168] sm:$0xff]
        %v3106 = vld [vmem:[#allocation10 + $0x170] sm:$0xff]
        %v3107 = vld [vmem:[#allocation10 + $0x178] sm:$0xff]
        %v3108 = vld [vmem:[#allocation10 + $0x180] sm:$0xff]
        %v3109 = vld [vmem:[#allocation10 + $0x188] sm:$0xff]
        %v3110 = vld [vmem:[#allocation10 + $0x190] sm:$0xff]
        %v3111 = vld [vmem:[#allocation10 + $0x198] sm:$0xff]
        %v3112 = vld [vmem:[#allocation10 + $0x1a0] sm:$0xff]
        %v3113 = vld [vmem:[#allocation10 + $0x1a8] sm:$0xff]
        %v3114 = vld [vmem:[#allocation10 + $0x1b0] sm:$0xff]
        %v3115 = vld [vmem:[#allocation10 + $0x1b8] sm:$0xff]
        %v3116 = vld [vmem:[#allocation10 + $0x1c0] sm:$0xff]
        %v3117 = vld [vmem:[#allocation10 + $0x1c8] sm:$0xff]
        %v3118 = vld [vmem:[#allocation10 + $0x1d0] sm:$0xff]
        %v3119 = vld [vmem:[#allocation10 + $0x1d8] sm:$0xff]
        %v3120 = vld [vmem:[#allocation10 + $0x1e0] sm:$0xff]
        %v3121 = vld [vmem:[#allocation10 + $0x1e8] sm:$0xff]
        %v3122 = vld [vmem:[#allocation10 + $0x1f0] sm:$0xff]
        %v3123 = vld [vmem:[#allocation10 + $0x1f8] sm:$0xff]
        %v3124 = vld [vmem:[#allocation10 + $0x200] sm:$0xff]
        %v3125 = vld [vmem:[#allocation10 + $0x208] sm:$0xff]
        %v3126 = vld [vmem:[#allocation10 + $0x210] sm:$0xff]
        %v3127 = vld [vmem:[#allocation10 + $0x218] sm:$0xff]
        %v3128 = vld [vmem:[#allocation10 + $0x220] sm:$0xff]
        %v3129 = vld [vmem:[#allocation10 + $0x228] sm:$0xff]
        %v3130 = vld [vmem:[#allocation10 + $0x230] sm:$0xff]
        %v3131 = vld [vmem:[#allocation10 + $0x238] sm:$0xff]
        %v3132 = vld [vmem:[#allocation10 + $0x240] sm:$0xff]
        %v3133 = vld [vmem:[#allocation10 + $0x248] sm:$0xff]
        %v3134 = vld [vmem:[#allocation10 + $0x250] sm:$0xff]
        %v3135 = vld [vmem:[#allocation10 + $0x258] sm:$0xff]
        %v3136 = vld [vmem:[#allocation10 + $0x260] sm:$0xff]
        %v3137 = vld [vmem:[#allocation10 + $0x268] sm:$0xff]
        %v3138 = vld [vmem:[#allocation10 + $0x270] sm:$0xff]
        %v3139 = vld [vmem:[#allocation10 + $0x278] sm:$0xff]
        %v3140 = vld [vmem:[#allocation10 + $0x280] sm:$0xff]
        %v3141 = vld [vmem:[#allocation10 + $0x288] sm:$0xff]
        %v3142 = vld [vmem:[#allocation10 + $0x290] sm:$0xff]
        %v3143 = vld [vmem:[#allocation10 + $0x298] sm:$0xff]
        %v3144 = vld [vmem:[#allocation10 + $0x2a0] sm:$0xff]
        %v3145 = vld [vmem:[#allocation10 + $0x2a8] sm:$0xff]
        %v3146 = vld [vmem:[#allocation10 + $0x2b0] sm:$0xff]
        %v3147 = vld [vmem:[#allocation10 + $0x2b8] sm:$0xff]
        %v3148 = vld [vmem:[#allocation10 + $0x2c0] sm:$0xff]
        %v3149 = vld [vmem:[#allocation10 + $0x2c8] sm:$0xff]
        %v3150 = vld [vmem:[#allocation10 + $0x2d0] sm:$0xff]
        %v3151 = vld [vmem:[#allocation10 + $0x2d8] sm:$0xff]
        %v3152 = vld [vmem:[#allocation10 + $0x2e0] sm:$0xff]
        %v3153 = vld [vmem:[#allocation10 + $0x2e8] sm:$0xff]
        %v3154 = vld [vmem:[#allocation10 + $0x2f0] sm:$0xff]
        %v3155 = vld [vmem:[#allocation10 + $0x2f8] sm:$0xff]
        %v3156 = vld [vmem:[#allocation11] sm:$0x3]
        %v3158 = vlaneseq
        %v3159 = vshrl.u32 %v3158, 7
        %v3160 = vsub.s32 0, %v3159
        %v3161 = vrot.slane %v3156, %v3160
        %v3162 = vlaneseq
        %v3163 = vshrl.u32 %v3162, 7
        %v3164 = vsub.s32 1, %v3163
        %v3165 = vrot.slane %v3156, %v3164
        %v3264 = vunpack.c.l.b16 %v3060
        %v3265 = vunpack.c.h.b16 %v3060
        %v3266 = vunpack.c.l.b16 %v3061
        %v3267 = vunpack.c.h.b16 %v3061
        %v3268 = vunpack.c.l.b16 %v3062
        %v3269 = vunpack.c.h.b16 %v3062
        %v3270 = vunpack.c.l.b16 %v3063
        %v3271 = vunpack.c.h.b16 %v3063
        %v3272 = vunpack.c.l.b16 %v3064
        %v3273 = vunpack.c.h.b16 %v3064
        %v3274 = vunpack.c.l.b16 %v3065
        %v3275 = vunpack.c.h.b16 %v3065
        %v3276 = vunpack.c.l.b16 %v3066
        %v3277 = vunpack.c.h.b16 %v3066
        %v3278 = vunpack.c.l.b16 %v3067
        %v3279 = vunpack.c.h.b16 %v3067
        %v3280 = vunpack.c.l.b16 %v3068
        %v3281 = vunpack.c.h.b16 %v3068
        %v3282 = vunpack.c.l.b16 %v3069
        %v3283 = vunpack.c.h.b16 %v3069
        %v3284 = vunpack.c.l.b16 %v3070
        %v3285 = vunpack.c.h.b16 %v3070
        %v3286 = vunpack.c.l.b16 %v3071
        %v3287 = vunpack.c.h.b16 %v3071
        %v3288 = vunpack.c.l.b16 %v3072
        %v3289 = vunpack.c.h.b16 %v3072
        %v3290 = vunpack.c.l.b16 %v3073
        %v3291 = vunpack.c.h.b16 %v3073
        %v3292 = vunpack.c.l.b16 %v3074
        %v3293 = vunpack.c.h.b16 %v3074
        %v3294 = vunpack.c.l.b16 %v3075
        %v3295 = vunpack.c.h.b16 %v3075
        %v3296 = vunpack.c.l.b16 %v3076
        %v3297 = vunpack.c.h.b16 %v3076
        %v3298 = vunpack.c.l.b16 %v3077
        %v3299 = vunpack.c.h.b16 %v3077
        %v3300 = vunpack.c.l.b16 %v3078
        %v3301 = vunpack.c.h.b16 %v3078
        %v3302 = vunpack.c.l.b16 %v3079
        %v3303 = vunpack.c.h.b16 %v3079
        %v3304 = vunpack.c.l.b16 %v3080
        %v3305 = vunpack.c.h.b16 %v3080
        %v3306 = vunpack.c.l.b16 %v3081
        %v3307 = vunpack.c.h.b16 %v3081
        %v3308 = vunpack.c.l.b16 %v3082
        %v3309 = vunpack.c.h.b16 %v3082
        %v3310 = vunpack.c.l.b16 %v3083
        %v3311 = vunpack.c.h.b16 %v3083
        %v3312 = vunpack.c.l.b16 %v3084
        %v3313 = vunpack.c.h.b16 %v3084
        %v3314 = vunpack.c.l.b16 %v3085
        %v3315 = vunpack.c.h.b16 %v3085
        %v3316 = vunpack.c.l.b16 %v3086
        %v3317 = vunpack.c.h.b16 %v3086
        %v3318 = vunpack.c.l.b16 %v3087
        %v3319 = vunpack.c.h.b16 %v3087
        %v3320 = vunpack.c.l.b16 %v3088
        %v3321 = vunpack.c.h.b16 %v3088
        %v3322 = vunpack.c.l.b16 %v3089
        %v3323 = vunpack.c.h.b16 %v3089
        %v3324 = vunpack.c.l.b16 %v3090
        %v3325 = vunpack.c.h.b16 %v3090
        %v3326 = vunpack.c.l.b16 %v3091
        %v3327 = vunpack.c.h.b16 %v3091
        %v3328 = vunpack.c.l.b16 %v3092
        %v3329 = vunpack.c.h.b16 %v3092
        %v3330 = vunpack.c.l.b16 %v3093
        %v3331 = vunpack.c.h.b16 %v3093
        %v3332 = vunpack.c.l.b16 %v3094
        %v3333 = vunpack.c.h.b16 %v3094
        %v3334 = vunpack.c.l.b16 %v3095
        %v3335 = vunpack.c.h.b16 %v3095
        %v3336 = vunpack.c.l.b16 %v3096
        %v3337 = vunpack.c.h.b16 %v3096
        %v3338 = vunpack.c.l.b16 %v3097
        %v3339 = vunpack.c.h.b16 %v3097
        %v3340 = vunpack.c.l.b16 %v3098
        %v3341 = vunpack.c.h.b16 %v3098
        %v3342 = vunpack.c.l.b16 %v3099
        %v3343 = vunpack.c.h.b16 %v3099
        %v3344 = vunpack.c.l.b16 %v3100
        %v3345 = vunpack.c.h.b16 %v3100
        %v3346 = vunpack.c.l.b16 %v3101
        %v3347 = vunpack.c.h.b16 %v3101
        %v3348 = vunpack.c.l.b16 %v3102
        %v3349 = vunpack.c.h.b16 %v3102
        %v3350 = vunpack.c.l.b16 %v3103
        %v3351 = vunpack.c.h.b16 %v3103
        %v3352 = vunpack.c.l.b16 %v3104
        %v3353 = vunpack.c.h.b16 %v3104
        %v3354 = vunpack.c.l.b16 %v3105
        %v3355 = vunpack.c.h.b16 %v3105
        %v3356 = vunpack.c.l.b16 %v3106
        %v3357 = vunpack.c.h.b16 %v3106
        %v3358 = vunpack.c.l.b16 %v3107
        %v3359 = vunpack.c.h.b16 %v3107
        %v3360 = vunpack.c.l.b16 %v3108
        %v3361 = vunpack.c.h.b16 %v3108
        %v3362 = vunpack.c.l.b16 %v3109
        %v3363 = vunpack.c.h.b16 %v3109
        %v3364 = vunpack.c.l.b16 %v3110
        %v3365 = vunpack.c.h.b16 %v3110
        %v3366 = vunpack.c.l.b16 %v3111
        %v3367 = vunpack.c.h.b16 %v3111
        %v3368 = vunpack.c.l.b16 %v3112
        %v3369 = vunpack.c.h.b16 %v3112
        %v3370 = vunpack.c.l.b16 %v3113
        %v3371 = vunpack.c.h.b16 %v3113
        %v3372 = vunpack.c.l.b16 %v3114
        %v3373 = vunpack.c.h.b16 %v3114
        %v3374 = vunpack.c.l.b16 %v3115
        %v3375 = vunpack.c.h.b16 %v3115
        %v3376 = vunpack.c.l.b16 %v3116
        %v3377 = vunpack.c.h.b16 %v3116
        %v3378 = vunpack.c.l.b16 %v3117
        %v3379 = vunpack.c.h.b16 %v3117
        %v3380 = vunpack.c.l.b16 %v3118
        %v3381 = vunpack.c.h.b16 %v3118
        %v3382 = vunpack.c.l.b16 %v3119
        %v3383 = vunpack.c.h.b16 %v3119
        %v3384 = vunpack.c.l.b16 %v3120
        %v3385 = vunpack.c.h.b16 %v3120
        %v3386 = vunpack.c.l.b16 %v3121
        %v3387 = vunpack.c.h.b16 %v3121
        %v3388 = vunpack.c.l.b16 %v3122
        %v3389 = vunpack.c.h.b16 %v3122
        %v3390 = vunpack.c.l.b16 %v3123
        %v3391 = vunpack.c.h.b16 %v3123
        %v3392 = vunpack.c.l.b16 %v3124
        %v3393 = vunpack.c.h.b16 %v3124
        %v3394 = vunpack.c.l.b16 %v3125
        %v3395 = vunpack.c.h.b16 %v3125
        %v3396 = vunpack.c.l.b16 %v3126
        %v3397 = vunpack.c.h.b16 %v3126
        %v3398 = vunpack.c.l.b16 %v3127
        %v3399 = vunpack.c.h.b16 %v3127
        %v3400 = vunpack.c.l.b16 %v3128
        %v3401 = vunpack.c.h.b16 %v3128
        %v3402 = vunpack.c.l.b16 %v3129
        %v3403 = vunpack.c.h.b16 %v3129
        %v3404 = vunpack.c.l.b16 %v3130
        %v3405 = vunpack.c.h.b16 %v3130
        %v3406 = vunpack.c.l.b16 %v3131
        %v3407 = vunpack.c.h.b16 %v3131
        %v3408 = vunpack.c.l.b16 %v3132
        %v3409 = vunpack.c.h.b16 %v3132
        %v3410 = vunpack.c.l.b16 %v3133
        %v3411 = vunpack.c.h.b16 %v3133
        %v3412 = vunpack.c.l.b16 %v3134
        %v3413 = vunpack.c.h.b16 %v3134
        %v3414 = vunpack.c.l.b16 %v3135
        %v3415 = vunpack.c.h.b16 %v3135
        %v3416 = vunpack.c.l.b16 %v3136
        %v3417 = vunpack.c.h.b16 %v3136
        %v3418 = vunpack.c.l.b16 %v3137
        %v3419 = vunpack.c.h.b16 %v3137
        %v3420 = vunpack.c.l.b16 %v3138
        %v3421 = vunpack.c.h.b16 %v3138
        %v3422 = vunpack.c.l.b16 %v3139
        %v3423 = vunpack.c.h.b16 %v3139
        %v3424 = vunpack.c.l.b16 %v3140
        %v3425 = vunpack.c.h.b16 %v3140
        %v3426 = vunpack.c.l.b16 %v3141
        %v3427 = vunpack.c.h.b16 %v3141
        %v3428 = vunpack.c.l.b16 %v3142
        %v3429 = vunpack.c.h.b16 %v3142
        %v3430 = vunpack.c.l.b16 %v3143
        %v3431 = vunpack.c.h.b16 %v3143
        %v3432 = vunpack.c.l.b16 %v3144
        %v3433 = vunpack.c.h.b16 %v3144
        %v3434 = vunpack.c.l.b16 %v3145
        %v3435 = vunpack.c.h.b16 %v3145
        %v3436 = vunpack.c.l.b16 %v3146
        %v3437 = vunpack.c.h.b16 %v3146
        %v3438 = vunpack.c.l.b16 %v3147
        %v3439 = vunpack.c.h.b16 %v3147
        %v3440 = vunpack.c.l.b16 %v3148
        %v3441 = vunpack.c.h.b16 %v3148
        %v3442 = vunpack.c.l.b16 %v3149
        %v3443 = vunpack.c.h.b16 %v3149
        %v3444 = vunpack.c.l.b16 %v3150
        %v3445 = vunpack.c.h.b16 %v3150
        %v3446 = vunpack.c.l.b16 %v3151
        %v3447 = vunpack.c.h.b16 %v3151
        %v3448 = vunpack.c.l.b16 %v3152
        %v3449 = vunpack.c.h.b16 %v3152
        %v3450 = vunpack.c.l.b16 %v3153
        %v3451 = vunpack.c.h.b16 %v3153
        %v3452 = vunpack.c.l.b16 %v3154
        %v3453 = vunpack.c.h.b16 %v3154
        %v3454 = vunpack.c.l.b16 %v3155
        %v3455 = vunpack.c.h.b16 %v3155
        %v3456 = vpack.c.b16 %v3266, %v3264
        %v3457 = vpack.c.b16 %v3267, %v3265
        %v3458 = vpack.c.b16 %v3270, %v3268
        %v3459 = vpack.c.b16 %v3271, %v3269
        %v3460 = vpack.c.b16 %v3274, %v3272
        %v3461 = vpack.c.b16 %v3275, %v3273
        %v3462 = vpack.c.b16 %v3278, %v3276
        %v3463 = vpack.c.b16 %v3279, %v3277
        %v3464 = vpack.c.b16 %v3282, %v3280
        %v3465 = vpack.c.b16 %v3283, %v3281
        %v3466 = vpack.c.b16 %v3286, %v3284
        %v3467 = vpack.c.b16 %v3287, %v3285
        %v3468 = vpack.c.b16 %v3290, %v3288
        %v3469 = vpack.c.b16 %v3291, %v3289
        %v3470 = vpack.c.b16 %v3294, %v3292
        %v3471 = vpack.c.b16 %v3295, %v3293
        %v3472 = vpack.c.b16 %v3298, %v3296
        %v3473 = vpack.c.b16 %v3299, %v3297
        %v3474 = vpack.c.b16 %v3302, %v3300
        %v3475 = vpack.c.b16 %v3303, %v3301
        %v3476 = vpack.c.b16 %v3306, %v3304
        %v3477 = vpack.c.b16 %v3307, %v3305
        %v3478 = vpack.c.b16 %v3310, %v3308
        %v3479 = vpack.c.b16 %v3311, %v3309
        %v3480 = vpack.c.b16 %v3314, %v3312
        %v3481 = vpack.c.b16 %v3315, %v3313
        %v3482 = vpack.c.b16 %v3318, %v3316
        %v3483 = vpack.c.b16 %v3319, %v3317
        %v3484 = vpack.c.b16 %v3322, %v3320
        %v3485 = vpack.c.b16 %v3323, %v3321
        %v3486 = vpack.c.b16 %v3326, %v3324
        %v3487 = vpack.c.b16 %v3327, %v3325
        %v3488 = vpack.c.b16 %v3330, %v3328
        %v3489 = vpack.c.b16 %v3331, %v3329
        %v3490 = vpack.c.b16 %v3334, %v3332
        %v3491 = vpack.c.b16 %v3335, %v3333
        %v3492 = vpack.c.b16 %v3338, %v3336
        %v3493 = vpack.c.b16 %v3339, %v3337
        %v3494 = vpack.c.b16 %v3342, %v3340
        %v3495 = vpack.c.b16 %v3343, %v3341
        %v3496 = vpack.c.b16 %v3346, %v3344
        %v3497 = vpack.c.b16 %v3347, %v3345
        %v3498 = vpack.c.b16 %v3350, %v3348
        %v3499 = vpack.c.b16 %v3351, %v3349
        %v3500 = vpack.c.b16 %v3354, %v3352
        %v3501 = vpack.c.b16 %v3355, %v3353
        %v3502 = vpack.c.b16 %v3358, %v3356
        %v3503 = vpack.c.b16 %v3359, %v3357
        %v3504 = vpack.c.b16 %v3362, %v3360
        %v3505 = vpack.c.b16 %v3363, %v3361
        %v3506 = vpack.c.b16 %v3366, %v3364
        %v3507 = vpack.c.b16 %v3367, %v3365
        %v3508 = vpack.c.b16 %v3370, %v3368
        %v3509 = vpack.c.b16 %v3371, %v3369
        %v3510 = vpack.c.b16 %v3374, %v3372
        %v3511 = vpack.c.b16 %v3375, %v3373
        %v3512 = vpack.c.b16 %v3378, %v3376
        %v3513 = vpack.c.b16 %v3379, %v3377
        %v3514 = vpack.c.b16 %v3382, %v3380
        %v3515 = vpack.c.b16 %v3383, %v3381
        %v3516 = vpack.c.b16 %v3386, %v3384
        %v3517 = vpack.c.b16 %v3387, %v3385
        %v3518 = vpack.c.b16 %v3390, %v3388
        %v3519 = vpack.c.b16 %v3391, %v3389
        %v3520 = vpack.c.b16 %v3394, %v3392
        %v3521 = vpack.c.b16 %v3395, %v3393
        %v3522 = vpack.c.b16 %v3398, %v3396
        %v3523 = vpack.c.b16 %v3399, %v3397
        %v3524 = vpack.c.b16 %v3402, %v3400
        %v3525 = vpack.c.b16 %v3403, %v3401
        %v3526 = vpack.c.b16 %v3406, %v3404
        %v3527 = vpack.c.b16 %v3407, %v3405
        %v3528 = vpack.c.b16 %v3410, %v3408
        %v3529 = vpack.c.b16 %v3411, %v3409
        %v3530 = vpack.c.b16 %v3414, %v3412
        %v3531 = vpack.c.b16 %v3415, %v3413
        %v3532 = vpack.c.b16 %v3418, %v3416
        %v3533 = vpack.c.b16 %v3419, %v3417
        %v3534 = vpack.c.b16 %v3422, %v3420
        %v3535 = vpack.c.b16 %v3423, %v3421
        %v3536 = vpack.c.b16 %v3426, %v3424
        %v3537 = vpack.c.b16 %v3427, %v3425
        %v3538 = vpack.c.b16 %v3430, %v3428
        %v3539 = vpack.c.b16 %v3431, %v3429
        %v3540 = vpack.c.b16 %v3434, %v3432
        %v3541 = vpack.c.b16 %v3435, %v3433
        %v3542 = vpack.c.b16 %v3438, %v3436
        %v3543 = vpack.c.b16 %v3439, %v3437
        %v3544 = vpack.c.b16 %v3442, %v3440
        %v3545 = vpack.c.b16 %v3443, %v3441
        %v3546 = vpack.c.b16 %v3446, %v3444
        %v3547 = vpack.c.b16 %v3447, %v3445
        %v3548 = vpack.c.b16 %v3450, %v3448
        %v3549 = vpack.c.b16 %v3451, %v3449
        %v3550 = vpack.c.b16 %v3454, %v3452
        %v3551 = vpack.c.b16 %v3455, %v3453
        %3648 = vmatprep.subr.bf16.mxu0 %v3457
        %3649 = vmatpush1.bf16.msra.mxu0 %v3456
        %3650 = vmatprep.subr.bf16.mxu0 %v3459
        %3651 = vmatpush1.bf16.msra.mxu0 %v3458
        %3652 = vmatprep.subr.bf16.mxu0 %v3461
        %3653 = vmatpush1.bf16.msra.mxu0 %v3460
        %3654 = vmatprep.subr.bf16.mxu0 %v3463
        %3655 = vmatpush1.bf16.msra.mxu0 %v3462
        %3656 = vmatprep.subr.bf16.mxu0 %v3465
        %3657 = vmatpush1.bf16.msra.mxu0 %v3464
        %3658 = vmatprep.subr.bf16.mxu0 %v3467
        %3659 = vmatpush1.bf16.msra.mxu0 %v3466
        %3660 = vmatprep.subr.bf16.mxu0 %v3469
        %3661 = vmatpush1.bf16.msra.mxu0 %v3468
        %3662 = vmatprep.subr.bf16.mxu0 %v3471
        %3663 = vmatpush1.bf16.msra.mxu0 %v3470
        %3664 = vmatprep.subr.bf16.mxu0 %v3473
        %3665 = vmatpush1.bf16.msra.mxu0 %v3472
        %3666 = vmatprep.subr.bf16.mxu0 %v3475
        %3667 = vmatpush1.bf16.msra.mxu0 %v3474
        %3668 = vmatprep.subr.bf16.mxu0 %v3477
        %3669 = vmatpush1.bf16.msra.mxu0 %v3476
        %3670 = vmatprep.subr.bf16.mxu0 %v3479
        %3671 = vmatpush1.bf16.msra.mxu0 %v3478
        %3672 = vmatprep.subr.bf16.mxu0 %v3481
        %3673 = vmatpush1.bf16.msra.mxu0 %v3480
        %3674 = vmatprep.subr.bf16.mxu0 %v3483
        %3675 = vmatpush1.bf16.msra.mxu0 %v3482
        %3676 = vmatprep.subr.bf16.mxu0 %v3485
        %3677 = vmatpush1.bf16.msra.mxu0 %v3484
        %3678 = vmatprep.subr.bf16.mxu0 %v3487
        %3679 = vmatpush1.bf16.msra.mxu0 %v3486
        %3680 = vmatprep.mubr.bf16.mxu0 %v3055
        %3681 = vmatmul.mubr.bf16.gmra.mrb[0].mxu0 %v3054
        %v3682 = vpop.f32.mrb[0].mxu0
        %v3683 = vadd.f32 %v3161, %v3682
        %v3684 = vpop.f32.mrb[0].mxu0
        %v3685 = vadd.f32 %v3165, %v3684
        %v3686 = vpop.f32.mrb[0].mxu0
        %v3687 = vpop.f32.mrb[0].mxu0
        %3688 = vdwg.mxu0
        %3689 = vmatprep.subr.bf16.mxu0 %v3489
        %3690 = vmatpush1.bf16.msra.mxu0 %v3488
        %3691 = vmatprep.subr.bf16.mxu0 %v3491
        %3692 = vmatpush1.bf16.msra.mxu0 %v3490
        %3693 = vmatprep.subr.bf16.mxu0 %v3493
        %3694 = vmatpush1.bf16.msra.mxu0 %v3492
        %3695 = vmatprep.subr.bf16.mxu0 %v3495
        %3696 = vmatpush1.bf16.msra.mxu0 %v3494
        %3697 = vmatprep.subr.bf16.mxu0 %v3497
        %3698 = vmatpush1.bf16.msra.mxu0 %v3496
        %3699 = vmatprep.subr.bf16.mxu0 %v3499
        %3700 = vmatpush1.bf16.msra.mxu0 %v3498
        %3701 = vmatprep.subr.bf16.mxu0 %v3501
        %3702 = vmatpush1.bf16.msra.mxu0 %v3500
        %3703 = vmatprep.subr.bf16.mxu0 %v3503
        %3704 = vmatpush1.bf16.msra.mxu0 %v3502
        %3705 = vmatprep.subr.bf16.mxu0 %v3505
        %3706 = vmatpush1.bf16.msra.mxu0 %v3504
        %3707 = vmatprep.subr.bf16.mxu0 %v3507
        %3708 = vmatpush1.bf16.msra.mxu0 %v3506
        %3709 = vmatprep.subr.bf16.mxu0 %v3509
        %3710 = vmatpush1.bf16.msra.mxu0 %v3508
        %3711 = vmatprep.subr.bf16.mxu0 %v3511
        %3712 = vmatpush1.bf16.msra.mxu0 %v3510
        %3713 = vmatprep.subr.bf16.mxu0 %v3513
        %3714 = vmatpush1.bf16.msra.mxu0 %v3512
        %3715 = vmatprep.subr.bf16.mxu0 %v3515
        %3716 = vmatpush1.bf16.msra.mxu0 %v3514
        %3717 = vmatprep.subr.bf16.mxu0 %v3517
        %3718 = vmatpush1.bf16.msra.mxu0 %v3516
        %3719 = vmatprep.subr.bf16.mxu0 %v3519
        %3720 = vmatpush1.bf16.msra.mxu0 %v3518
        %3721 = vmatprep.mubr.bf16.mxu0 %v3057
        %3722 = vmatmul.mubr.bf16.gmra.mrb[0].mxu0 %v3056
        %v3723 = vpop.f32.mrb[0].mxu0
        %v3724 = vadd.f32 %v3683, %v3723
        %v3725 = vpop.f32.mrb[0].mxu0
        %v3726 = vadd.f32 %v3685, %v3725
        %v3727 = vpop.f32.mrb[0].mxu0
        %v3728 = vpop.f32.mrb[0].mxu0
        %3729 = vdwg.mxu0
        %3730 = vmatprep.subr.bf16.mxu0 %v3521
        %3731 = vmatpush1.bf16.msra.mxu0 %v3520
        %3732 = vmatprep.subr.bf16.mxu0 %v3523
        %3733 = vmatpush1.bf16.msra.mxu0 %v3522
        %3734 = vmatprep.subr.bf16.mxu0 %v3525
        %3735 = vmatpush1.bf16.msra.mxu0 %v3524
        %3736 = vmatprep.subr.bf16.mxu0 %v3527
        %3737 = vmatpush1.bf16.msra.mxu0 %v3526
        %3738 = vmatprep.subr.bf16.mxu0 %v3529
        %3739 = vmatpush1.bf16.msra.mxu0 %v3528
        %3740 = vmatprep.subr.bf16.mxu0 %v3531
        %3741 = vmatpush1.bf16.msra.mxu0 %v3530
        %3742 = vmatprep.subr.bf16.mxu0 %v3533
        %3743 = vmatpush1.bf16.msra.mxu0 %v3532
        %3744 = vmatprep.subr.bf16.mxu0 %v3535
        %3745 = vmatpush1.bf16.msra.mxu0 %v3534
        %3746 = vmatprep.subr.bf16.mxu0 %v3537
        %3747 = vmatpush1.bf16.msra.mxu0 %v3536
        %3748 = vmatprep.subr.bf16.mxu0 %v3539
        %3749 = vmatpush1.bf16.msra.mxu0 %v3538
        %3750 = vmatprep.subr.bf16.mxu0 %v3541
        %3751 = vmatpush1.bf16.msra.mxu0 %v3540
        %3752 = vmatprep.subr.bf16.mxu0 %v3543
        %3753 = vmatpush1.bf16.msra.mxu0 %v3542
        %3754 = vmatprep.subr.bf16.mxu0 %v3545
        %3755 = vmatpush1.bf16.msra.mxu0 %v3544
        %3756 = vmatprep.subr.bf16.mxu0 %v3547
        %3757 = vmatpush1.bf16.msra.mxu0 %v3546
        %3758 = vmatprep.subr.bf16.mxu0 %v3549
        %3759 = vmatpush1.bf16.msra.mxu0 %v3548
        %3760 = vmatprep.subr.bf16.mxu0 %v3551
        %3761 = vmatpush1.bf16.msra.mxu0 %v3550
        %3762 = vmatprep.mubr.bf16.mxu0 %v3059
        %3763 = vmatmul.mubr.bf16.gmra.mrb[0].mxu0 %v3058
        %v3764 = vpop.f32.mrb[0].mxu0
        %v3765 = vadd.f32 %v3724, %v3764
        %v3766 = vpop.f32.mrb[0].mxu0
        %v3767 = vadd.f32 %v3726, %v3766
        %v3768 = vpop.f32.mrb[0].mxu0
        %v3769 = vpop.f32.mrb[0].mxu0
        %3770 = vdwg.mxu0
        %v3771 = vpack.c.bf16 %v3765, %v3765
        %v3772 = vpack.c.bf16 %v3767, %v3767
        %v3773 = vld [vmem:[#allocation13] sm:$0xf]
        %v3774 = vld [vmem:[#allocation13 + $0x4] sm:$0xf]
        %v3775 = vld [vmem:[#allocation13 + $0x8] sm:$0xf]
        %v3776 = vld [vmem:[#allocation13 + $0xc] sm:$0xf]
        %v3777 = vld [vmem:[#allocation13 + $0x10] sm:$0xf]
        %v3778 = vld [vmem:[#allocation13 + $0x14] sm:$0xf]
        %v3779 = vld [vmem:[#allocation13 + $0x18] sm:$0xf]
        %v3780 = vld [vmem:[#allocation13 + $0x1c] sm:$0xf]
        %v3781 = vld [vmem:[#allocation13 + $0x20] sm:$0xf]
        %v3782 = vld [vmem:[#allocation13 + $0x24] sm:$0xf]
        %v3783 = vld [vmem:[#allocation13 + $0x28] sm:$0xf]
        %v3784 = vld [vmem:[#allocation13 + $0x2c] sm:$0xf]
        %v3785 = vld [vmem:[#allocation13 + $0x30] sm:$0xf]
        %v3786 = vld [vmem:[#allocation13 + $0x34] sm:$0xf]
        %v3787 = vld [vmem:[#allocation13 + $0x38] sm:$0xf]
        %v3788 = vld [vmem:[#allocation13 + $0x3c] sm:$0xf]
        %v3789 = vld [vmem:[#allocation13 + $0x40] sm:$0xf]
        %v3790 = vld [vmem:[#allocation13 + $0x44] sm:$0xf]
        %v3791 = vld [vmem:[#allocation13 + $0x48] sm:$0xf]
        %v3792 = vld [vmem:[#allocation13 + $0x4c] sm:$0xf]
        %v3793 = vld [vmem:[#allocation13 + $0x50] sm:$0xf]
        %v3794 = vld [vmem:[#allocation13 + $0x54] sm:$0xf]
        %v3795 = vld [vmem:[#allocation13 + $0x58] sm:$0xf]
        %v3796 = vld [vmem:[#allocation13 + $0x5c] sm:$0xf]
        %v3797 = vld [vmem:[#allocation13 + $0x60] sm:$0xf]
        %v3798 = vld [vmem:[#allocation13 + $0x64] sm:$0xf]
        %v3799 = vld [vmem:[#allocation13 + $0x68] sm:$0xf]
        %v3800 = vld [vmem:[#allocation13 + $0x6c] sm:$0xf]
        %v3801 = vld [vmem:[#allocation13 + $0x70] sm:$0xf]
        %v3802 = vld [vmem:[#allocation13 + $0x74] sm:$0xf]
        %v3803 = vld [vmem:[#allocation13 + $0x78] sm:$0xf]
        %v3804 = vld [vmem:[#allocation13 + $0x7c] sm:$0xf]
        %v3805 = vld [vmem:[%s499] sm:$0xff]
        %v3806 = vld [vmem:[#allocation14] sm:$0x7]
        %vm3807 = vcmask 23552
        %v3809 = vsel %vm3807, %v3805, 0
        %vm3811 = vcmask 1042432
        %v3813 = vsel %vm3811, %v3806, 0
        %3815 = vmatprep.subr.mxu0 0.0
        %3816 = vmatpush1.msra.mxu0 %v3813
        %3817 = vmatprep.subr.mxu0 0.0
        %3818 = vmatpush1.msra.mxu0 0.0
        %3819 = vmatprep.subr.mxu0 0.0
        %3820 = vmatpush1.msra.mxu0 0.0
        %3821 = vmatprep.subr.mxu0 0.0
        %3822 = vmatpush1.msra.mxu0 0.0
        %3823 = vmatprep.subr.mxu0 0.0
        %3824 = vmatpush1.msra.mxu0 0.0
        %3825 = vmatprep.subr.mxu0 0.0
        %3826 = vmatpush1.msra.mxu0 0.0
        %3827 = vmatprep.subr.mxu0 0.0
        %3828 = vmatpush1.msra.mxu0 0.0
        %3829 = vmatprep.subr.mxu0 0.0
        %3830 = vmatpush1.msra.mxu0 0.0
        %3831 = vmatprep.subr.mxu0 0.0
        %3832 = vmatpush1.msra.mxu0 0.0
        %3833 = vmatprep.subr.mxu0 0.0
        %3834 = vmatpush1.msra.mxu0 0.0
        %3835 = vmatprep.subr.mxu0 0.0
        %3836 = vmatpush1.msra.mxu0 0.0
        %3837 = vmatprep.subr.mxu0 0.0
        %3838 = vmatpush1.msra.mxu0 0.0
        %3839 = vmatprep.subr.mxu0 0.0
        %3840 = vmatpush1.msra.mxu0 0.0
        %3841 = vmatprep.subr.mxu0 0.0
        %3842 = vmatpush1.msra.mxu0 0.0
        %3843 = vmatprep.subr.mxu0 0.0
        %3844 = vmatpush1.msra.mxu0 0.0
        %3845 = vmatprep.subr.mxu0 0.0
        %3846 = vmatpush1.msra.mxu0 0.0
        %3847 = vmatprep.subr.mxu0 0.0
        %3848 = vmatpush1.msra.mxu0 0.0
        %3849 = vmatprep.subr.mxu0 0.0
        %3850 = vmatpush1.msra.mxu0 0.0
        %3851 = vmatprep.subr.mxu0 0.0
        %3852 = vmatpush1.msra.mxu0 0.0
        %3853 = vmatprep.subr.mxu0 0.0
        %3854 = vmatpush1.msra.mxu0 0.0
        %3855 = vmatprep.subr.mxu0 0.0
        %3856 = vmatpush1.msra.mxu0 0.0
        %3857 = vmatprep.subr.mxu0 0.0
        %3858 = vmatpush1.msra.mxu0 0.0
        %3859 = vmatprep.subr.mxu0 0.0
        %3860 = vmatpush1.msra.mxu0 0.0
        %3861 = vmatprep.subr.mxu0 0.0
        %3862 = vmatpush1.msra.mxu0 0.0
        %3863 = vmatprep.subr.mxu0 0.0
        %3864 = vmatpush1.msra.mxu0 0.0
        %3865 = vmatprep.subr.mxu0 0.0
        %3866 = vmatpush1.msra.mxu0 0.0
        %3867 = vmatprep.subr.mxu0 0.0
        %3868 = vmatpush1.msra.mxu0 0.0
        %3869 = vmatprep.subr.mxu0 0.0
        %3870 = vmatpush1.msra.mxu0 0.0
        %3871 = vmatprep.subr.mxu0 0.0
        %3872 = vmatpush1.msra.mxu0 0.0
        %3873 = vmatprep.subr.mxu0 0.0
        %3874 = vmatpush1.msra.mxu0 0.0
        %3875 = vmatprep.subr.mxu0 0.0
        %3876 = vmatpush1.msra.mxu0 0.0
        %3877 = vmatprep.subr.mxu0 0.0
        %3878 = vmatpush1.msra.mxu0 0.0
        %3879 = vmatprep.mubr.f32.mxu0 0.0
        %3880 = vmatmul.mubr.f32.gmra.mrb[0].mxu0 %v3809
        %v3881 = vpop.f32.mrb[0].mxu0
        %v3882 = vadd.f32 0.0, %v3881
        %v3883 = vpop.f32.mrb[0].mxu0
        %3884 = vdwg.mxu0
        %v3917 = vunpack.c.l.b16 %v3773
        %v3918 = vunpack.c.l.b16 %v3774
        %v3919 = vunpack.c.l.b16 %v3775
        %v3920 = vunpack.c.l.b16 %v3776
        %v3921 = vunpack.c.l.b16 %v3777
        %v3922 = vunpack.c.l.b16 %v3778
        %v3923 = vunpack.c.l.b16 %v3779
        %v3924 = vunpack.c.l.b16 %v3780
        %v3925 = vunpack.c.l.b16 %v3781
        %v3926 = vunpack.c.l.b16 %v3782
        %v3927 = vunpack.c.l.b16 %v3783
        %v3928 = vunpack.c.l.b16 %v3784
        %v3929 = vunpack.c.l.b16 %v3785
        %v3930 = vunpack.c.l.b16 %v3786
        %v3931 = vunpack.c.l.b16 %v3787
        %v3932 = vunpack.c.l.b16 %v3788
        %v3933 = vunpack.c.l.b16 %v3789
        %v3934 = vunpack.c.l.b16 %v3790
        %v3935 = vunpack.c.l.b16 %v3791
        %v3936 = vunpack.c.l.b16 %v3792
        %v3937 = vunpack.c.l.b16 %v3793
        %v3938 = vunpack.c.l.b16 %v3794
        %v3939 = vunpack.c.l.b16 %v3795
        %v3940 = vunpack.c.l.b16 %v3796
        %v3941 = vunpack.c.l.b16 %v3797
        %v3942 = vunpack.c.l.b16 %v3798
        %v3943 = vunpack.c.l.b16 %v3799
        %v3944 = vunpack.c.l.b16 %v3800
        %v3945 = vunpack.c.l.b16 %v3801
        %v3946 = vunpack.c.l.b16 %v3802
        %v3947 = vunpack.c.l.b16 %v3803
        %v3948 = vunpack.c.l.b16 %v3804
        %v3949 = vpack.c.b16 %v3918, %v3917
        %v3950 = vpack.c.b16 %v3920, %v3919
        %v3951 = vpack.c.b16 %v3922, %v3921
        %v3952 = vpack.c.b16 %v3924, %v3923
        %v3953 = vpack.c.b16 %v3926, %v3925
        %v3954 = vpack.c.b16 %v3928, %v3927
        %v3955 = vpack.c.b16 %v3930, %v3929
        %v3956 = vpack.c.b16 %v3932, %v3931
        %v3957 = vpack.c.b16 %v3934, %v3933
        %v3958 = vpack.c.b16 %v3936, %v3935
        %v3959 = vpack.c.b16 %v3938, %v3937
        %v3960 = vpack.c.b16 %v3940, %v3939
        %v3961 = vpack.c.b16 %v3942, %v3941
        %v3962 = vpack.c.b16 %v3944, %v3943
        %v3963 = vpack.c.b16 %v3946, %v3945
        %v3964 = vpack.c.b16 %v3948, %v3947
        %3981 = vmatprep.subr.bf16.mxu0 0
        %3982 = vmatpush1.bf16.msra.mxu0 %v3949
        %3983 = vmatprep.subr.bf16.mxu0 0
        %3984 = vmatpush1.bf16.msra.mxu0 %v3950
        %3985 = vmatprep.subr.bf16.mxu0 0
        %3986 = vmatpush1.bf16.msra.mxu0 %v3951
        %3987 = vmatprep.subr.bf16.mxu0 0
        %3988 = vmatpush1.bf16.msra.mxu0 %v3952
        %3989 = vmatprep.subr.bf16.mxu0 0
        %3990 = vmatpush1.bf16.msra.mxu0 %v3953
        %3991 = vmatprep.subr.bf16.mxu0 0
        %3992 = vmatpush1.bf16.msra.mxu0 %v3954
        %3993 = vmatprep.subr.bf16.mxu0 0
        %3994 = vmatpush1.bf16.msra.mxu0 %v3955
        %3995 = vmatprep.subr.bf16.mxu0 0
        %3996 = vmatpush1.bf16.msra.mxu0 %v3956
        %3997 = vmatprep.subr.bf16.mxu0 0
        %3998 = vmatpush1.bf16.msra.mxu0 %v3957
        %3999 = vmatprep.subr.bf16.mxu0 0
        %4000 = vmatpush1.bf16.msra.mxu0 %v3958
        %4001 = vmatprep.subr.bf16.mxu0 0
        %4002 = vmatpush1.bf16.msra.mxu0 %v3959
        %4003 = vmatprep.subr.bf16.mxu0 0
        %4004 = vmatpush1.bf16.msra.mxu0 %v3960
        %4005 = vmatprep.subr.bf16.mxu0 0
        %4006 = vmatpush1.bf16.msra.mxu0 %v3961
        %4007 = vmatprep.subr.bf16.mxu0 0
        %4008 = vmatpush1.bf16.msra.mxu0 %v3962
        %4009 = vmatprep.subr.bf16.mxu0 0
        %4010 = vmatpush1.bf16.msra.mxu0 %v3963
        %4011 = vmatprep.subr.bf16.mxu0 0
        %4012 = vmatpush1.bf16.msra.mxu0 %v3964
        %4013 = vmatprep.mubr.bf16.mxu0 %v3772
        %4014 = vmatmul.mubr.bf16.gmra.mrb[0].mxu0 %v3771
        %v4015 = vpop.f32.mrb[0].mxu0
        %v4016 = vadd.f32 %v3882, %v4015
        %v4017 = vpop.f32.mrb[0].mxu0
        %v4018 = vpop.f32.mrb[0].mxu0
        %v4019 = vpop.f32.mrb[0].mxu0
        %4020 = vdwg.mxu0
        %v4021 = vld [vmem:[#allocation16] sm:$0x1]
        %v4023 = vlaneseq
        %v4024 = vshrl.u32 %v4023, 7
        %v4025 = vsub.s32 0, %v4024
        %v4026 = vrot.slane %v4021, %v4025
        %v4028 = vadd.f32 %v4016, %v4026
        %4029 = vst [vmem:[%s495] sm:$0xff] %v4028
        %s4030 = sand.u32 %s259, 1
        %s4031 = scalar_lea.sflag [#allocation4], %s4030
        %s4032 = sand.u32 %s259, 1
        %s4033 = smul.addr %s4032, 8
        %s4034 = scalar_lea.vmem [#allocation17], %s4033
        // Predicated region
        $region97: #{tpu_custom_call.1} parent=59 // pred_check
          %p4035 = pneg %p269
        $region98: #{tpu_custom_call.1} parent=59 // pred_check_branch
          %4037 = sbr.rel (%p4035) target = $region100
        $region99: #{tpu_custom_call.1} parent=59 // pred_region
          %s4039 = ssub.s32 128, 128
          %4040 = vsyncadd %s4031, %s4039
          %s4041 = smul.addr %s31, 128
          %s4042 = scalar_lea.hbm %s10, %s4041
          %s4044 = sshll.u32 %s4034, 4
          %s4045 = int_to_ptr.vmem [resolvable:$true] %s4044
          %4047 = dma.vmem_to_hbm [thread:$0]  %s4045, 128, %s4042, %s4031
        $region100: #{tpu_custom_call.1} parent=59 // pred_fallthru
          _
      $region60: #{tpu_custom_call.1} parent=5 // pred_fallthru
        _
      %p4048 = scmp.le.s32.totalorder 2, %s26
      // Predicated region
      $region101: #{tpu_custom_call.1} parent=5 // pred_check
        %p4049 = pneg %p4048
      $region102: #{tpu_custom_call.1} parent=5 // pred_check_branch
        %4051 = sbr.rel (%p4049) target = $region104
      $region103: #{tpu_custom_call.1} parent=5 // pred_region
        %s4052 = ssub.s32 %s26, 2
        // Predicated region
        $region105: #{tpu_custom_call.1} parent=103 // pred_check
          %p4053 = pneg %p275
        $region106: #{tpu_custom_call.1} parent=103 // pred_check_branch
          %4055 = sbr.rel (%p4053) target = $region108
        $region107: #{tpu_custom_call.1} parent=103 // pred_region
          %s4056 = sand.u32 %s260, 1
          %s4057 = scalar_lea.sflag [#allocation4], %s4056
          %s4058 = sand.u32 %s260, 1
          %s4059 = smul.addr %s4058, 8
          %s4060 = scalar_lea.vmem [#allocation17], %s4059
          %4061 = dma.done %s4057, 128
        $region108: #{tpu_custom_call.1} parent=103 // pred_fallthru
          _
      $region104: #{tpu_custom_call.1} parent=5 // pred_fallthru
        _
    $region6: #{tpu_custom_call.1} parent=1 // loop_footer
      %s30 = sadd.s32 1, %s26
    $region7: #{tpu_custom_call.1} parent=1 // loop_footer_branch
      %25 = sbr.rel target = $region3
    $region8: #{tpu_custom_call.1} parent=1 // loop_exit
      _
    %4062 = vsyncpa [#allocation3], 1
    %s4063 = scalar_lea.sflag [#allocation3], 1
    %4064 = vsyncpa %s4063, 1
    %4065 = vsyncpa [#allocation6], 1
    %4066 = vsyncpa [#allocation9], 1
    %4067 = vsyncpa [#allocation12], 1
    %4068 = vsyncpa [#allocation15], 1
    %4069 = vsyncpa [#allocation4], 1
    %s4070 = scalar_lea.sflag [#allocation4], 1
    %4071 = vsyncpa %s4070, 1

</llo_original>
